<compile_context>
chip_gen: v5e
topology: v5e:2x2
jax: 0.10.0
libtpu: 0.0.40
codegen_flags: <defaults>
</compile_context>

<pallas_src>
import numpy as np
import jax
import jax.numpy as jnp
from jax.experimental import pallas as pl
from jax.experimental.pallas import tpu as pltpu

_GUARD = 8  # zero-guard rows in the f32 realignment staging buffer (sublane aligned)


# ------------------------------ fused Pallas kernel ------------------------------ #

def _bottleneck_kernel(xm_ref, xt_ref, xb_ref,        # x: main tile + clamped halo rows
                       w1_ref, w2_ref, w3_ref,        # bf16 weights (w2 packed per ky)
                       s1_ref, b1_ref, s2_ref, b2_ref, s3_ref, b3_ref,  # folded BN (f32)
                       o_ref,                          # output block (tm, planes)
                       q_buf, s_buf):                  # scratch: conv2 input / realignment
    i = pl.program_id(1)
    last = pl.num_programs(1) - 1

    tm = xm_ref.shape[0]              # tm = TH * W flat rows of the tile
    w = xt_ref.shape[0]               # image width W (one flattened image row)
    width = w1_ref.shape[1]

    s1 = s1_ref[...]
    b1 = b1_ref[...]

    def conv1(x_rows):
        y = jnp.dot(x_rows.astype(jnp.bfloat16), w1_ref[...],
                    preferred_element_type=jnp.float32)
        return jnp.maximum(y * s1 + b1, 0.0)

    # conv1 + bn1 + relu of the main tile -> middle of the conv2 input buffer (bf16).
    # q_buf layout: [halo-top row (W)] [main tile (tm)] [halo-bottom row (W)].
    q_buf[w:w + tm, :] = conv1(xm_ref[...]).astype(jnp.bfloat16)

    @pl.when(i == 0)                  # conv2 zero padding above the image
    def _():
        q_buf[0:w, :] = jnp.zeros((w, width), jnp.bfloat16)

    @pl.when(i > 0)
    def _():
        q_buf[0:w, :] = conv1(xt_ref[...]).astype(jnp.bfloat16)

    @pl.when(i == last)               # conv2 zero padding below the image
    def _():
        q_buf[w + tm:w + tm + w, :] = jnp.zeros((w, width), jnp.bfloat16)

    @pl.when(i < last)
    def _():
        q_buf[w + tm:w + tm + w, :] = conv1(xb_ref[...]).astype(jnp.bfloat16)

    # Column-wrap masks: flat row m has image column m % W; kx=0 taps wrap at x==0 and
    # kx=2 taps wrap at x==W-1 (those contributions must be zero).
    col = jax.lax.broadcasted_iota(jnp.int32, (tm, 1), 0) % w
    ml = (col != 0).astype(jnp.float32)
    mr = (col != w - 1).astype(jnp.float32)

    # Zero only the staging guard rows that can ever be read; the reads are masked, but the
    # scratch is uninitialised and 0 * NaN would still poison the result.
    s_buf[0, 0:_GUARD, :] = jnp.zeros((_GUARD, width), jnp.float32)
    s_buf[1, _GUARD + tm:2 * _GUARD + tm, :] = jnp.zeros((_GUARD, width), jnp.float32)

    # conv3x3 (padding=1): 3 per-ky matmuls of the ALIGNED flat tap against the packed
    # (width, 3*width) weights.  For output flat row m the ky-tap product contributes
    #   kx=0 -> product row m-1,  kx=1 -> row m,  kx=2 -> row m+1,
    # so the kx=0 / kx=2 product slices are realigned by one row via the staging buffer.
    acc = jnp.zeros((tm, width), jnp.float32)
    for ky in range(3):
        tap = q_buf[ky * w:ky * w + tm, :]            # sublane aligned (W % 8 == 0)
        prod = jnp.dot(tap, w2_ref[ky], preferred_element_type=jnp.float32)
        s_buf[0, _GUARD:_GUARD + tm, :] = prod[:, 0:width]
        s_buf[1, _GUARD:_GUARD + tm, :] = prod[:, 2 * width:3 * width]
        c0 = s_buf[0, _GUARD - 1:_GUARD - 1 + tm, :]  # c0[m] = prod_kx0[m-1]
        c2 = s_buf[1, _GUARD + 1:_GUARD + 1 + tm, :]  # c2[m] = prod_kx2[m+1]
        acc = acc + (prod[:, width:2 * width] + (c0 * ml + c2 * mr))
    o2 = jnp.maximum(acc * s2_ref[...] + b2_ref[...], 0.0)

    # conv1x1 + bn3, identity residual (the main x block is output-aligned), relu.
    o3 = jnp.dot(o2.astype(jnp.bfloat16), w3_ref[...],
                 preferred_element_type=jnp.float32)
    o3 = o3 * s3_ref[...] + b3_ref[...]
    o_ref[...] = jnp.maximum(o3 + xm_ref[...], 0.0).astype(o_ref.dtype)


# ------------------------------ wrapper ------------------------------ #

def _vmem_capacity_bytes():
    try:
        cap = int(pltpu.get_tpu_info().vmem_capacity_bytes)
        if cap > 0:
            return cap
    except Exception:
        pass
    return 64 * 1024 * 1024            # conservative fallback (v7x per-TensorCore VMEM)


def _pick_row_tile(N, H, W, cin, width, planes, budget_bytes):
    """Largest row-tile TH (divisor of H) whose working set fits the VMEM budget,
    preferring >=2 row tiles and an even number of parallel grid steps (v7x dual-TC)."""
    f32, bf16 = 4, 2

    def est(th):
        tm = th * W
        xin = 2 * (tm + 2 * W) * cin * f32             # x main + halo blocks (double-buffered)
        out = 2 * tm * planes * f32                    # output (double-buffered)
        q = (tm + 2 * W) * width * bf16                # conv2 input scratch
        stage = 2 * (tm + 2 * _GUARD) * width * f32    # realignment staging scratch
        live = tm * (7 * width + 2 * planes) * f32     # o1/prod/c0/c2/acc/o2/o3 temporaries
        wgt = 2 * (cin * width + 9 * width * width + width * planes) * bf16
        return xin + out + q + stage + live + wgt

    divs = [t for t in range(1, H + 1) if H % t == 0]
    fitting = [t for t in divs if est(t) <= budget_bytes]
    if not fitting:
        # TODO(synk): even a single-row tile exceeds the budget; fall back (may spill).
        return divs[0]

    def pref(t):
        n_tiles = H // t
        return (n_tiles >= 2, (N * n_tiles) % 2 == 0, t)

    return max(fitting, key=pref)


def bottleneck_forward(x_nchw, p):
    """Bottleneck.forward with stride=1, downsample=None (identity residual)."""
    N, C, H, W = x_nchw.shape
    width = p["w1"].shape[1]
    planes = p["w3"].shape[1]
    if planes != C:
        raise ValueError("identity residual requires planes * expansion == inplanes")
    if W % 8 != 0:
        raise ValueError("this kernel needs image width W to be a multiple of 8")

    x = jnp.transpose(x_nchw, (0, 2, 3, 1))            # NHWC
    xf = x.reshape(N, H * W, C)                        # flattened rows (no padded HBM copy)

    cap = _vmem_capacity_bytes()
    budget = cap // 3
    vmem_limit = min((cap * 3) // 4, 96 * 1024 * 1024)

    TH = _pick_row_tile(N, H, W, C, width, planes, budget)
    nI = H // TH
    tm = TH * W

    w1b = p["w1"].astype(jnp.bfloat16)
    # Pack 3x3 weights per ky: w2cat[ky] = [W2[ky,0] | W2[ky,1] | W2[ky,2]]  (width, 3*width)
    w2r = p["w2"].reshape(3, 3, width, width)
    w2cat = jnp.concatenate([w2r[:, 0], w2r[:, 1], w2r[:, 2]],
                            axis=-1).astype(jnp.bfloat16)
    w3b = p["w3"].astype(jnp.bfloat16)
    # TODO(synk): on v7x the MXU also takes fp8 weights; kept bf16 for accuracy/portability.

    m_total = N * H * W
    flops = int(2 * m_total * (C * width + 9 * width * width + width * planes))
    bytes_accessed = int(4 * m_total * C                       # main x tiles
                         + 4 * N * nI * 2 * W * C              # halo rows
                         + 4 * m_total * planes                # output
                         + 2 * (C * width + 9 * width * width + width * planes)
                         + 4 * 2 * (2 * width + planes))
    cost = pl.CostEstimate(flops=flops, transcendentals=0, bytes_accessed=bytes_accessed)

    out2d = pl.pallas_call(
        _bottleneck_kernel,
        out_shape=jax.ShapeDtypeStruct((N, H * W, planes), x.dtype),
        grid_spec=pltpu.PrefetchScalarGridSpec(
            num_scalar_prefetch=0,
            grid=(N, nI),
            in_specs=[
                # main x tile, aligned with the output tile
                pl.BlockSpec((None, tm, C), lambda n, i: (n, i, 0)),
                # halo-top image row (clamped; zeroed in-kernel when i == 0)
                pl.BlockSpec((None, W, C),
                             lambda n, i: (n, jnp.maximum(i * TH - 1, 0), 0)),
                # halo-bottom image row (clamped; zeroed in-kernel when i == last)
                pl.BlockSpec((None, W, C),
                             lambda n, i: (n, jnp.minimum((i + 1) * TH, H - 1), 0)),
                pl.BlockSpec((C, width), lambda n, i: (0, 0)),
                pl.BlockSpec((3, width, 3 * width), lambda n, i: (0, 0, 0)),
                pl.BlockSpec((width, planes), lambda n, i: (0, 0)),
                pl.BlockSpec((1, width), lambda n, i: (0, 0)),
                pl.BlockSpec((1, width), lambda n, i: (0, 0)),
                pl.BlockSpec((1, width), lambda n, i: (0, 0)),
                pl.BlockSpec((1, width), lambda n, i: (0, 0)),
                pl.BlockSpec((1, planes), lambda n, i: (0, 0)),
                pl.BlockSpec((1, planes), lambda n, i: (0, 0)),
            ],
            out_specs=pl.BlockSpec((None, tm, planes), lambda n, i: (n, i, 0)),
            scratch_shapes=[
                pltpu.VMEM((tm + 2 * W, width), jnp.bfloat16),           # conv2 input
                pltpu.VMEM((2, tm + 2 * _GUARD, width), jnp.float32),    # realignment staging
            ],
        ),
        compiler_params=pltpu.CompilerParams(
            dimension_semantics=("parallel", "parallel"),
            vmem_limit_bytes=int(vmem_limit),
        ),
        cost_estimate=cost,
    )(xf, xf, xf, w1b, w2cat, w3b,
      p["s1"], p["b1"], p["s2"], p["b2"], p["s3"], p["b3"])

    out = out2d.reshape(N, H, W, planes)
    return jnp.transpose(out, (0, 3, 1, 2))            # back to NCHW


# ------------------------------ params & reference ------------------------------ #

def make_bottleneck_params(key, inplanes, planes, base_width=64, groups=1):
    width = int(planes * (base_width / 64.0)) * groups
    ks = jax.random.split(key, 15)

    def folded_bn(kg, kb, km, kv, c):
        gamma = 1.0 + 0.1 * jax.random.normal(kg, (c,), jnp.float32)
        beta = 0.1 * jax.random.normal(kb, (c,), jnp.float32)
        mean = 0.1 * jax.random.normal(km, (c,), jnp.float32)
        var = jax.random.uniform(kv, (c,), jnp.float32, minval=0.5, maxval=1.5)
        eps = 1e-5
        scale = gamma / jnp.sqrt(var + eps)
        bias = beta - mean * scale
        return scale.reshape(1, c), bias.reshape(1, c)

    # PyTorch conv weights are (Cout, Cin, kh, kw); stored transposed for
    # (M, Cin) @ (Cin, Cout) matmuls: w2[k] = W_torch[:, :, ky, kx].T with k = 3*ky + kx.
    w1 = 0.1 * jax.random.normal(ks[0], (inplanes, width), jnp.float32)
    w2 = 0.1 * jax.random.normal(ks[1], (9, width, width), jnp.float32)
    w3 = 0.1 * jax.random.normal(ks[2], (width, planes), jnp.float32)
    s1, b1 = folded_bn(ks[3], ks[4], ks[5], ks[6], width)
    s2, b2 = folded_bn(ks[7], ks[8], ks[9], ks[10], width)
    s3, b3 = folded_bn(ks[11], ks[12], ks[13], ks[14], planes)
    return dict(w1=w1, w2=w2, w3=w3, s1=s1, b1=b1, s2=s2, b2=b2, s3=s3, b3=b3)


def reference_forward(x_nchw, p):
    """Pure-JAX f32 reference (same math, no Pallas, highest matmul precision)."""
    hp = jax.lax.Precision.HIGHEST
    N, C, H, W = x_nchw.shape
    x = jnp.transpose(x_nchw, (0, 2, 3, 1)).astype(jnp.float32)
    width = p["w1"].shape[1]

    o1 = jnp.einsum("nhwc,cd->nhwd", x, p["w1"], precision=hp)
    o1 = jnp.maximum(o1 * p["s1"] + p["b1"], 0.0)

    o1p = jnp.pad(o1, ((0, 0), (1, 1), (1, 1), (0, 0)))
    o2 = jnp.zeros((N, H, W, width), jnp.float32)
    for ky in range(3):
        for kx in range(3):
            o2 = o2 + jnp.einsum("nhwc,cd->nhwd",
                                 o1p[:, ky:ky + H, kx:kx + W, :],
                                 p["w2"][3 * ky + kx], precision=hp)
    o2 = jnp.maximum(o2 * p["s2"] + p["b2"], 0.0)

    o3 = jnp.einsum("nhwc,cd->nhwd", o2, p["w3"], precision=hp)
    o3 = jnp.maximum(o3 * p["s3"] + p["b3"] + x, 0.0)
    return jnp.transpose(o3, (0, 3, 1, 2))


# ------------------------------ main ------------------------------ #

if __name__ == "__main__":
    key = jax.random.PRNGKey(0)
    kx, kp = jax.random.split(key)

    N, C, H, W = 2, 4, 16, 16          # inplanes = planes = 4
    x = jax.random.normal(kx, (N, C, H, W), jnp.float32)
    params = make_bottleneck_params(kp, inplanes=C, planes=C)

    fwd = jax.jit(lambda xx: bottleneck_forward(xx, params))
    out = jax.block_until_ready(fwd(x))

    ref = jax.block_until_ready(reference_forward(x, params))
    # bf16 matmul operands with f32 accumulation -> loose-ish tolerance vs f32 reference.
    np.testing.assert_allclose(np.asarray(out), np.asarray(ref), rtol=2e-2, atol=2e-2)
    assert out.shape == (N, C, H, W)

    print("KERNEL_OK")
</pallas_src>

<mosaic_0001>
module attributes {stable_mosaic.version = 11 : i64} {
  func.func @_bottleneck_kernel(%arg0: i32, %arg1: i32, %arg2: memref<1x128x4xf32, #tpu.memory_space<vmem>>, %arg3: memref<1x16x4xf32, #tpu.memory_space<vmem>>, %arg4: memref<1x16x4xf32, #tpu.memory_space<vmem>>, %arg5: memref<4x4xbf16, #tpu.memory_space<vmem>>, %arg6: memref<3x4x12xbf16, #tpu.memory_space<vmem>>, %arg7: memref<4x4xbf16, #tpu.memory_space<vmem>>, %arg8: memref<1x4xf32, #tpu.memory_space<vmem>>, %arg9: memref<1x4xf32, #tpu.memory_space<vmem>>, %arg10: memref<1x4xf32, #tpu.memory_space<vmem>>, %arg11: memref<1x4xf32, #tpu.memory_space<vmem>>, %arg12: memref<1x4xf32, #tpu.memory_space<vmem>>, %arg13: memref<1x4xf32, #tpu.memory_space<vmem>>, %arg14: memref<1x128x4xf32, #tpu.memory_space<vmem>>, %arg15: memref<160x4xbf16, #tpu.memory_space<vmem>>, %arg16: memref<2x144x4xf32, #tpu.memory_space<vmem>>) attributes {dimension_semantics = [#tpu.dimension_semantics<parallel>, #tpu.dimension_semantics<parallel>], iteration_bounds = array<i64: 2, 2>, scalar_prefetch = 0 : i64, scratch_operands = 2 : i64, tpu.core_type = #tpu.core_type<tc>, window_params = [{transform_indices = @transform_0, window_bounds = array<i64: 1, 128, 4>}, {transform_indices = @transform_1, window_bounds = array<i64: 1, 16, 4>}, {transform_indices = @transform_2, window_bounds = array<i64: 1, 16, 4>}, {pipeline_mode = #tpu.pipeline_mode<synchronous>, transform_indices = @transform_3, window_bounds = array<i64: 4, 4>}, {pipeline_mode = #tpu.pipeline_mode<synchronous>, transform_indices = @transform_4, window_bounds = array<i64: 3, 4, 12>}, {pipeline_mode = #tpu.pipeline_mode<synchronous>, transform_indices = @transform_5, window_bounds = array<i64: 4, 4>}, {pipeline_mode = #tpu.pipeline_mode<synchronous>, transform_indices = @transform_6, window_bounds = array<i64: 1, 4>}, {pipeline_mode = #tpu.pipeline_mode<synchronous>, transform_indices = @transform_7, window_bounds = array<i64: 1, 4>}, {pipeline_mode = #tpu.pipeline_mode<synchronous>, transform_indices = @transform_8, window_bounds = array<i64: 1, 4>}, {pipeline_mode = #tpu.pipeline_mode<synchronous>, transform_indices = @transform_9, window_bounds = array<i64: 1, 4>}, {pipeline_mode = #tpu.pipeline_mode<synchronous>, transform_indices = @transform_10, window_bounds = array<i64: 1, 4>}, {pipeline_mode = #tpu.pipeline_mode<synchronous>, transform_indices = @transform_11, window_bounds = array<i64: 1, 4>}, {transform_indices = @transform_12, window_bounds = array<i64: 1, 128, 4>}]} {
    %c0 = arith.constant 0 : index
    %c0_0 = arith.constant 0 : index
    %0 = vector.load %arg8[%c0, %c0_0] : memref<1x4xf32, #tpu.memory_space<vmem>>, vector<1x4xf32>
    %c0_1 = arith.constant 0 : index
    %c0_2 = arith.constant 0 : index
    %1 = vector.load %arg9[%c0_1, %c0_2] : memref<1x4xf32, #tpu.memory_space<vmem>>, vector<1x4xf32>
    %c0_3 = arith.constant 0 : index
    %c0_4 = arith.constant 0 : index
    %c0_5 = arith.constant 0 : index
    %2 = vector.load %arg2[%c0_3, %c0_4, %c0_5] : memref<1x128x4xf32, #tpu.memory_space<vmem>>, vector<1x128x4xf32>
    %3 = vector.shape_cast %2 : vector<1x128x4xf32> to vector<128x4xf32>
    %4 = arith.truncf %3 : vector<128x4xf32> to vector<128x4xbf16>
    %c0_6 = arith.constant 0 : index
    %c0_7 = arith.constant 0 : index
    %5 = vector.load %arg5[%c0_6, %c0_7] : memref<4x4xbf16, #tpu.memory_space<vmem>>, vector<4x4xbf16>
    %cst = arith.constant dense<0.000000e+00> : vector<128x4xf32>
    %6 = tpu.matmul %4, %5, %cst {dimension_numbers = #tpu.dot_dimension_numbers<[1], [0], [0], [1], [0, 0, 1, 1], [], []>} : vector<128x4xbf16>, vector<4x4xbf16>, vector<128x4xf32> -> vector<128x4xf32>
    %7 = vector.broadcast %0 : vector<1x4xf32> to vector<128x4xf32>
    %8 = arith.mulf %6, %7 : vector<128x4xf32>
    %9 = vector.broadcast %1 : vector<1x4xf32> to vector<128x4xf32>
    %10 = arith.addf %8, %9 : vector<128x4xf32>
    %cst_8 = arith.constant 0.000000e+00 : f32
    %11 = vector.broadcast %cst_8 : f32 to vector<128x4xf32>
    %12 = arith.maximumf %10, %11 : vector<128x4xf32>
    %13 = arith.truncf %12 : vector<128x4xf32> to vector<128x4xbf16>
    %c16 = arith.constant 16 : index
    %c0_9 = arith.constant 0 : index
    %14 = vector.load %arg15[%c16, %c0_9] : memref<160x4xbf16, #tpu.memory_space<vmem>>, vector<128x4xbf16>
    tpu.vector_store %arg15[%c16, %c0_9], %13 {strides = array<i32>} : memref<160x4xbf16, #tpu.memory_space<vmem>>, vector<128x4xbf16>,
    %c0_i32 = arith.constant 0 : i32
    %15 = arith.cmpi eq, %arg1, %c0_i32 : i32
    %16 = arith.extui %15 : i1 to i32
    %c0_i32_10 = arith.constant 0 : i32
    %17 = arith.cmpi ne, %16, %c0_i32_10 : i32
    scf.if %17 {
      %cst_97 = arith.constant 0.000000e+00 : bf16
      %158 = vector.broadcast %cst_97 : bf16 to vector<16x4xbf16>
      %c0_98 = arith.constant 0 : index
      %c0_99 = arith.constant 0 : index
      %159 = vector.load %arg15[%c0_98, %c0_99] : memref<160x4xbf16, #tpu.memory_space<vmem>>, vector<16x4xbf16>
      tpu.vector_store %arg15[%c0_98, %c0_99], %158 {strides = array<i32>} : memref<160x4xbf16, #tpu.memory_space<vmem>>, vector<16x4xbf16>,
    } else {
    }
    %c0_i32_11 = arith.constant 0 : i32
    %18 = arith.cmpi sgt, %arg1, %c0_i32_11 : i32
    %19 = arith.extui %18 : i1 to i32
    %c0_i32_12 = arith.constant 0 : i32
    %20 = arith.cmpi ne, %19, %c0_i32_12 : i32
    scf.if %20 {
      %c0_97 = arith.constant 0 : index
      %c0_98 = arith.constant 0 : index
      %c0_99 = arith.constant 0 : index
      %158 = vector.load %arg3[%c0_97, %c0_98, %c0_99] : memref<1x16x4xf32, #tpu.memory_space<vmem>>, vector<1x16x4xf32>
      %159 = vector.shape_cast %158 : vector<1x16x4xf32> to vector<16x4xf32>
      %160 = arith.truncf %159 : vector<16x4xf32> to vector<16x4xbf16>
      %c0_100 = arith.constant 0 : index
      %c0_101 = arith.constant 0 : index
      %161 = vector.load %arg5[%c0_100, %c0_101] : memref<4x4xbf16, #tpu.memory_space<vmem>>, vector<4x4xbf16>
      %cst_102 = arith.constant dense<0.000000e+00> : vector<16x4xf32>
      %162 = tpu.matmul %160, %161, %cst_102 {dimension_numbers = #tpu.dot_dimension_numbers<[1], [0], [0], [1], [0, 0, 1, 1], [], []>} : vector<16x4xbf16>, vector<4x4xbf16>, vector<16x4xf32> -> vector<16x4xf32>
      %163 = vector.broadcast %0 : vector<1x4xf32> to vector<16x4xf32>
      %164 = arith.mulf %162, %163 : vector<16x4xf32>
      %165 = vector.broadcast %1 : vector<1x4xf32> to vector<16x4xf32>
      %166 = arith.addf %164, %165 : vector<16x4xf32>
      %cst_103 = arith.constant 0.000000e+00 : f32
      %167 = vector.broadcast %cst_103 : f32 to vector<16x4xf32>
      %168 = arith.maximumf %166, %167 : vector<16x4xf32>
      %169 = arith.truncf %168 : vector<16x4xf32> to vector<16x4xbf16>
      %c0_104 = arith.constant 0 : index
      %c0_105 = arith.constant 0 : index
      %170 = vector.load %arg15[%c0_104, %c0_105] : memref<160x4xbf16, #tpu.memory_space<vmem>>, vector<16x4xbf16>
      tpu.vector_store %arg15[%c0_104, %c0_105], %169 {strides = array<i32>} : memref<160x4xbf16, #tpu.memory_space<vmem>>, vector<16x4xbf16>,
    } else {
    }
    %c1_i32 = arith.constant 1 : i32
    %21 = arith.cmpi eq, %arg1, %c1_i32 : i32
    %22 = arith.extui %21 : i1 to i32
    %c0_i32_13 = arith.constant 0 : i32
    %23 = arith.cmpi ne, %22, %c0_i32_13 : i32
    scf.if %23 {
      %cst_97 = arith.constant 0.000000e+00 : bf16
      %158 = vector.broadcast %cst_97 : bf16 to vector<16x4xbf16>
      %c144 = arith.constant 144 : index
      %c0_98 = arith.constant 0 : index
      %159 = vector.load %arg15[%c144, %c0_98] : memref<160x4xbf16, #tpu.memory_space<vmem>>, vector<16x4xbf16>
      tpu.vector_store %arg15[%c144, %c0_98], %158 {strides = array<i32>} : memref<160x4xbf16, #tpu.memory_space<vmem>>, vector<16x4xbf16>,
    } else {
    }
    %c1_i32_14 = arith.constant 1 : i32
    %24 = arith.cmpi slt, %arg1, %c1_i32_14 : i32
    %25 = arith.extui %24 : i1 to i32
    %c0_i32_15 = arith.constant 0 : i32
    %26 = arith.cmpi ne, %25, %c0_i32_15 : i32
    scf.if %26 {
      %c0_97 = arith.constant 0 : index
      %c0_98 = arith.constant 0 : index
      %c0_99 = arith.constant 0 : index
      %158 = vector.load %arg4[%c0_97, %c0_98, %c0_99] : memref<1x16x4xf32, #tpu.memory_space<vmem>>, vector<1x16x4xf32>
      %159 = vector.shape_cast %158 : vector<1x16x4xf32> to vector<16x4xf32>
      %160 = arith.truncf %159 : vector<16x4xf32> to vector<16x4xbf16>
      %c0_100 = arith.constant 0 : index
      %c0_101 = arith.constant 0 : index
      %161 = vector.load %arg5[%c0_100, %c0_101] : memref<4x4xbf16, #tpu.memory_space<vmem>>, vector<4x4xbf16>
      %cst_102 = arith.constant dense<0.000000e+00> : vector<16x4xf32>
      %162 = tpu.matmul %160, %161, %cst_102 {dimension_numbers = #tpu.dot_dimension_numbers<[1], [0], [0], [1], [0, 0, 1, 1], [], []>} : vector<16x4xbf16>, vector<4x4xbf16>, vector<16x4xf32> -> vector<16x4xf32>
      %163 = vector.broadcast %0 : vector<1x4xf32> to vector<16x4xf32>
      %164 = arith.mulf %162, %163 : vector<16x4xf32>
      %165 = vector.broadcast %1 : vector<1x4xf32> to vector<16x4xf32>
      %166 = arith.addf %164, %165 : vector<16x4xf32>
      %cst_103 = arith.constant 0.000000e+00 : f32
      %167 = vector.broadcast %cst_103 : f32 to vector<16x4xf32>
      %168 = arith.maximumf %166, %167 : vector<16x4xf32>
      %169 = arith.truncf %168 : vector<16x4xf32> to vector<16x4xbf16>
      %c144 = arith.constant 144 : index
      %c0_104 = arith.constant 0 : index
      %170 = vector.load %arg15[%c144, %c0_104] : memref<160x4xbf16, #tpu.memory_space<vmem>>, vector<16x4xbf16>
      tpu.vector_store %arg15[%c144, %c0_104], %169 {strides = array<i32>} : memref<160x4xbf16, #tpu.memory_space<vmem>>, vector<16x4xbf16>,
    } else {
    }
    %27 = tpu.iota {dimensions = array<i32: 0>} : vector<128x1xi32>
    %c16_i32 = arith.constant 16 : i32
    %c0_i32_16 = arith.constant 0 : i32
    %28 = arith.cmpi eq, %c16_i32, %c0_i32_16 : i32
    %c1_i32_17 = arith.constant 1 : i32
    %29 = arith.select %28, %c1_i32_17, %c16_i32 : i32
    %30 = vector.broadcast %29 : i32 to vector<128x1xi32>
    %31 = arith.remsi %27, %30 : vector<128x1xi32>
    %c0_i32_18 = arith.constant 0 : i32
    %32 = vector.broadcast %c0_i32_18 : i32 to vector<128x1xi32>
    %33 = arith.cmpi ne, %31, %32 : vector<128x1xi32>
    %c0_i32_19 = arith.constant 0 : i32
    %34 = vector.broadcast %c0_i32_19 : i32 to vector<128x1xi32>
    %35 = arith.cmpi slt, %31, %34 : vector<128x1xi32>
    %c0_i32_20 = arith.constant 0 : i32
    %36 = arith.cmpi slt, %29, %c0_i32_20 : i32
    %37 = vector.broadcast %36 : i1 to vector<128x1xi1>
    %38 = vector.broadcast %37 : vector<128x1xi1> to vector<128x1xi1>
    %39 = arith.xori %35, %38 : vector<128x1xi1>
    %40 = arith.andi %39, %33 : vector<128x1xi1>
    %41 = vector.broadcast %29 : i32 to vector<128x1xi32>
    %42 = arith.addi %31, %41 : vector<128x1xi32>
    %43 = arith.select %40, %42, %31 : vector<128x1xi1>, vector<128x1xi32>
    %c0_i32_21 = arith.constant 0 : i32
    %44 = vector.broadcast %c0_i32_21 : i32 to vector<128x1xi32>
    %45 = arith.cmpi ne, %43, %44 : vector<128x1xi32>
    %46 = arith.extui %45 : vector<128x1xi1> to vector<128x1xi32>
    %47 = arith.sitofp %46 : vector<128x1xi32> to vector<128x1xf32>
    %c15_i32 = arith.constant 15 : i32
    %48 = vector.broadcast %c15_i32 : i32 to vector<128x1xi32>
    %49 = arith.cmpi ne, %43, %48 : vector<128x1xi32>
    %50 = arith.extui %49 : vector<128x1xi1> to vector<128x1xi32>
    %51 = arith.sitofp %50 : vector<128x1xi32> to vector<128x1xf32>
    %cst_22 = arith.constant 0.000000e+00 : f32
    %52 = vector.broadcast %cst_22 : f32 to vector<8x4xf32>
    %c0_23 = arith.constant 0 : index
    %c0_24 = arith.constant 0 : index
    %c0_25 = arith.constant 0 : index
    %53 = vector.load %arg16[%c0_23, %c0_24, %c0_25] : memref<2x144x4xf32, #tpu.memory_space<vmem>>, vector<1x8x4xf32>
    %54 = vector.shape_cast %53 : vector<1x8x4xf32> to vector<8x4xf32>
    %55 = vector.shape_cast %52 : vector<8x4xf32> to vector<1x8x4xf32>
    tpu.vector_store %arg16[%c0_23, %c0_24, %c0_25], %55 {strides = array<i32>} : memref<2x144x4xf32, #tpu.memory_space<vmem>>, vector<1x8x4xf32>,
    %cst_26 = arith.constant 0.000000e+00 : f32
    %56 = vector.broadcast %cst_26 : f32 to vector<8x4xf32>
    %c1 = arith.constant 1 : index
    %c136 = arith.constant 136 : index
    %c0_27 = arith.constant 0 : index
    %57 = vector.load %arg16[%c1, %c136, %c0_27] : memref<2x144x4xf32, #tpu.memory_space<vmem>>, vector<1x8x4xf32>
    %58 = vector.shape_cast %57 : vector<1x8x4xf32> to vector<8x4xf32>
    %59 = vector.shape_cast %56 : vector<8x4xf32> to vector<1x8x4xf32>
    tpu.vector_store %arg16[%c1, %c136, %c0_27], %59 {strides = array<i32>} : memref<2x144x4xf32, #tpu.memory_space<vmem>>, vector<1x8x4xf32>,
    %cst_28 = arith.constant 0.000000e+00 : f32
    %60 = vector.broadcast %cst_28 : f32 to vector<128x4xf32>
    %c0_29 = arith.constant 0 : index
    %c0_30 = arith.constant 0 : index
    %61 = vector.load %arg15[%c0_29, %c0_30] : memref<160x4xbf16, #tpu.memory_space<vmem>>, vector<128x4xbf16>
    %c0_31 = arith.constant 0 : index
    %c0_32 = arith.constant 0 : index
    %c0_33 = arith.constant 0 : index
    %62 = vector.load %arg6[%c0_31, %c0_32, %c0_33] : memref<3x4x12xbf16, #tpu.memory_space<vmem>>, vector<1x4x12xbf16>
    %63 = vector.shape_cast %62 : vector<1x4x12xbf16> to vector<4x12xbf16>
    %cst_34 = arith.constant dense<0.000000e+00> : vector<128x12xf32>
    %64 = tpu.matmul %61, %63, %cst_34 {dimension_numbers = #tpu.dot_dimension_numbers<[1], [0], [0], [1], [0, 0, 1, 1], [], []>} : vector<128x4xbf16>, vector<4x12xbf16>, vector<128x12xf32> -> vector<128x12xf32>
    %65 = vector.extract_strided_slice %64 {offsets = [0, 0], sizes = [128, 4], strides = [1, 1]} : vector<128x12xf32> to vector<128x4xf32>
    %c0_35 = arith.constant 0 : index
    %c8 = arith.constant 8 : index
    %c0_36 = arith.constant 0 : index
    %66 = vector.load %arg16[%c0_35, %c8, %c0_36] : memref<2x144x4xf32, #tpu.memory_space<vmem>>, vector<1x128x4xf32>
    %67 = vector.shape_cast %66 : vector<1x128x4xf32> to vector<128x4xf32>
    %68 = vector.shape_cast %65 : vector<128x4xf32> to vector<1x128x4xf32>
    tpu.vector_store %arg16[%c0_35, %c8, %c0_36], %68 {strides = array<i32>} : memref<2x144x4xf32, #tpu.memory_space<vmem>>, vector<1x128x4xf32>,
    %69 = vector.extract_strided_slice %64 {offsets = [0, 8], sizes = [128, 4], strides = [1, 1]} : vector<128x12xf32> to vector<128x4xf32>
    %c1_37 = arith.constant 1 : index
    %c8_38 = arith.constant 8 : index
    %c0_39 = arith.constant 0 : index
    %70 = vector.load %arg16[%c1_37, %c8_38, %c0_39] : memref<2x144x4xf32, #tpu.memory_space<vmem>>, vector<1x128x4xf32>
    %71 = vector.shape_cast %70 : vector<1x128x4xf32> to vector<128x4xf32>
    %72 = vector.shape_cast %69 : vector<128x4xf32> to vector<1x128x4xf32>
    tpu.vector_store %arg16[%c1_37, %c8_38, %c0_39], %72 {strides = array<i32>} : memref<2x144x4xf32, #tpu.memory_space<vmem>>, vector<1x128x4xf32>,
    %c0_40 = arith.constant 0 : index
    %c7 = arith.constant 7 : index
    %c0_41 = arith.constant 0 : index
    %73 = vector.load %arg16[%c0_40, %c7, %c0_41] : memref<2x144x4xf32, #tpu.memory_space<vmem>>, vector<1x128x4xf32>
    %74 = vector.shape_cast %73 : vector<1x128x4xf32> to vector<128x4xf32>
    %c1_42 = arith.constant 1 : index
    %c9 = arith.constant 9 : index
    %c0_43 = arith.constant 0 : index
    %75 = vector.load %arg16[%c1_42, %c9, %c0_43] : memref<2x144x4xf32, #tpu.memory_space<vmem>>, vector<1x128x4xf32>
    %76 = vector.shape_cast %75 : vector<1x128x4xf32> to vector<128x4xf32>
    %77 = vector.extract_strided_slice %64 {offsets = [0, 4], sizes = [128, 4], strides = [1, 1]} : vector<128x12xf32> to vector<128x4xf32>
    %78 = vector.broadcast %47 : vector<128x1xf32> to vector<128x4xf32>
    %79 = arith.mulf %74, %78 : vector<128x4xf32>
    %80 = vector.broadcast %51 : vector<128x1xf32> to vector<128x4xf32>
    %81 = arith.mulf %76, %80 : vector<128x4xf32>
    %82 = arith.addf %79, %81 : vector<128x4xf32>
    %83 = arith.addf %77, %82 : vector<128x4xf32>
    %84 = arith.addf %60, %83 : vector<128x4xf32>
    %c16_44 = arith.constant 16 : index
    %c0_45 = arith.constant 0 : index
    %85 = vector.load %arg15[%c16_44, %c0_45] : memref<160x4xbf16, #tpu.memory_space<vmem>>, vector<128x4xbf16>
    %c1_46 = arith.constant 1 : index
    %c0_47 = arith.constant 0 : index
    %c0_48 = arith.constant 0 : index
    %86 = vector.load %arg6[%c1_46, %c0_47, %c0_48] : memref<3x4x12xbf16, #tpu.memory_space<vmem>>, vector<1x4x12xbf16>
    %87 = vector.shape_cast %86 : vector<1x4x12xbf16> to vector<4x12xbf16>
    %cst_49 = arith.constant dense<0.000000e+00> : vector<128x12xf32>
    %88 = tpu.matmul %85, %87, %cst_49 {dimension_numbers = #tpu.dot_dimension_numbers<[1], [0], [0], [1], [0, 0, 1, 1], [], []>} : vector<128x4xbf16>, vector<4x12xbf16>, vector<128x12xf32> -> vector<128x12xf32>
    %89 = vector.extract_strided_slice %88 {offsets = [0, 0], sizes = [128, 4], strides = [1, 1]} : vector<128x12xf32> to vector<128x4xf32>
    %c0_50 = arith.constant 0 : index
    %c8_51 = arith.constant 8 : index
    %c0_52 = arith.constant 0 : index
    %90 = vector.load %arg16[%c0_50, %c8_51, %c0_52] : memref<2x144x4xf32, #tpu.memory_space<vmem>>, vector<1x128x4xf32>
    %91 = vector.shape_cast %90 : vector<1x128x4xf32> to vector<128x4xf32>
    %92 = vector.shape_cast %89 : vector<128x4xf32> to vector<1x128x4xf32>
    tpu.vector_store %arg16[%c0_50, %c8_51, %c0_52], %92 {strides = array<i32>} : memref<2x144x4xf32, #tpu.memory_space<vmem>>, vector<1x128x4xf32>,
    %93 = vector.extract_strided_slice %88 {offsets = [0, 8], sizes = [128, 4], strides = [1, 1]} : vector<128x12xf32> to vector<128x4xf32>
    %c1_53 = arith.constant 1 : index
    %c8_54 = arith.constant 8 : index
    %c0_55 = arith.constant 0 : index
    %94 = vector.load %arg16[%c1_53, %c8_54, %c0_55] : memref<2x144x4xf32, #tpu.memory_space<vmem>>, vector<1x128x4xf32>
    %95 = vector.shape_cast %94 : vector<1x128x4xf32> to vector<128x4xf32>
    %96 = vector.shape_cast %93 : vector<128x4xf32> to vector<1x128x4xf32>
    tpu.vector_store %arg16[%c1_53, %c8_54, %c0_55], %96 {strides = array<i32>} : memref<2x144x4xf32, #tpu.memory_space<vmem>>, vector<1x128x4xf32>,
    %c0_56 = arith.constant 0 : index
    %c7_57 = arith.constant 7 : index
    %c0_58 = arith.constant 0 : index
    %97 = vector.load %arg16[%c0_56, %c7_57, %c0_58] : memref<2x144x4xf32, #tpu.memory_space<vmem>>, vector<1x128x4xf32>
    %98 = vector.shape_cast %97 : vector<1x128x4xf32> to vector<128x4xf32>
    %c1_59 = arith.constant 1 : index
    %c9_60 = arith.constant 9 : index
    %c0_61 = arith.constant 0 : index
    %99 = vector.load %arg16[%c1_59, %c9_60, %c0_61] : memref<2x144x4xf32, #tpu.memory_space<vmem>>, vector<1x128x4xf32>
    %100 = vector.shape_cast %99 : vector<1x128x4xf32> to vector<128x4xf32>
    %101 = vector.extract_strided_slice %88 {offsets = [0, 4], sizes = [128, 4], strides = [1, 1]} : vector<128x12xf32> to vector<128x4xf32>
    %102 = vector.broadcast %47 : vector<128x1xf32> to vector<128x4xf32>
    %103 = arith.mulf %98, %102 : vector<128x4xf32>
    %104 = vector.broadcast %51 : vector<128x1xf32> to vector<128x4xf32>
    %105 = arith.mulf %100, %104 : vector<128x4xf32>
    %106 = arith.addf %103, %105 : vector<128x4xf32>
    %107 = arith.addf %101, %106 : vector<128x4xf32>
    %108 = arith.addf %84, %107 : vector<128x4xf32>
    %c32 = arith.constant 32 : index
    %c0_62 = arith.constant 0 : index
    %109 = vector.load %arg15[%c32, %c0_62] : memref<160x4xbf16, #tpu.memory_space<vmem>>, vector<128x4xbf16>
    %c2 = arith.constant 2 : index
    %c0_63 = arith.constant 0 : index
    %c0_64 = arith.constant 0 : index
    %110 = vector.load %arg6[%c2, %c0_63, %c0_64] : memref<3x4x12xbf16, #tpu.memory_space<vmem>>, vector<1x4x12xbf16>
    %111 = vector.shape_cast %110 : vector<1x4x12xbf16> to vector<4x12xbf16>
    %cst_65 = arith.constant dense<0.000000e+00> : vector<128x12xf32>
    %112 = tpu.matmul %109, %111, %cst_65 {dimension_numbers = #tpu.dot_dimension_numbers<[1], [0], [0], [1], [0, 0, 1, 1], [], []>} : vector<128x4xbf16>, vector<4x12xbf16>, vector<128x12xf32> -> vector<128x12xf32>
    %113 = vector.extract_strided_slice %112 {offsets = [0, 0], sizes = [128, 4], strides = [1, 1]} : vector<128x12xf32> to vector<128x4xf32>
    %c0_66 = arith.constant 0 : index
    %c8_67 = arith.constant 8 : index
    %c0_68 = arith.constant 0 : index
    %114 = vector.load %arg16[%c0_66, %c8_67, %c0_68] : memref<2x144x4xf32, #tpu.memory_space<vmem>>, vector<1x128x4xf32>
    %115 = vector.shape_cast %114 : vector<1x128x4xf32> to vector<128x4xf32>
    %116 = vector.shape_cast %113 : vector<128x4xf32> to vector<1x128x4xf32>
    tpu.vector_store %arg16[%c0_66, %c8_67, %c0_68], %116 {strides = array<i32>} : memref<2x144x4xf32, #tpu.memory_space<vmem>>, vector<1x128x4xf32>,
    %117 = vector.extract_strided_slice %112 {offsets = [0, 8], sizes = [128, 4], strides = [1, 1]} : vector<128x12xf32> to vector<128x4xf32>
    %c1_69 = arith.constant 1 : index
    %c8_70 = arith.constant 8 : index
    %c0_71 = arith.constant 0 : index
    %118 = vector.load %arg16[%c1_69, %c8_70, %c0_71] : memref<2x144x4xf32, #tpu.memory_space<vmem>>, vector<1x128x4xf32>
    %119 = vector.shape_cast %118 : vector<1x128x4xf32> to vector<128x4xf32>
    %120 = vector.shape_cast %117 : vector<128x4xf32> to vector<1x128x4xf32>
    tpu.vector_store %arg16[%c1_69, %c8_70, %c0_71], %120 {strides = array<i32>} : memref<2x144x4xf32, #tpu.memory_space<vmem>>, vector<1x128x4xf32>,
    %c0_72 = arith.constant 0 : index
    %c7_73 = arith.constant 7 : index
    %c0_74 = arith.constant 0 : index
    %121 = vector.load %arg16[%c0_72, %c7_73, %c0_74] : memref<2x144x4xf32, #tpu.memory_space<vmem>>, vector<1x128x4xf32>
    %122 = vector.shape_cast %121 : vector<1x128x4xf32> to vector<128x4xf32>
    %c1_75 = arith.constant 1 : index
    %c9_76 = arith.constant 9 : index
    %c0_77 = arith.constant 0 : index
    %123 = vector.load %arg16[%c1_75, %c9_76, %c0_77] : memref<2x144x4xf32, #tpu.memory_space<vmem>>, vector<1x128x4xf32>
    %124 = vector.shape_cast %123 : vector<1x128x4xf32> to vector<128x4xf32>
    %125 = vector.extract_strided_slice %112 {offsets = [0, 4], sizes = [128, 4], strides = [1, 1]} : vector<128x12xf32> to vector<128x4xf32>
    %126 = vector.broadcast %47 : vector<128x1xf32> to vector<128x4xf32>
    %127 = arith.mulf %122, %126 : vector<128x4xf32>
    %128 = vector.broadcast %51 : vector<128x1xf32> to vector<128x4xf32>
    %129 = arith.mulf %124, %128 : vector<128x4xf32>
    %130 = arith.addf %127, %129 : vector<128x4xf32>
    %131 = arith.addf %125, %130 : vector<128x4xf32>
    %132 = arith.addf %108, %131 : vector<128x4xf32>
    %c0_78 = arith.constant 0 : index
    %c0_79 = arith.constant 0 : index
    %133 = vector.load %arg10[%c0_78, %c0_79] : memref<1x4xf32, #tpu.memory_space<vmem>>, vector<1x4xf32>
    %134 = vector.broadcast %133 : vector<1x4xf32> to vector<128x4xf32>
    %135 = arith.mulf %132, %134 : vector<128x4xf32>
    %c0_80 = arith.constant 0 : index
    %c0_81 = arith.constant 0 : index
    %136 = vector.load %arg11[%c0_80, %c0_81] : memref<1x4xf32, #tpu.memory_space<vmem>>, vector<1x4xf32>
    %137 = vector.broadcast %136 : vector<1x4xf32> to vector<128x4xf32>
    %138 = arith.addf %135, %137 : vector<128x4xf32>
    %cst_82 = arith.constant 0.000000e+00 : f32
    %139 = vector.broadcast %cst_82 : f32 to vector<128x4xf32>
    %140 = arith.maximumf %138, %139 : vector<128x4xf32>
    %141 = arith.truncf %140 : vector<128x4xf32> to vector<128x4xbf16>
    %c0_83 = arith.constant 0 : index
    %c0_84 = arith.constant 0 : index
    %142 = vector.load %arg7[%c0_83, %c0_84] : memref<4x4xbf16, #tpu.memory_space<vmem>>, vector<4x4xbf16>
    %cst_85 = arith.constant dense<0.000000e+00> : vector<128x4xf32>
    %143 = tpu.matmul %141, %142, %cst_85 {dimension_numbers = #tpu.dot_dimension_numbers<[1], [0], [0], [1], [0, 0, 1, 1], [], []>} : vector<128x4xbf16>, vector<4x4xbf16>, vector<128x4xf32> -> vector<128x4xf32>
    %c0_86 = arith.constant 0 : index
    %c0_87 = arith.constant 0 : index
    %144 = vector.load %arg12[%c0_86, %c0_87] : memref<1x4xf32, #tpu.memory_space<vmem>>, vector<1x4xf32>
    %145 = vector.broadcast %144 : vector<1x4xf32> to vector<128x4xf32>
    %146 = arith.mulf %143, %145 : vector<128x4xf32>
    %c0_88 = arith.constant 0 : index
    %c0_89 = arith.constant 0 : index
    %147 = vector.load %arg13[%c0_88, %c0_89] : memref<1x4xf32, #tpu.memory_space<vmem>>, vector<1x4xf32>
    %148 = vector.broadcast %147 : vector<1x4xf32> to vector<128x4xf32>
    %149 = arith.addf %146, %148 : vector<128x4xf32>
    %c0_90 = arith.constant 0 : index
    %c0_91 = arith.constant 0 : index
    %c0_92 = arith.constant 0 : index
    %150 = vector.load %arg2[%c0_90, %c0_91, %c0_92] : memref<1x128x4xf32, #tpu.memory_space<vmem>>, vector<1x128x4xf32>
    %151 = vector.shape_cast %150 : vector<1x128x4xf32> to vector<128x4xf32>
    %152 = arith.addf %149, %151 : vector<128x4xf32>
    %cst_93 = arith.constant 0.000000e+00 : f32
    %153 = vector.broadcast %cst_93 : f32 to vector<128x4xf32>
    %154 = arith.maximumf %152, %153 : vector<128x4xf32>
    %c0_94 = arith.constant 0 : index
    %c0_95 = arith.constant 0 : index
    %c0_96 = arith.constant 0 : index
    %155 = vector.load %arg14[%c0_94, %c0_95, %c0_96] : memref<1x128x4xf32, #tpu.memory_space<vmem>>, vector<1x128x4xf32>
    %156 = vector.shape_cast %155 : vector<1x128x4xf32> to vector<128x4xf32>
    %157 = vector.shape_cast %154 : vector<128x4xf32> to vector<1x128x4xf32>
    tpu.vector_store %arg14[%c0_94, %c0_95, %c0_96], %157 {strides = array<i32>} : memref<1x128x4xf32, #tpu.memory_space<vmem>>, vector<1x128x4xf32>,
    return
  }
  func.func @transform_0(%arg0: i32, %arg1: i32) -> (i32, i32, i32) {
    %c0_i32 = arith.constant 0 : i32
    %c0_i32_0 = arith.constant 0 : i32
    return %arg0, %arg1, %c0_i32 : i32, i32, i32
  }
  func.func @transform_1(%arg0: i32, %arg1: i32) -> (i32, i32, i32) {
    %c8_i32 = arith.constant 8 : i32
    %0 = arith.muli %arg1, %c8_i32 : i32
    %c1_i32 = arith.constant 1 : i32
    %1 = arith.subi %0, %c1_i32 : i32
    %c0_i32 = arith.constant 0 : i32
    %2 = arith.maxsi %1, %c0_i32 : i32
    %c0_i32_0 = arith.constant 0 : i32
    %c0_i32_1 = arith.constant 0 : i32
    return %arg0, %2, %c0_i32_0 : i32, i32, i32
  }
  func.func @transform_2(%arg0: i32, %arg1: i32) -> (i32, i32, i32) {
    %c1_i32 = arith.constant 1 : i32
    %0 = arith.addi %arg1, %c1_i32 : i32
    %c8_i32 = arith.constant 8 : i32
    %1 = arith.muli %0, %c8_i32 : i32
    %c15_i32 = arith.constant 15 : i32
    %2 = arith.minsi %1, %c15_i32 : i32
    %c0_i32 = arith.constant 0 : i32
    %c0_i32_0 = arith.constant 0 : i32
    return %arg0, %2, %c0_i32 : i32, i32, i32
  }
  func.func @transform_3(%arg0: i32, %arg1: i32) -> (i32, i32) {
    %c0_i32 = arith.constant 0 : i32
    %c0_i32_0 = arith.constant 0 : i32
    %c0_i32_1 = arith.constant 0 : i32
    return %c0_i32, %c0_i32_0 : i32, i32
  }
  func.func @transform_4(%arg0: i32, %arg1: i32) -> (i32, i32, i32) {
    %c0_i32 = arith.constant 0 : i32
    %c0_i32_0 = arith.constant 0 : i32
    %c0_i32_1 = arith.constant 0 : i32
    %c0_i32_2 = arith.constant 0 : i32
    return %c0_i32, %c0_i32_0, %c0_i32_1 : i32, i32, i32
  }
  func.func @transform_5(%arg0: i32, %arg1: i32) -> (i32, i32) {
    %c0_i32 = arith.constant 0 : i32
    %c0_i32_0 = arith.constant 0 : i32
    %c0_i32_1 = arith.constant 0 : i32
    return %c0_i32, %c0_i32_0 : i32, i32
  }
  func.func @transform_6(%arg0: i32, %arg1: i32) -> (i32, i32) {
    %c0_i32 = arith.constant 0 : i32
    %c0_i32_0 = arith.constant 0 : i32
    %c0_i32_1 = arith.constant 0 : i32
    return %c0_i32, %c0_i32_0 : i32, i32
  }
  func.func @transform_7(%arg0: i32, %arg1: i32) -> (i32, i32) {
    %c0_i32 = arith.constant 0 : i32
    %c0_i32_0 = arith.constant 0 : i32
    %c0_i32_1 = arith.constant 0 : i32
    return %c0_i32, %c0_i32_0 : i32, i32
  }
  func.func @transform_8(%arg0: i32, %arg1: i32) -> (i32, i32) {
    %c0_i32 = arith.constant 0 : i32
    %c0_i32_0 = arith.constant 0 : i32
    %c0_i32_1 = arith.constant 0 : i32
    return %c0_i32, %c0_i32_0 : i32, i32
  }
  func.func @transform_9(%arg0: i32, %arg1: i32) -> (i32, i32) {
    %c0_i32 = arith.constant 0 : i32
    %c0_i32_0 = arith.constant 0 : i32
    %c0_i32_1 = arith.constant 0 : i32
    return %c0_i32, %c0_i32_0 : i32, i32
  }
  func.func @transform_10(%arg0: i32, %arg1: i32) -> (i32, i32) {
    %c0_i32 = arith.constant 0 : i32
    %c0_i32_0 = arith.constant 0 : i32
    %c0_i32_1 = arith.constant 0 : i32
    return %c0_i32, %c0_i32_0 : i32, i32
  }
  func.func @transform_11(%arg0: i32, %arg1: i32) -> (i32, i32) {
    %c0_i32 = arith.constant 0 : i32
    %c0_i32_0 = arith.constant 0 : i32
    %c0_i32_1 = arith.constant 0 : i32
    return %c0_i32, %c0_i32_0 : i32, i32
  }
  func.func @transform_12(%arg0: i32, %arg1: i32) -> (i32, i32, i32) {
    %c0_i32 = arith.constant 0 : i32
    %c0_i32_0 = arith.constant 0 : i32
    return %arg0, %arg1, %c0_i32 : i32, i32, i32
  }
}

</mosaic_0001>

<llo_original>
// kernel: _lambda_.1
$region0: #{_lambda_.1}
  #allocation0 [shape = 'u32[]', space=smem, size = 0x4, offset = 0x4, fixed_abs, tag = 'smem constant byte address 0x4 - core index']
  #allocation1 [shape = 'u32[72,128]{1,0:T(1,128)}', space=vmem, size = 0x9000, scoped, tag = 'internal scratch']
  #allocation2 [shape = 'bf16[160,4]{1,0:T(8,128)(2,1)}', space=vmem, size = 0xa000, scoped, tag = 'scratch operand']
  #allocation3 [shape = 'f32[2,144,4]{2,1,0:T(8,128)}', space=vmem, size = 0x24000, scoped, tag = 'scratch operand']
  %s0 = inlined_call_operand.vmem [shape: f32[2,256,4], index: 0, kind: input, shape index: {}, may-alias: {0,1,2}]
  %s1 = inlined_call_operand.vmem [shape: f32[2,256,4], index: 1, kind: input, shape index: {}, may-alias: {0,1,2}]
  %s2 = inlined_call_operand.vmem [shape: f32[2,256,4], index: 2, kind: input, shape index: {}, may-alias: {0,1,2}]
  %s3 = inlined_call_operand.vmem [shape: bf16[4,4], index: 3, kind: input, shape index: {}]
  %s4 = inlined_call_operand.vmem [shape: bf16[3,4,12], index: 4, kind: input, shape index: {}]
  %s5 = inlined_call_operand.vmem [shape: bf16[4,4], index: 5, kind: input, shape index: {}]
  %s6 = inlined_call_operand.vmem [shape: f32[1,4], index: 6, kind: input, shape index: {}]
  %s7 = inlined_call_operand.vmem [shape: f32[1,4], index: 7, kind: input, shape index: {}]
  %s8 = inlined_call_operand.vmem [shape: f32[1,4], index: 8, kind: input, shape index: {}]
  %s9 = inlined_call_operand.vmem [shape: f32[1,4], index: 9, kind: input, shape index: {}]
  %s10 = inlined_call_operand.vmem [shape: f32[1,4], index: 10, kind: input, shape index: {}]
  %s11 = inlined_call_operand.vmem [shape: f32[1,4], index: 11, kind: input, shape index: {}]
  %s12 = inlined_call_operand.vmem [shape: f32[2,256,4], index: 12, kind: output, shape index: {}]
  %s13 = sld [smem:[#allocation0]]
  $region97: #{_lambda_.1} parent=0
    _
  %s15 = ssub.s32 1, %s13
  %s16 = scalar_select 0, %s15, %s13
  loop: start=0, step=1, limit=6
  $region2: #{_lambda_.1} parent=0 // loop_pre_header
    _
  $region3: #{_lambda_.1} parent=0 // loop_header
    %s18 = sphi 0, %s22
    %p19 = scmp.ge.s32.totalorder %s18, 6
    %s25 = sphi 0, %s37
    %s26 = sphi 0, %s33
    %s27 = sphi 0, %s25
    %s28 = sphi 0, %s26
    %s29 = sphi 0, %s27
    %s30 = sphi 0, %s28
    %s42 = sphi 0, %s44
    %s45 = sphi 0, %s42
    %s46 = sphi 0, %s45
    %s62 = sphi 0, %s46
    %s78 = sphi 0, %s80
    %s81 = sphi 0, %s78
    %s82 = sphi 0, %s81
    %s98 = sphi 0, %s82
    %s114 = sphi 0, %s116
    %s117 = sphi 0, %s114
    %s118 = sphi 0, %s117
    %s134 = sphi 0, %s118
    %s138 = sphi 0, %s138
    %s140 = sphi 0, %s138
    %s141 = sphi 0, %s140
    %s155 = sphi 0, %s141
    %s159 = sphi 0, %s159
    %s161 = sphi 0, %s159
    %s162 = sphi 0, %s161
    %s176 = sphi 0, %s162
    %s180 = sphi 0, %s180
    %s182 = sphi 0, %s180
    %s183 = sphi 0, %s182
    %s197 = sphi 0, %s183
    %s201 = sphi 0, %s201
    %s203 = sphi 0, %s201
    %s204 = sphi 0, %s203
    %s218 = sphi 0, %s204
    %s222 = sphi 0, %s222
    %s224 = sphi 0, %s222
    %s225 = sphi 0, %s224
    %s239 = sphi 0, %s225
    %s243 = sphi 0, %s243
    %s245 = sphi 0, %s243
    %s246 = sphi 0, %s245
    %s260 = sphi 0, %s246
    %s264 = sphi 0, %s264
    %s266 = sphi 0, %s264
    %s267 = sphi 0, %s266
    %s281 = sphi 0, %s267
    %s285 = sphi 0, %s285
    %s287 = sphi 0, %s285
    %s288 = sphi 0, %s287
    %s302 = sphi 0, %s288
    %s306 = sphi 0, %s306
    %s308 = sphi 0, %s306
    %s309 = sphi 0, %s308
    %s323 = sphi 0, %s309
    %s331 = sphi 0, %s333
    %s334 = sphi 0, %s331
    %s335 = sphi 0, %s334
    %s351 = sphi 0, %s335
  $region4: #{_lambda_.1} parent=0 // loop_header_branch
    %21 = sbr.rel (%p19) target = $region8
  $region5: #{_lambda_.1} parent=0 // loop_body
    %s23 = ssub.s32 %s18, 1
    %s24 = ssub.s32 %s18, 2
    %s31 = sadd.s32 1, %s26
    %p32 = scmp.ge.s32.totalorder %s31, 2
    %s33 = scalar_select %p32, 0, %s31
    %s34 = sadd.s32 1, %s25
    %s35 = scalar_select %p32, %s34, %s25
    %p36 = scmp.ge.s32.totalorder %s35, 2
    %s37 = scalar_select %p36, 0, %s35
    %s38 = ssub.s32 %s25, %s37
    %s39 = ssub.s32 %s26, %s33
    %s40 = sor.u32 %s38, %s39
    %p41 = scmp.eq.s32.totalorder %s40, 0
    %s43 = sadd.s32 %s42, 1
    %s44 = scalar_select %p41, %s42, %s43
    %p47 = pneg %p41
    %p48 = scmp.eq.s32.totalorder %s18, 3
    %p49 = por %p47, %p48
    %p50 = scmp.ne.s32.totalorder %s42, %s45
    %p51 = scmp.eq.s32.totalorder %s18, 0
    %p52 = por %p50, %p51
    %p53 = scmp.ne.s32.totalorder %s42, %s45
    %p54 = scmp.eq.s32.totalorder %s23, 3
    %p55 = por %p53, %p54
    %p56 = scmp.ne.s32.totalorder %s45, %s46
    %p57 = scmp.eq.s32.totalorder %s23, 0
    %p58 = por %p56, %p57
    %p59 = scmp.ne.s32.totalorder %s45, %s46
    %p60 = scmp.eq.s32.totalorder %s24, 3
    %p61 = por %p59, %p60
    %p63 = scmp.ne.s32.totalorder %s46, %s62
    %p64 = scmp.eq.s32.totalorder %s24, 0
    %p65 = por %p63, %p64
    %s66 = smul.u32 %s26, 8
    %s67 = ssub.s32 %s66, 1
    %p68 = scmp.gt.s32.totalorder %s67, 0
    %s69 = scalar_select %p68, %s67, 0
    %s70 = smul.u32 %s33, 8
    %s71 = ssub.s32 %s70, 1
    %p72 = scmp.gt.s32.totalorder %s71, 0
    %s73 = scalar_select %p72, %s71, 0
    %s74 = ssub.s32 %s25, %s37
    %s75 = ssub.s32 %s69, %s73
    %s76 = sor.u32 %s74, %s75
    %p77 = scmp.eq.s32.totalorder %s76, 0
    %s79 = sadd.s32 %s78, 1
    %s80 = scalar_select %p77, %s78, %s79
    %p83 = pneg %p77
    %p84 = scmp.eq.s32.totalorder %s18, 3
    %p85 = por %p83, %p84
    %p86 = scmp.ne.s32.totalorder %s78, %s81
    %p87 = scmp.eq.s32.totalorder %s18, 0
    %p88 = por %p86, %p87
    %p89 = scmp.ne.s32.totalorder %s78, %s81
    %p90 = scmp.eq.s32.totalorder %s23, 3
    %p91 = por %p89, %p90
    %p92 = scmp.ne.s32.totalorder %s81, %s82
    %p93 = scmp.eq.s32.totalorder %s23, 0
    %p94 = por %p92, %p93
    %p95 = scmp.ne.s32.totalorder %s81, %s82
    %p96 = scmp.eq.s32.totalorder %s24, 3
    %p97 = por %p95, %p96
    %p99 = scmp.ne.s32.totalorder %s82, %s98
    %p100 = scmp.eq.s32.totalorder %s24, 0
    %p101 = por %p99, %p100
    %s102 = sadd.s32 %s26, 1
    %s103 = smul.u32 %s102, 8
    %p104 = scmp.lt.s32.totalorder %s103, 15
    %s105 = scalar_select %p104, %s103, 15
    %s106 = sadd.s32 %s33, 1
    %s107 = smul.u32 %s106, 8
    %p108 = scmp.lt.s32.totalorder %s107, 15
    %s109 = scalar_select %p108, %s107, 15
    %s110 = ssub.s32 %s25, %s37
    %s111 = ssub.s32 %s105, %s109
    %s112 = sor.u32 %s110, %s111
    %p113 = scmp.eq.s32.totalorder %s112, 0
    %s115 = sadd.s32 %s114, 1
    %s116 = scalar_select %p113, %s114, %s115
    %p119 = pneg %p113
    %p120 = scmp.eq.s32.totalorder %s18, 3
    %p121 = por %p119, %p120
    %p122 = scmp.ne.s32.totalorder %s114, %s117
    %p123 = scmp.eq.s32.totalorder %s18, 0
    %p124 = por %p122, %p123
    %p125 = scmp.ne.s32.totalorder %s114, %s117
    %p126 = scmp.eq.s32.totalorder %s23, 3
    %p127 = por %p125, %p126
    %p128 = scmp.ne.s32.totalorder %s117, %s118
    %p129 = scmp.eq.s32.totalorder %s23, 0
    %p130 = por %p128, %p129
    %p131 = scmp.ne.s32.totalorder %s117, %s118
    %p132 = scmp.eq.s32.totalorder %s24, 3
    %p133 = por %p131, %p132
    %p135 = scmp.ne.s32.totalorder %s118, %s134
    %p136 = scmp.eq.s32.totalorder %s24, 0
    %p137 = por %p135, %p136
    %s139 = sadd.s32 %s138, 1
    %p142 = scmp.eq.s32.totalorder %s18, 3
    %p143 = scmp.ne.s32.totalorder %s138, %s140
    %p144 = scmp.eq.s32.totalorder %s18, 0
    %p145 = por %p143, %p144
    %p146 = scmp.ne.s32.totalorder %s138, %s140
    %p147 = scmp.eq.s32.totalorder %s23, 3
    %p148 = por %p146, %p147
    %p149 = scmp.ne.s32.totalorder %s140, %s141
    %p150 = scmp.eq.s32.totalorder %s23, 0
    %p151 = por %p149, %p150
    %p152 = scmp.ne.s32.totalorder %s140, %s141
    %p153 = scmp.eq.s32.totalorder %s24, 3
    %p154 = por %p152, %p153
    %p156 = scmp.ne.s32.totalorder %s141, %s155
    %p157 = scmp.eq.s32.totalorder %s24, 0
    %p158 = por %p156, %p157
    %s160 = sadd.s32 %s159, 1
    %p163 = scmp.eq.s32.totalorder %s18, 3
    %p164 = scmp.ne.s32.totalorder %s159, %s161
    %p165 = scmp.eq.s32.totalorder %s18, 0
    %p166 = por %p164, %p165
    %p167 = scmp.ne.s32.totalorder %s159, %s161
    %p168 = scmp.eq.s32.totalorder %s23, 3
    %p169 = por %p167, %p168
    %p170 = scmp.ne.s32.totalorder %s161, %s162
    %p171 = scmp.eq.s32.totalorder %s23, 0
    %p172 = por %p170, %p171
    %p173 = scmp.ne.s32.totalorder %s161, %s162
    %p174 = scmp.eq.s32.totalorder %s24, 3
    %p175 = por %p173, %p174
    %p177 = scmp.ne.s32.totalorder %s162, %s176
    %p178 = scmp.eq.s32.totalorder %s24, 0
    %p179 = por %p177, %p178
    %s181 = sadd.s32 %s180, 1
    %p184 = scmp.eq.s32.totalorder %s18, 3
    %p185 = scmp.ne.s32.totalorder %s180, %s182
    %p186 = scmp.eq.s32.totalorder %s18, 0
    %p187 = por %p185, %p186
    %p188 = scmp.ne.s32.totalorder %s180, %s182
    %p189 = scmp.eq.s32.totalorder %s23, 3
    %p190 = por %p188, %p189
    %p191 = scmp.ne.s32.totalorder %s182, %s183
    %p192 = scmp.eq.s32.totalorder %s23, 0
    %p193 = por %p191, %p192
    %p194 = scmp.ne.s32.totalorder %s182, %s183
    %p195 = scmp.eq.s32.totalorder %s24, 3
    %p196 = por %p194, %p195
    %p198 = scmp.ne.s32.totalorder %s183, %s197
    %p199 = scmp.eq.s32.totalorder %s24, 0
    %p200 = por %p198, %p199
    %s202 = sadd.s32 %s201, 1
    %p205 = scmp.eq.s32.totalorder %s18, 3
    %p206 = scmp.ne.s32.totalorder %s201, %s203
    %p207 = scmp.eq.s32.totalorder %s18, 0
    %p208 = por %p206, %p207
    %p209 = scmp.ne.s32.totalorder %s201, %s203
    %p210 = scmp.eq.s32.totalorder %s23, 3
    %p211 = por %p209, %p210
    %p212 = scmp.ne.s32.totalorder %s203, %s204
    %p213 = scmp.eq.s32.totalorder %s23, 0
    %p214 = por %p212, %p213
    %p215 = scmp.ne.s32.totalorder %s203, %s204
    %p216 = scmp.eq.s32.totalorder %s24, 3
    %p217 = por %p215, %p216
    %p219 = scmp.ne.s32.totalorder %s204, %s218
    %p220 = scmp.eq.s32.totalorder %s24, 0
    %p221 = por %p219, %p220
    %s223 = sadd.s32 %s222, 1
    %p226 = scmp.eq.s32.totalorder %s18, 3
    %p227 = scmp.ne.s32.totalorder %s222, %s224
    %p228 = scmp.eq.s32.totalorder %s18, 0
    %p229 = por %p227, %p228
    %p230 = scmp.ne.s32.totalorder %s222, %s224
    %p231 = scmp.eq.s32.totalorder %s23, 3
    %p232 = por %p230, %p231
    %p233 = scmp.ne.s32.totalorder %s224, %s225
    %p234 = scmp.eq.s32.totalorder %s23, 0
    %p235 = por %p233, %p234
    %p236 = scmp.ne.s32.totalorder %s224, %s225
    %p237 = scmp.eq.s32.totalorder %s24, 3
    %p238 = por %p236, %p237
    %p240 = scmp.ne.s32.totalorder %s225, %s239
    %p241 = scmp.eq.s32.totalorder %s24, 0
    %p242 = por %p240, %p241
    %s244 = sadd.s32 %s243, 1
    %p247 = scmp.eq.s32.totalorder %s18, 3
    %p248 = scmp.ne.s32.totalorder %s243, %s245
    %p249 = scmp.eq.s32.totalorder %s18, 0
    %p250 = por %p248, %p249
    %p251 = scmp.ne.s32.totalorder %s243, %s245
    %p252 = scmp.eq.s32.totalorder %s23, 3
    %p253 = por %p251, %p252
    %p254 = scmp.ne.s32.totalorder %s245, %s246
    %p255 = scmp.eq.s32.totalorder %s23, 0
    %p256 = por %p254, %p255
    %p257 = scmp.ne.s32.totalorder %s245, %s246
    %p258 = scmp.eq.s32.totalorder %s24, 3
    %p259 = por %p257, %p258
    %p261 = scmp.ne.s32.totalorder %s246, %s260
    %p262 = scmp.eq.s32.totalorder %s24, 0
    %p263 = por %p261, %p262
    %s265 = sadd.s32 %s264, 1
    %p268 = scmp.eq.s32.totalorder %s18, 3
    %p269 = scmp.ne.s32.totalorder %s264, %s266
    %p270 = scmp.eq.s32.totalorder %s18, 0
    %p271 = por %p269, %p270
    %p272 = scmp.ne.s32.totalorder %s264, %s266
    %p273 = scmp.eq.s32.totalorder %s23, 3
    %p274 = por %p272, %p273
    %p275 = scmp.ne.s32.totalorder %s266, %s267
    %p276 = scmp.eq.s32.totalorder %s23, 0
    %p277 = por %p275, %p276
    %p278 = scmp.ne.s32.totalorder %s266, %s267
    %p279 = scmp.eq.s32.totalorder %s24, 3
    %p280 = por %p278, %p279
    %p282 = scmp.ne.s32.totalorder %s267, %s281
    %p283 = scmp.eq.s32.totalorder %s24, 0
    %p284 = por %p282, %p283
    %s286 = sadd.s32 %s285, 1
    %p289 = scmp.eq.s32.totalorder %s18, 3
    %p290 = scmp.ne.s32.totalorder %s285, %s287
    %p291 = scmp.eq.s32.totalorder %s18, 0
    %p292 = por %p290, %p291
    %p293 = scmp.ne.s32.totalorder %s285, %s287
    %p294 = scmp.eq.s32.totalorder %s23, 3
    %p295 = por %p293, %p294
    %p296 = scmp.ne.s32.totalorder %s287, %s288
    %p297 = scmp.eq.s32.totalorder %s23, 0
    %p298 = por %p296, %p297
    %p299 = scmp.ne.s32.totalorder %s287, %s288
    %p300 = scmp.eq.s32.totalorder %s24, 3
    %p301 = por %p299, %p300
    %p303 = scmp.ne.s32.totalorder %s288, %s302
    %p304 = scmp.eq.s32.totalorder %s24, 0
    %p305 = por %p303, %p304
    %s307 = sadd.s32 %s306, 1
    %p310 = scmp.eq.s32.totalorder %s18, 3
    %p311 = scmp.ne.s32.totalorder %s306, %s308
    %p312 = scmp.eq.s32.totalorder %s18, 0
    %p313 = por %p311, %p312
    %p314 = scmp.ne.s32.totalorder %s306, %s308
    %p315 = scmp.eq.s32.totalorder %s23, 3
    %p316 = por %p314, %p315
    %p317 = scmp.ne.s32.totalorder %s308, %s309
    %p318 = scmp.eq.s32.totalorder %s23, 0
    %p319 = por %p317, %p318
    %p320 = scmp.ne.s32.totalorder %s308, %s309
    %p321 = scmp.eq.s32.totalorder %s24, 3
    %p322 = por %p320, %p321
    %p324 = scmp.ne.s32.totalorder %s309, %s323
    %p325 = scmp.eq.s32.totalorder %s24, 0
    %p326 = por %p324, %p325
    %s327 = ssub.s32 %s25, %s37
    %s328 = ssub.s32 %s26, %s33
    %s329 = sor.u32 %s327, %s328
    %p330 = scmp.eq.s32.totalorder %s329, 0
    %s332 = sadd.s32 %s331, 1
    %s333 = scalar_select %p330, %s331, %s332
    %p336 = pneg %p330
    %p337 = scmp.eq.s32.totalorder %s18, 3
    %p338 = por %p336, %p337
    %p339 = scmp.ne.s32.totalorder %s331, %s334
    %p340 = scmp.eq.s32.totalorder %s18, 0
    %p341 = por %p339, %p340
    %p342 = scmp.ne.s32.totalorder %s331, %s334
    %p343 = scmp.eq.s32.totalorder %s23, 3
    %p344 = por %p342, %p343
    %p345 = scmp.ne.s32.totalorder %s334, %s335
    %p346 = scmp.eq.s32.totalorder %s23, 0
    %p347 = por %p345, %p346
    %p348 = scmp.ne.s32.totalorder %s334, %s335
    %p349 = scmp.eq.s32.totalorder %s24, 3
    %p350 = por %p348, %p349
    %p352 = scmp.ne.s32.totalorder %s335, %s351
    %p353 = scmp.eq.s32.totalorder %s24, 0
    %p354 = por %p352, %p353
    %p355 = scmp.le.s32.totalorder 1, %s18
    %p356 = scmp.lt.s32.totalorder %s18, 5
    %p357 = pnand %p355, %p356
    %p358 = pneg %p357
    // Predicated region
    $region9: #{_lambda_.1} parent=5 // pred_check
      _
    $region10: #{_lambda_.1} parent=5 // pred_check_branch
      %360 = sbr.rel (%p357) target = $region12
    $region11: #{_lambda_.1} parent=5 // pred_region
      %s361 = ssub.s32 %s18, 1
      // Predicated region
      $region13: #{_lambda_.1} parent=11 // pred_check
        %p362 = pneg %p151
      $region14: #{_lambda_.1} parent=11 // pred_check_branch
        %364 = sbr.rel (%p362) target = $region16
      $region15: #{_lambda_.1} parent=11 // pred_region
        _
      $region16: #{_lambda_.1} parent=11 // pred_fallthru
        _
      // Predicated region
      $region17: #{_lambda_.1} parent=11 // pred_check
        %p365 = pneg %p172
      $region18: #{_lambda_.1} parent=11 // pred_check_branch
        %367 = sbr.rel (%p365) target = $region20
      $region19: #{_lambda_.1} parent=11 // pred_region
        _
      $region20: #{_lambda_.1} parent=11 // pred_fallthru
        _
      // Predicated region
      $region21: #{_lambda_.1} parent=11 // pred_check
        %p368 = pneg %p193
      $region22: #{_lambda_.1} parent=11 // pred_check_branch
        %370 = sbr.rel (%p368) target = $region24
      $region23: #{_lambda_.1} parent=11 // pred_region
        _
      $region24: #{_lambda_.1} parent=11 // pred_fallthru
        _
      // Predicated region
      $region25: #{_lambda_.1} parent=11 // pred_check
        %p371 = pneg %p214
      $region26: #{_lambda_.1} parent=11 // pred_check_branch
        %373 = sbr.rel (%p371) target = $region28
      $region27: #{_lambda_.1} parent=11 // pred_region
        _
      $region28: #{_lambda_.1} parent=11 // pred_fallthru
        _
      // Predicated region
      $region29: #{_lambda_.1} parent=11 // pred_check
        %p374 = pneg %p235
      $region30: #{_lambda_.1} parent=11 // pred_check_branch
        %376 = sbr.rel (%p374) target = $region32
      $region31: #{_lambda_.1} parent=11 // pred_region
        _
      $region32: #{_lambda_.1} parent=11 // pred_fallthru
        _
      // Predicated region
      $region33: #{_lambda_.1} parent=11 // pred_check
        %p377 = pneg %p256
      $region34: #{_lambda_.1} parent=11 // pred_check_branch
        %379 = sbr.rel (%p377) target = $region36
      $region35: #{_lambda_.1} parent=11 // pred_region
        _
      $region36: #{_lambda_.1} parent=11 // pred_fallthru
        _
      // Predicated region
      $region37: #{_lambda_.1} parent=11 // pred_check
        %p380 = pneg %p277
      $region38: #{_lambda_.1} parent=11 // pred_check_branch
        %382 = sbr.rel (%p380) target = $region40
      $region39: #{_lambda_.1} parent=11 // pred_region
        _
      $region40: #{_lambda_.1} parent=11 // pred_fallthru
        _
      // Predicated region
      $region41: #{_lambda_.1} parent=11 // pred_check
        %p383 = pneg %p298
      $region42: #{_lambda_.1} parent=11 // pred_check_branch
        %385 = sbr.rel (%p383) target = $region44
      $region43: #{_lambda_.1} parent=11 // pred_region
        _
      $region44: #{_lambda_.1} parent=11 // pred_fallthru
        _
      // Predicated region
      $region45: #{_lambda_.1} parent=11 // pred_check
        %p386 = pneg %p319
      $region46: #{_lambda_.1} parent=11 // pred_check_branch
        %388 = sbr.rel (%p386) target = $region48
      $region47: #{_lambda_.1} parent=11 // pred_region
        _
      $region48: #{_lambda_.1} parent=11 // pred_fallthru
        _
    $region12: #{_lambda_.1} parent=5 // pred_fallthru
      _
    %p389 = scmp.lt.s32.totalorder %s18, 4
    // Predicated region
    $region49: #{_lambda_.1} parent=5 // pred_check
      %p390 = pneg %p389
    $region50: #{_lambda_.1} parent=5 // pred_check_branch
      %392 = sbr.rel (%p390) target = $region52
    $region51: #{_lambda_.1} parent=5 // pred_region
      // Predicated region
      $region53: #{_lambda_.1} parent=51 // pred_check
        %p393 = pneg %p52
      $region54: #{_lambda_.1} parent=51 // pred_check_branch
        %395 = sbr.rel (%p393) target = $region56
      $region55: #{_lambda_.1} parent=51 // pred_region
        %s396 = smul.u32 16, %s26
        %p397 = scmp.lt.s32.totalorder %s25, 1
        %s398 = scalar_select %p397, %s25, 1
        %p399 = scmp.lt.s32.totalorder %s396, 31
        %s400 = scalar_select %p399, %s396, 31
        %s401 = smul.addr %s398, 32
        %s402 = sadd.s32 %s400, %s401
        %s403 = smul.addr %s402, 8
        %s404 = scalar_lea.vmem %s0, %s403
        %s405 = smul.u32 16, %s26
      $region56: #{_lambda_.1} parent=51 // pred_fallthru
        _
      // Predicated region
      $region57: #{_lambda_.1} parent=51 // pred_check
        %p406 = pneg %p88
      $region58: #{_lambda_.1} parent=51 // pred_check_branch
        %408 = sbr.rel (%p406) target = $region60
      $region59: #{_lambda_.1} parent=51 // pred_region
        %s409 = smul.u32 %s26, 8
        %s410 = ssub.s32 %s409, 1
        %p411 = scmp.gt.s32.totalorder %s410, 0
        %s412 = scalar_select %p411, %s410, 0
        %s413 = smul.u32 2, %s412
        %p414 = scmp.lt.s32.totalorder %s25, 1
        %s415 = scalar_select %p414, %s25, 1
        %p416 = scmp.lt.s32.totalorder %s413, 31
        %s417 = scalar_select %p416, %s413, 31
        %s418 = smul.addr %s415, 32
        %s419 = sadd.s32 %s417, %s418
        %s420 = smul.addr %s419, 8
        %s421 = scalar_lea.vmem %s1, %s420
        %s422 = smul.u32 %s26, 8
        %s423 = ssub.s32 %s422, 1
        %p424 = scmp.gt.s32.totalorder %s423, 0
        %s425 = scalar_select %p424, %s423, 0
        %s426 = smul.u32 2, %s425
      $region60: #{_lambda_.1} parent=51 // pred_fallthru
        _
      // Predicated region
      $region61: #{_lambda_.1} parent=51 // pred_check
        %p427 = pneg %p124
      $region62: #{_lambda_.1} parent=51 // pred_check_branch
        %429 = sbr.rel (%p427) target = $region64
      $region63: #{_lambda_.1} parent=51 // pred_region
        %s430 = sadd.s32 %s26, 1
        %s431 = smul.u32 %s430, 8
        %p432 = scmp.lt.s32.totalorder %s431, 15
        %s433 = scalar_select %p432, %s431, 15
        %s434 = smul.u32 2, %s433
        %p435 = scmp.lt.s32.totalorder %s25, 1
        %s436 = scalar_select %p435, %s25, 1
        %p437 = scmp.lt.s32.totalorder %s434, 31
        %s438 = scalar_select %p437, %s434, 31
        %s439 = smul.addr %s436, 32
        %s440 = sadd.s32 %s438, %s439
        %s441 = smul.addr %s440, 8
        %s442 = scalar_lea.vmem %s2, %s441
        %s443 = sadd.s32 %s26, 1
        %s444 = smul.u32 %s443, 8
        %p445 = scmp.lt.s32.totalorder %s444, 15
        %s446 = scalar_select %p445, %s444, 15
        %s447 = smul.u32 2, %s446
      $region64: #{_lambda_.1} parent=51 // pred_fallthru
        _
    $region52: #{_lambda_.1} parent=5 // pred_fallthru
      _
    %p448 = scmp.le.s32.totalorder 1, %s18
    %p449 = scmp.lt.s32.totalorder %s18, 5
    %p450 = pnand %p448, %p449
    %p451 = pneg %p450
    // Predicated region
    $region65: #{_lambda_.1} parent=5 // pred_check
      _
    $region66: #{_lambda_.1} parent=5 // pred_check_branch
      %453 = sbr.rel (%p450) target = $region68
    $region67: #{_lambda_.1} parent=5 // pred_region
      %s454 = ssub.s32 %s18, 1
      %s455 = smul.u32 16, %s28
      %p456 = scmp.lt.s32.totalorder %s27, 1
      %s457 = scalar_select %p456, %s27, 1
      %p458 = scmp.lt.s32.totalorder %s455, 31
      %s459 = scalar_select %p458, %s455, 31
      %s460 = smul.addr %s457, 32
      %s461 = sadd.s32 %s459, %s460
      %s462 = smul.addr %s461, 8
      %s463 = scalar_lea.vmem %s0, %s462
      %p464 = pneg %p58
      %p465 = pneg %p55
      %s466 = smul.u32 %s28, 8
      %s467 = ssub.s32 %s466, 1
      %p468 = scmp.gt.s32.totalorder %s467, 0
      %s469 = scalar_select %p468, %s467, 0
      %s470 = smul.u32 2, %s469
      %p471 = scmp.lt.s32.totalorder %s27, 1
      %s472 = scalar_select %p471, %s27, 1
      %p473 = scmp.lt.s32.totalorder %s470, 31
      %s474 = scalar_select %p473, %s470, 31
      %s475 = smul.addr %s472, 32
      %s476 = sadd.s32 %s474, %s475
      %s477 = smul.addr %s476, 8
      %s478 = scalar_lea.vmem %s1, %s477
      %p479 = pneg %p94
      %p480 = pneg %p91
      %s481 = sadd.s32 %s28, 1
      %s482 = smul.u32 %s481, 8
      %p483 = scmp.lt.s32.totalorder %s482, 15
      %s484 = scalar_select %p483, %s482, 15
      %s485 = smul.u32 2, %s484
      %p486 = scmp.lt.s32.totalorder %s27, 1
      %s487 = scalar_select %p486, %s27, 1
      %p488 = scmp.lt.s32.totalorder %s485, 31
      %s489 = scalar_select %p488, %s485, 31
      %s490 = smul.addr %s487, 32
      %s491 = sadd.s32 %s489, %s490
      %s492 = smul.addr %s491, 8
      %s493 = scalar_lea.vmem %s2, %s492
      %p494 = pneg %p130
      %p495 = pneg %p127
      %p496 = pneg %p151
      %p497 = pneg %p148
      %p498 = pneg %p172
      %p499 = pneg %p169
      %p500 = pneg %p193
      %p501 = pneg %p190
      %p502 = pneg %p214
      %p503 = pneg %p211
      %p504 = pneg %p235
      %p505 = pneg %p232
      %p506 = pneg %p256
      %p507 = pneg %p253
      %p508 = pneg %p277
      %p509 = pneg %p274
      %p510 = pneg %p298
      %p511 = pneg %p295
      %p512 = pneg %p319
      %p513 = pneg %p316
      %p514 = pneg %p347
      %p515 = pneg %p344
      %s516 = smul.u32 16, %s28
      %p517 = scmp.lt.s32.totalorder %s27, 1
      %s518 = scalar_select %p517, %s27, 1
      %p519 = scmp.lt.s32.totalorder %s516, 31
      %s520 = scalar_select %p519, %s516, 31
      %s521 = smul.addr %s518, 32
      %s522 = sadd.s32 %s520, %s521
      %s523 = smul.addr %s522, 8
      %s524 = scalar_lea.vmem %s12, %s523
      %s525 = smul.u32 16, %s28
      %p526 = scmp.lt.s32.totalorder %s27, 1
      %s527 = scalar_select %p526, %s27, 1
      %p528 = scmp.lt.s32.totalorder %s525, 31
      %s529 = scalar_select %p528, %s525, 31
      %s530 = smul.addr %s527, 32
      %s531 = sadd.s32 %s529, %s530
      %s532 = smul.addr %s531, 8
      %s533 = scalar_lea.vmem %s0, %s532
      %s534 = smul.u32 16, %s28
      %s535 = smul.u32 %s28, 8
      %s536 = ssub.s32 %s535, 1
      %p537 = scmp.gt.s32.totalorder %s536, 0
      %s538 = scalar_select %p537, %s536, 0
      %s539 = smul.u32 2, %s538
      %p540 = scmp.lt.s32.totalorder %s27, 1
      %s541 = scalar_select %p540, %s27, 1
      %p542 = scmp.lt.s32.totalorder %s539, 31
      %s543 = scalar_select %p542, %s539, 31
      %s544 = smul.addr %s541, 32
      %s545 = sadd.s32 %s543, %s544
      %s546 = smul.addr %s545, 8
      %s547 = scalar_lea.vmem %s1, %s546
      %s548 = smul.u32 %s28, 8
      %s549 = ssub.s32 %s548, 1
      %p550 = scmp.gt.s32.totalorder %s549, 0
      %s551 = scalar_select %p550, %s549, 0
      %s552 = smul.u32 2, %s551
      %s553 = sadd.s32 %s28, 1
      %s554 = smul.u32 %s553, 8
      %p555 = scmp.lt.s32.totalorder %s554, 15
      %s556 = scalar_select %p555, %s554, 15
      %s557 = smul.u32 2, %s556
      %p558 = scmp.lt.s32.totalorder %s27, 1
      %s559 = scalar_select %p558, %s27, 1
      %p560 = scmp.lt.s32.totalorder %s557, 31
      %s561 = scalar_select %p560, %s557, 31
      %s562 = smul.addr %s559, 32
      %s563 = sadd.s32 %s561, %s562
      %s564 = smul.addr %s563, 8
      %s565 = scalar_lea.vmem %s2, %s564
      %s566 = sadd.s32 %s28, 1
      %s567 = smul.u32 %s566, 8
      %p568 = scmp.lt.s32.totalorder %s567, 15
      %s569 = scalar_select %p568, %s567, 15
      %s570 = smul.u32 2, %s569
      %s571 = smul.u32 16, %s28
      %p572 = scmp.lt.s32.totalorder %s27, 1
      %s573 = scalar_select %p572, %s27, 1
      %p574 = scmp.lt.s32.totalorder %s571, 31
      %s575 = scalar_select %p574, %s571, 31
      %s576 = smul.addr %s573, 32
      %s577 = sadd.s32 %s575, %s576
      %s578 = smul.addr %s577, 8
      %s579 = scalar_lea.vmem %s12, %s578
      %s580 = smul.u32 16, %s28
      %v582 = vld [vmem:[%s6] sm:$0x1]
      %v583 = vld [vmem:[%s7] sm:$0x1]
      %v584 = vld [vmem:[%s533] sm:$0xff]
      %v585 = vld [vmem:[%s533 + $0x8] sm:$0xff]
      %v586 = vld [vmem:[%s533 + $0x10] sm:$0xff]
      %v587 = vld [vmem:[%s533 + $0x18] sm:$0xff]
      %v588 = vld [vmem:[%s533 + $0x20] sm:$0xff]
      %v589 = vld [vmem:[%s533 + $0x28] sm:$0xff]
      %v590 = vld [vmem:[%s533 + $0x30] sm:$0xff]
      %v591 = vld [vmem:[%s533 + $0x38] sm:$0xff]
      %v592 = vld [vmem:[%s533 + $0x40] sm:$0xff]
      %v593 = vld [vmem:[%s533 + $0x48] sm:$0xff]
      %v594 = vld [vmem:[%s533 + $0x50] sm:$0xff]
      %v595 = vld [vmem:[%s533 + $0x58] sm:$0xff]
      %v596 = vld [vmem:[%s533 + $0x60] sm:$0xff]
      %v597 = vld [vmem:[%s533 + $0x68] sm:$0xff]
      %v598 = vld [vmem:[%s533 + $0x70] sm:$0xff]
      %v599 = vld [vmem:[%s533 + $0x78] sm:$0xff]
      %v600 = vpack.c.bf16 %v585, %v584
      %v601 = vpack.c.bf16 %v587, %v586
      %v602 = vpack.c.bf16 %v589, %v588
      %v603 = vpack.c.bf16 %v591, %v590
      %v604 = vpack.c.bf16 %v593, %v592
      %v605 = vpack.c.bf16 %v595, %v594
      %v606 = vpack.c.bf16 %v597, %v596
      %v607 = vpack.c.bf16 %v599, %v598
      %v608 = vld [vmem:[%s3] sm:$0x3]
      %vm609 = vcmask 31744
      %v611 = vsel %vm609, %v600, 0
      %v614 = vsel %vm609, %v601, 0
      %v617 = vsel %vm609, %v602, 0
      %v620 = vsel %vm609, %v603, 0
      %v623 = vsel %vm609, %v604, 0
      %v626 = vsel %vm609, %v605, 0
      %v629 = vsel %vm609, %v606, 0
      %v632 = vsel %vm609, %v607, 0
      %vm634 = vcmask 1041408
      %v636 = vsel %vm634, %v608, 0
      %638 = vmatpush.bf16.msra.mxu0 0
      %639 = vmatpush.bf16.msra.mxu0 0
      %640 = vmatpush.bf16.msra.mxu0 0
      %641 = vmatpush.bf16.msra.mxu0 0
      %642 = vmatpush.bf16.msra.mxu0 0
      %643 = vmatpush.bf16.msra.mxu0 0
      %644 = vmatpush.bf16.msra.mxu0 0
      %645 = vmatpush.bf16.msra.mxu0 %v636
      %646 = vmatmul.bf16.gmra.mxu0 %v611
      %v647 = vpop.f32.mrf.mxu0
      %v648 = vadd.f32 0.0, %v647
      %v649 = vpop.f32.mrf.mxu0
      %v650 = vadd.f32 0.0, %v649
      %651 = vmatmul.bf16.gmra.mxu0 %v614
      %v652 = vpop.f32.mrf.mxu0
      %v653 = vadd.f32 0.0, %v652
      %v654 = vpop.f32.mrf.mxu0
      %v655 = vadd.f32 0.0, %v654
      %656 = vmatmul.bf16.gmra.mxu0 %v617
      %v657 = vpop.f32.mrf.mxu0
      %v658 = vadd.f32 0.0, %v657
      %v659 = vpop.f32.mrf.mxu0
      %v660 = vadd.f32 0.0, %v659
      %661 = vmatmul.bf16.gmra.mxu0 %v620
      %v662 = vpop.f32.mrf.mxu0
      %v663 = vadd.f32 0.0, %v662
      %v664 = vpop.f32.mrf.mxu0
      %v665 = vadd.f32 0.0, %v664
      %666 = vmatmul.bf16.gmra.mxu0 %v623
      %v667 = vpop.f32.mrf.mxu0
      %v668 = vadd.f32 0.0, %v667
      %v669 = vpop.f32.mrf.mxu0
      %v670 = vadd.f32 0.0, %v669
      %671 = vmatmul.bf16.gmra.mxu0 %v626
      %v672 = vpop.f32.mrf.mxu0
      %v673 = vadd.f32 0.0, %v672
      %v674 = vpop.f32.mrf.mxu0
      %v675 = vadd.f32 0.0, %v674
      %676 = vmatmul.bf16.gmra.mxu0 %v629
      %v677 = vpop.f32.mrf.mxu0
      %v678 = vadd.f32 0.0, %v677
      %v679 = vpop.f32.mrf.mxu0
      %v680 = vadd.f32 0.0, %v679
      %681 = vmatmul.bf16.gmra.mxu0 %v632
      %v682 = vpop.f32.mrf.mxu0
      %v683 = vadd.f32 0.0, %v682
      %v684 = vpop.f32.mrf.mxu0
      %v685 = vadd.f32 0.0, %v684
      %686 = vdwg.mxu0
      %v688 = vperm.slane %v582, 0
      %v690 = vmul.f32 %v648, %v688
      %v691 = vmul.f32 %v650, %v688
      %v692 = vmul.f32 %v653, %v688
      %v693 = vmul.f32 %v655, %v688
      %v694 = vmul.f32 %v658, %v688
      %v695 = vmul.f32 %v660, %v688
      %v696 = vmul.f32 %v663, %v688
      %v697 = vmul.f32 %v665, %v688
      %v698 = vmul.f32 %v668, %v688
      %v699 = vmul.f32 %v670, %v688
      %v700 = vmul.f32 %v673, %v688
      %v701 = vmul.f32 %v675, %v688
      %v702 = vmul.f32 %v678, %v688
      %v703 = vmul.f32 %v680, %v688
      %v704 = vmul.f32 %v683, %v688
      %v705 = vmul.f32 %v685, %v688
      %v707 = vperm.slane %v583, 0
      %v709 = vadd.f32 %v690, %v707
      %v710 = vadd.f32 %v691, %v707
      %v711 = vadd.f32 %v692, %v707
      %v712 = vadd.f32 %v693, %v707
      %v713 = vadd.f32 %v694, %v707
      %v714 = vadd.f32 %v695, %v707
      %v715 = vadd.f32 %v696, %v707
      %v716 = vadd.f32 %v697, %v707
      %v717 = vadd.f32 %v698, %v707
      %v718 = vadd.f32 %v699, %v707
      %v719 = vadd.f32 %v700, %v707
      %v720 = vadd.f32 %v701, %v707
      %v721 = vadd.f32 %v702, %v707
      %v722 = vadd.f32 %v703, %v707
      %v723 = vadd.f32 %v704, %v707
      %v724 = vadd.f32 %v705, %v707
      %v725 = vmax.f32 %v709, 0.0
      %v726 = vmax.f32 %v710, 0.0
      %v727 = vmax.f32 %v711, 0.0
      %v728 = vmax.f32 %v712, 0.0
      %v729 = vmax.f32 %v713, 0.0
      %v730 = vmax.f32 %v714, 0.0
      %v731 = vmax.f32 %v715, 0.0
      %v732 = vmax.f32 %v716, 0.0
      %v733 = vmax.f32 %v717, 0.0
      %v734 = vmax.f32 %v718, 0.0
      %v735 = vmax.f32 %v719, 0.0
      %v736 = vmax.f32 %v720, 0.0
      %v737 = vmax.f32 %v721, 0.0
      %v738 = vmax.f32 %v722, 0.0
      %v739 = vmax.f32 %v723, 0.0
      %v740 = vmax.f32 %v724, 0.0
      %v741 = vpack.c.bf16 %v725, %v725
      %v742 = vpack.c.bf16 %v726, %v726
      %v743 = vpack.c.bf16 %v727, %v727
      %v744 = vpack.c.bf16 %v728, %v728
      %v745 = vpack.c.bf16 %v729, %v729
      %v746 = vpack.c.bf16 %v730, %v730
      %v747 = vpack.c.bf16 %v731, %v731
      %v748 = vpack.c.bf16 %v732, %v732
      %v749 = vpack.c.bf16 %v733, %v733
      %v750 = vpack.c.bf16 %v734, %v734
      %v751 = vpack.c.bf16 %v735, %v735
      %v752 = vpack.c.bf16 %v736, %v736
      %v753 = vpack.c.bf16 %v737, %v737
      %v754 = vpack.c.bf16 %v738, %v738
      %v755 = vpack.c.bf16 %v739, %v739
      %v756 = vpack.c.bf16 %v740, %v740
      %vm757 = vcmask 27648
      %758 = vst.msk [vmem:[#allocation2 + $0x8] sm:$0xf] %vm757, %v741
      %759 = vst.msk [vmem:[#allocation2 + $0xc] sm:$0xf] %vm757, %v742
      %760 = vst.msk [vmem:[#allocation2 + $0x10] sm:$0xf] %vm757, %v743
      %761 = vst.msk [vmem:[#allocation2 + $0x14] sm:$0xf] %vm757, %v744
      %762 = vst.msk [vmem:[#allocation2 + $0x18] sm:$0xf] %vm757, %v745
      %763 = vst.msk [vmem:[#allocation2 + $0x1c] sm:$0xf] %vm757, %v746
      %764 = vst.msk [vmem:[#allocation2 + $0x20] sm:$0xf] %vm757, %v747
      %765 = vst.msk [vmem:[#allocation2 + $0x24] sm:$0xf] %vm757, %v748
      %766 = vst.msk [vmem:[#allocation2 + $0x28] sm:$0xf] %vm757, %v749
      %767 = vst.msk [vmem:[#allocation2 + $0x2c] sm:$0xf] %vm757, %v750
      %768 = vst.msk [vmem:[#allocation2 + $0x30] sm:$0xf] %vm757, %v751
      %769 = vst.msk [vmem:[#allocation2 + $0x34] sm:$0xf] %vm757, %v752
      %770 = vst.msk [vmem:[#allocation2 + $0x38] sm:$0xf] %vm757, %v753
      %771 = vst.msk [vmem:[#allocation2 + $0x3c] sm:$0xf] %vm757, %v754
      %772 = vst.msk [vmem:[#allocation2 + $0x40] sm:$0xf] %vm757, %v755
      %773 = vst.msk [vmem:[#allocation2 + $0x44] sm:$0xf] %vm757, %v756
      %p774 = scmp.eq.s32.totalorder %s28, 0
      // Predicated region
      $region69: #{_lambda_.1} parent=67 // pred_check
        %p775 = pneg %p774
      $region70: #{_lambda_.1} parent=67 // pred_check_branch
        %777 = sbr.rel (%p775) target = $region72
      $region71: #{_lambda_.1} parent=67 // pred_region
        %778 = vst.msk [vmem:[#allocation2] sm:$0xf] %vm757, 0
        %779 = vst.msk [vmem:[#allocation2 + $0x4] sm:$0xf] %vm757, 0
      $region72: #{_lambda_.1} parent=67 // pred_fallthru
        _
      %p780 = scmp.gt.s32.totalorder %s28, 0
      // Predicated region
      $region73: #{_lambda_.1} parent=67 // pred_check
        %p781 = pneg %p780
      $region74: #{_lambda_.1} parent=67 // pred_check_branch
        %783 = sbr.rel (%p781) target = $region76
      $region75: #{_lambda_.1} parent=67 // pred_region
        %v784 = vld [vmem:[%s547] sm:$0xff]
        %v785 = vld [vmem:[%s547 + $0x8] sm:$0xff]
        %v786 = vpack.c.bf16 %v785, %v784
        %v787 = vld [vmem:[%s3] sm:$0x3]
        %v789 = vsel %vm609, %v786, 0
        %v792 = vsel %vm634, %v787, 0
        %794 = vmatpush.bf16.msra.mxu0 0
        %795 = vmatpush.bf16.msra.mxu0 0
        %796 = vmatpush.bf16.msra.mxu0 0
        %797 = vmatpush.bf16.msra.mxu0 0
        %798 = vmatpush.bf16.msra.mxu0 0
        %799 = vmatpush.bf16.msra.mxu0 0
        %800 = vmatpush.bf16.msra.mxu0 0
        %801 = vmatpush.bf16.msra.mxu0 %v792
        %802 = vmatmul.bf16.gmra.mxu0 %v789
        %v803 = vpop.f32.mrf.mxu0
        %v804 = vadd.f32 0.0, %v803
        %v805 = vpop.f32.mrf.mxu0
        %v806 = vadd.f32 0.0, %v805
        %807 = vdwg.mxu0
        %v808 = vmul.f32 %v804, %v688
        %v809 = vmul.f32 %v806, %v688
        %v810 = vadd.f32 %v808, %v707
        %v811 = vadd.f32 %v809, %v707
        %v812 = vmax.f32 %v810, 0.0
        %v813 = vmax.f32 %v811, 0.0
        %v814 = vpack.c.bf16 %v812, %v812
        %v815 = vpack.c.bf16 %v813, %v813
        %816 = vst.msk [vmem:[#allocation2] sm:$0xf] %vm757, %v814
        %817 = vst.msk [vmem:[#allocation2 + $0x4] sm:$0xf] %vm757, %v815
      $region76: #{_lambda_.1} parent=67 // pred_fallthru
        _
      %p818 = scmp.eq.s32.totalorder %s28, 1
      // Predicated region
      $region77: #{_lambda_.1} parent=67 // pred_check
        %p819 = pneg %p818
      $region78: #{_lambda_.1} parent=67 // pred_check_branch
        %821 = sbr.rel (%p819) target = $region80
      $region79: #{_lambda_.1} parent=67 // pred_region
        %822 = vst.msk [vmem:[#allocation2 + $0x48] sm:$0xf] %vm757, 0
        %823 = vst.msk [vmem:[#allocation2 + $0x4c] sm:$0xf] %vm757, 0
      $region80: #{_lambda_.1} parent=67 // pred_fallthru
        _
      %p824 = scmp.lt.s32.totalorder %s28, 1
      // Predicated region
      $region81: #{_lambda_.1} parent=67 // pred_check
        %p825 = pneg %p824
      $region82: #{_lambda_.1} parent=67 // pred_check_branch
        %827 = sbr.rel (%p825) target = $region84
      $region83: #{_lambda_.1} parent=67 // pred_region
        %v828 = vld [vmem:[%s565] sm:$0xff]
        %v829 = vld [vmem:[%s565 + $0x8] sm:$0xff]
        %v830 = vpack.c.bf16 %v829, %v828
        %v831 = vld [vmem:[%s3] sm:$0x3]
        %v833 = vsel %vm609, %v830, 0
        %v836 = vsel %vm634, %v831, 0
        %838 = vmatpush.bf16.msra.mxu0 0
        %839 = vmatpush.bf16.msra.mxu0 0
        %840 = vmatpush.bf16.msra.mxu0 0
        %841 = vmatpush.bf16.msra.mxu0 0
        %842 = vmatpush.bf16.msra.mxu0 0
        %843 = vmatpush.bf16.msra.mxu0 0
        %844 = vmatpush.bf16.msra.mxu0 0
        %845 = vmatpush.bf16.msra.mxu0 %v836
        %846 = vmatmul.bf16.gmra.mxu0 %v833
        %v847 = vpop.f32.mrf.mxu0
        %v848 = vadd.f32 0.0, %v847
        %v849 = vpop.f32.mrf.mxu0
        %v850 = vadd.f32 0.0, %v849
        %851 = vdwg.mxu0
        %v852 = vmul.f32 %v848, %v688
        %v853 = vmul.f32 %v850, %v688
        %v854 = vadd.f32 %v852, %v707
        %v855 = vadd.f32 %v853, %v707
        %v856 = vmax.f32 %v854, 0.0
        %v857 = vmax.f32 %v855, 0.0
        %v858 = vpack.c.bf16 %v856, %v856
        %v859 = vpack.c.bf16 %v857, %v857
        %860 = vst.msk [vmem:[#allocation2 + $0x48] sm:$0xf] %vm757, %v858
        %861 = vst.msk [vmem:[#allocation2 + $0x4c] sm:$0xf] %vm757, %v859
      $region84: #{_lambda_.1} parent=67 // pred_fallthru
        _
      %v862 = vlaneseq
      %v863 = vshrl.u32 %v862, 7
      %v864 = vadd.s32 %v863, 8
      %v865 = vadd.s32 %v863, 16
      %v866 = vadd.s32 %v863, 24
      %v867 = vadd.s32 %v863, 32
      %v868 = vadd.s32 %v863, 40
      %v869 = vadd.s32 %v863, 48
      %v870 = vadd.s32 %v863, 56
      %v871 = vadd.s32 %v863, 64
      %v872 = vadd.s32 %v863, 72
      %v873 = vadd.s32 %v863, 80
      %v874 = vadd.s32 %v863, 88
      %v875 = vadd.s32 %v863, 96
      %v876 = vadd.s32 %v863, 104
      %v877 = vadd.s32 %v863, 112
      %v878 = vadd.s32 %v863, 120
      %vm879 = vcmp.lt.s32.totalorder %v863, 0
      %v880 = vsub.s32 0, %v863
      %v881 = vsel %vm879, %v880, %v863
      %v882 = vshrl.u32 %v881, 4
      %v883 = vand.u32 %v881, 15
      %v884 = vsub.s32 0, %v883
      %v885 = vsel %vm879, %v884, %v883
      %vm886 = vcmp.lt.s32.totalorder %v864, 0
      %v887 = vsub.s32 0, %v864
      %v888 = vsel %vm886, %v887, %v864
      %v889 = vshrl.u32 %v888, 4
      %v890 = vand.u32 %v888, 15
      %v891 = vsub.s32 0, %v890
      %v892 = vsel %vm886, %v891, %v890
      %vm893 = vcmp.lt.s32.totalorder %v865, 0
      %v894 = vsub.s32 0, %v865
      %v895 = vsel %vm893, %v894, %v865
      %v896 = vshrl.u32 %v895, 4
      %v897 = vand.u32 %v895, 15
      %v898 = vsub.s32 0, %v897
      %v899 = vsel %vm893, %v898, %v897
      %vm900 = vcmp.lt.s32.totalorder %v866, 0
      %v901 = vsub.s32 0, %v866
      %v902 = vsel %vm900, %v901, %v866
      %v903 = vshrl.u32 %v902, 4
      %v904 = vand.u32 %v902, 15
      %v905 = vsub.s32 0, %v904
      %v906 = vsel %vm900, %v905, %v904
      %vm907 = vcmp.lt.s32.totalorder %v867, 0
      %v908 = vsub.s32 0, %v867
      %v909 = vsel %vm907, %v908, %v867
      %v910 = vshrl.u32 %v909, 4
      %v911 = vand.u32 %v909, 15
      %v912 = vsub.s32 0, %v911
      %v913 = vsel %vm907, %v912, %v911
      %vm914 = vcmp.lt.s32.totalorder %v868, 0
      %v915 = vsub.s32 0, %v868
      %v916 = vsel %vm914, %v915, %v868
      %v917 = vshrl.u32 %v916, 4
      %v918 = vand.u32 %v916, 15
      %v919 = vsub.s32 0, %v918
      %v920 = vsel %vm914, %v919, %v918
      %vm921 = vcmp.lt.s32.totalorder %v869, 0
      %v922 = vsub.s32 0, %v869
      %v923 = vsel %vm921, %v922, %v869
      %v924 = vshrl.u32 %v923, 4
      %v925 = vand.u32 %v923, 15
      %v926 = vsub.s32 0, %v925
      %v927 = vsel %vm921, %v926, %v925
      %vm928 = vcmp.lt.s32.totalorder %v870, 0
      %v929 = vsub.s32 0, %v870
      %v930 = vsel %vm928, %v929, %v870
      %v931 = vshrl.u32 %v930, 4
      %v932 = vand.u32 %v930, 15
      %v933 = vsub.s32 0, %v932
      %v934 = vsel %vm928, %v933, %v932
      %vm935 = vcmp.lt.s32.totalorder %v871, 0
      %v936 = vsub.s32 0, %v871
      %v937 = vsel %vm935, %v936, %v871
      %v938 = vshrl.u32 %v937, 4
      %v939 = vand.u32 %v937, 15
      %v940 = vsub.s32 0, %v939
      %v941 = vsel %vm935, %v940, %v939
      %vm942 = vcmp.lt.s32.totalorder %v872, 0
      %v943 = vsub.s32 0, %v872
      %v944 = vsel %vm942, %v943, %v872
      %v945 = vshrl.u32 %v944, 4
      %v946 = vand.u32 %v944, 15
      %v947 = vsub.s32 0, %v946
      %v948 = vsel %vm942, %v947, %v946
      %vm949 = vcmp.lt.s32.totalorder %v873, 0
      %v950 = vsub.s32 0, %v873
      %v951 = vsel %vm949, %v950, %v873
      %v952 = vshrl.u32 %v951, 4
      %v953 = vand.u32 %v951, 15
      %v954 = vsub.s32 0, %v953
      %v955 = vsel %vm949, %v954, %v953
      %vm956 = vcmp.lt.s32.totalorder %v874, 0
      %v957 = vsub.s32 0, %v874
      %v958 = vsel %vm956, %v957, %v874
      %v959 = vshrl.u32 %v958, 4
      %v960 = vand.u32 %v958, 15
      %v961 = vsub.s32 0, %v960
      %v962 = vsel %vm956, %v961, %v960
      %vm963 = vcmp.lt.s32.totalorder %v875, 0
      %v964 = vsub.s32 0, %v875
      %v965 = vsel %vm963, %v964, %v875
      %v966 = vshrl.u32 %v965, 4
      %v967 = vand.u32 %v965, 15
      %v968 = vsub.s32 0, %v967
      %v969 = vsel %vm963, %v968, %v967
      %vm970 = vcmp.lt.s32.totalorder %v876, 0
      %v971 = vsub.s32 0, %v876
      %v972 = vsel %vm970, %v971, %v876
      %v973 = vshrl.u32 %v972, 4
      %v974 = vand.u32 %v972, 15
      %v975 = vsub.s32 0, %v974
      %v976 = vsel %vm970, %v975, %v974
      %vm977 = vcmp.lt.s32.totalorder %v877, 0
      %v978 = vsub.s32 0, %v877
      %v979 = vsel %vm977, %v978, %v877
      %v980 = vshrl.u32 %v979, 4
      %v981 = vand.u32 %v979, 15
      %v982 = vsub.s32 0, %v981
      %v983 = vsel %vm977, %v982, %v981
      %vm984 = vcmp.lt.s32.totalorder %v878, 0
      %v985 = vsub.s32 0, %v878
      %v986 = vsel %vm984, %v985, %v878
      %v987 = vshrl.u32 %v986, 4
      %v988 = vand.u32 %v986, 15
      %v989 = vsub.s32 0, %v988
      %v990 = vsel %vm984, %v989, %v988
      %vm991 = vcmp.ne.s32.totalorder %v885, 0
      %vm992 = vcmp.ne.s32.totalorder %v892, 0
      %vm993 = vcmp.ne.s32.totalorder %v899, 0
      %vm994 = vcmp.ne.s32.totalorder %v906, 0
      %vm995 = vcmp.ne.s32.totalorder %v913, 0
      %vm996 = vcmp.ne.s32.totalorder %v920, 0
      %vm997 = vcmp.ne.s32.totalorder %v927, 0
      %vm998 = vcmp.ne.s32.totalorder %v934, 0
      %vm999 = vcmp.ne.s32.totalorder %v941, 0
      %vm1000 = vcmp.ne.s32.totalorder %v948, 0
      %vm1001 = vcmp.ne.s32.totalorder %v955, 0
      %vm1002 = vcmp.ne.s32.totalorder %v962, 0
      %vm1003 = vcmp.ne.s32.totalorder %v969, 0
      %vm1004 = vcmp.ne.s32.totalorder %v976, 0
      %vm1005 = vcmp.ne.s32.totalorder %v983, 0
      %vm1006 = vcmp.ne.s32.totalorder %v990, 0
      %vm1007 = vcmp.lt.s32.totalorder %v885, 0
      %vm1008 = vcmp.lt.s32.totalorder %v892, 0
      %vm1009 = vcmp.lt.s32.totalorder %v899, 0
      %vm1010 = vcmp.lt.s32.totalorder %v906, 0
      %vm1011 = vcmp.lt.s32.totalorder %v913, 0
      %vm1012 = vcmp.lt.s32.totalorder %v920, 0
      %vm1013 = vcmp.lt.s32.totalorder %v927, 0
      %vm1014 = vcmp.lt.s32.totalorder %v934, 0
      %vm1015 = vcmp.lt.s32.totalorder %v941, 0
      %vm1016 = vcmp.lt.s32.totalorder %v948, 0
      %vm1017 = vcmp.lt.s32.totalorder %v955, 0
      %vm1018 = vcmp.lt.s32.totalorder %v962, 0
      %vm1019 = vcmp.lt.s32.totalorder %v969, 0
      %vm1020 = vcmp.lt.s32.totalorder %v976, 0
      %vm1021 = vcmp.lt.s32.totalorder %v983, 0
      %vm1022 = vcmp.lt.s32.totalorder %v990, 0
      %vm1023 = vmand %vm1007, %vm991
      %vm1024 = vmand %vm1008, %vm992
      %vm1025 = vmand %vm1009, %vm993
      %vm1026 = vmand %vm1010, %vm994
      %vm1027 = vmand %vm1011, %vm995
      %vm1028 = vmand %vm1012, %vm996
      %vm1029 = vmand %vm1013, %vm997
      %vm1030 = vmand %vm1014, %vm998
      %vm1031 = vmand %vm1015, %vm999
      %vm1032 = vmand %vm1016, %vm1000
      %vm1033 = vmand %vm1017, %vm1001
      %vm1034 = vmand %vm1018, %vm1002
      %vm1035 = vmand %vm1019, %vm1003
      %vm1036 = vmand %vm1020, %vm1004
      %vm1037 = vmand %vm1021, %vm1005
      %vm1038 = vmand %vm1022, %vm1006
      %v1039 = vadd.s32 %v885, 16
      %v1040 = vadd.s32 %v892, 16
      %v1041 = vadd.s32 %v899, 16
      %v1042 = vadd.s32 %v906, 16
      %v1043 = vadd.s32 %v913, 16
      %v1044 = vadd.s32 %v920, 16
      %v1045 = vadd.s32 %v927, 16
      %v1046 = vadd.s32 %v934, 16
      %v1047 = vadd.s32 %v941, 16
      %v1048 = vadd.s32 %v948, 16
      %v1049 = vadd.s32 %v955, 16
      %v1050 = vadd.s32 %v962, 16
      %v1051 = vadd.s32 %v969, 16
      %v1052 = vadd.s32 %v976, 16
      %v1053 = vadd.s32 %v983, 16
      %v1054 = vadd.s32 %v990, 16
      %v1055 = vsel %vm1023, %v1039, %v885
      %v1056 = vsel %vm1024, %v1040, %v892
      %v1057 = vsel %vm1025, %v1041, %v899
      %v1058 = vsel %vm1026, %v1042, %v906
      %v1059 = vsel %vm1027, %v1043, %v913
      %v1060 = vsel %vm1028, %v1044, %v920
      %v1061 = vsel %vm1029, %v1045, %v927
      %v1062 = vsel %vm1030, %v1046, %v934
      %v1063 = vsel %vm1031, %v1047, %v941
      %v1064 = vsel %vm1032, %v1048, %v948
      %v1065 = vsel %vm1033, %v1049, %v955
      %v1066 = vsel %vm1034, %v1050, %v962
      %v1067 = vsel %vm1035, %v1051, %v969
      %v1068 = vsel %vm1036, %v1052, %v976
      %v1069 = vsel %vm1037, %v1053, %v983
      %v1070 = vsel %vm1038, %v1054, %v990
      %vm1071 = vcmp.ne.s32.totalorder %v1055, 0
      %vm1072 = vcmp.ne.s32.totalorder %v1056, 0
      %vm1073 = vcmp.ne.s32.totalorder %v1057, 0
      %vm1074 = vcmp.ne.s32.totalorder %v1058, 0
      %vm1075 = vcmp.ne.s32.totalorder %v1059, 0
      %vm1076 = vcmp.ne.s32.totalorder %v1060, 0
      %vm1077 = vcmp.ne.s32.totalorder %v1061, 0
      %vm1078 = vcmp.ne.s32.totalorder %v1062, 0
      %vm1079 = vcmp.ne.s32.totalorder %v1063, 0
      %vm1080 = vcmp.ne.s32.totalorder %v1064, 0
      %vm1081 = vcmp.ne.s32.totalorder %v1065, 0
      %vm1082 = vcmp.ne.s32.totalorder %v1066, 0
      %vm1083 = vcmp.ne.s32.totalorder %v1067, 0
      %vm1084 = vcmp.ne.s32.totalorder %v1068, 0
      %vm1085 = vcmp.ne.s32.totalorder %v1069, 0
      %vm1086 = vcmp.ne.s32.totalorder %v1070, 0
      %v1087 = vsel %vm1071, 1, 0
      %v1088 = vsel %vm1072, 1, 0
      %v1089 = vsel %vm1073, 1, 0
      %v1090 = vsel %vm1074, 1, 0
      %v1091 = vsel %vm1075, 1, 0
      %v1092 = vsel %vm1076, 1, 0
      %v1093 = vsel %vm1077, 1, 0
      %v1094 = vsel %vm1078, 1, 0
      %v1095 = vsel %vm1079, 1, 0
      %v1096 = vsel %vm1080, 1, 0
      %v1097 = vsel %vm1081, 1, 0
      %v1098 = vsel %vm1082, 1, 0
      %v1099 = vsel %vm1083, 1, 0
      %v1100 = vsel %vm1084, 1, 0
      %v1101 = vsel %vm1085, 1, 0
      %v1102 = vsel %vm1086, 1, 0
      %v1103 = vcvt.s32.f32 %v1087
      %v1104 = vcvt.s32.f32 %v1088
      %v1105 = vcvt.s32.f32 %v1089
      %v1106 = vcvt.s32.f32 %v1090
      %v1107 = vcvt.s32.f32 %v1091
      %v1108 = vcvt.s32.f32 %v1092
      %v1109 = vcvt.s32.f32 %v1093
      %v1110 = vcvt.s32.f32 %v1094
      %v1111 = vcvt.s32.f32 %v1095
      %v1112 = vcvt.s32.f32 %v1096
      %v1113 = vcvt.s32.f32 %v1097
      %v1114 = vcvt.s32.f32 %v1098
      %v1115 = vcvt.s32.f32 %v1099
      %v1116 = vcvt.s32.f32 %v1100
      %v1117 = vcvt.s32.f32 %v1101
      %v1118 = vcvt.s32.f32 %v1102
      %vm1119 = vcmp.ne.s32.totalorder %v1055, 15
      %vm1120 = vcmp.ne.s32.totalorder %v1056, 15
      %vm1121 = vcmp.ne.s32.totalorder %v1057, 15
      %vm1122 = vcmp.ne.s32.totalorder %v1058, 15
      %vm1123 = vcmp.ne.s32.totalorder %v1059, 15
      %vm1124 = vcmp.ne.s32.totalorder %v1060, 15
      %vm1125 = vcmp.ne.s32.totalorder %v1061, 15
      %vm1126 = vcmp.ne.s32.totalorder %v1062, 15
      %vm1127 = vcmp.ne.s32.totalorder %v1063, 15
      %vm1128 = vcmp.ne.s32.totalorder %v1064, 15
      %vm1129 = vcmp.ne.s32.totalorder %v1065, 15
      %vm1130 = vcmp.ne.s32.totalorder %v1066, 15
      %vm1131 = vcmp.ne.s32.totalorder %v1067, 15
      %vm1132 = vcmp.ne.s32.totalorder %v1068, 15
      %vm1133 = vcmp.ne.s32.totalorder %v1069, 15
      %vm1134 = vcmp.ne.s32.totalorder %v1070, 15
      %v1135 = vsel %vm1119, 1, 0
      %v1136 = vsel %vm1120, 1, 0
      %v1137 = vsel %vm1121, 1, 0
      %v1138 = vsel %vm1122, 1, 0
      %v1139 = vsel %vm1123, 1, 0
      %v1140 = vsel %vm1124, 1, 0
      %v1141 = vsel %vm1125, 1, 0
      %v1142 = vsel %vm1126, 1, 0
      %v1143 = vsel %vm1127, 1, 0
      %v1144 = vsel %vm1128, 1, 0
      %v1145 = vsel %vm1129, 1, 0
      %v1146 = vsel %vm1130, 1, 0
      %v1147 = vsel %vm1131, 1, 0
      %v1148 = vsel %vm1132, 1, 0
      %v1149 = vsel %vm1133, 1, 0
      %v1150 = vsel %vm1134, 1, 0
      %v1151 = vcvt.s32.f32 %v1135
      %v1152 = vcvt.s32.f32 %v1136
      %v1153 = vcvt.s32.f32 %v1137
      %v1154 = vcvt.s32.f32 %v1138
      %v1155 = vcvt.s32.f32 %v1139
      %v1156 = vcvt.s32.f32 %v1140
      %v1157 = vcvt.s32.f32 %v1141
      %v1158 = vcvt.s32.f32 %v1142
      %v1159 = vcvt.s32.f32 %v1143
      %v1160 = vcvt.s32.f32 %v1144
      %v1161 = vcvt.s32.f32 %v1145
      %v1162 = vcvt.s32.f32 %v1146
      %v1163 = vcvt.s32.f32 %v1147
      %v1164 = vcvt.s32.f32 %v1148
      %v1165 = vcvt.s32.f32 %v1149
      %v1166 = vcvt.s32.f32 %v1150
      %1167 = vst.msk [vmem:[#allocation3] sm:$0xff] %vm609, 0.0
      %s1168 = scalar_lea.vmem [#allocation3], 144
      %1169 = vst.msk [vmem:[%s1168 + $0x88] sm:$0xff] %vm609, 0.0
      %v1170 = vld [vmem:[#allocation2] sm:$0xf]
      %v1171 = vld [vmem:[#allocation2 + $0x4] sm:$0xf]
      %v1172 = vld [vmem:[#allocation2 + $0x8] sm:$0xf]
      %v1173 = vld [vmem:[#allocation2 + $0xc] sm:$0xf]
      %v1174 = vld [vmem:[#allocation2 + $0x10] sm:$0xf]
      %v1175 = vld [vmem:[#allocation2 + $0x14] sm:$0xf]
      %v1176 = vld [vmem:[#allocation2 + $0x18] sm:$0xf]
      %v1177 = vld [vmem:[#allocation2 + $0x1c] sm:$0xf]
      %v1178 = vld [vmem:[#allocation2 + $0x20] sm:$0xf]
      %v1179 = vld [vmem:[#allocation2 + $0x24] sm:$0xf]
      %v1180 = vld [vmem:[#allocation2 + $0x28] sm:$0xf]
      %v1181 = vld [vmem:[#allocation2 + $0x2c] sm:$0xf]
      %v1182 = vld [vmem:[#allocation2 + $0x30] sm:$0xf]
      %v1183 = vld [vmem:[#allocation2 + $0x34] sm:$0xf]
      %v1184 = vld [vmem:[#allocation2 + $0x38] sm:$0xf]
      %v1185 = vld [vmem:[#allocation2 + $0x3c] sm:$0xf]
      %v1186 = vld [vmem:[%s4] sm:$0x3]
      %v1203 = vunpack.c.l.b16 %v1170
      %v1204 = vunpack.c.l.b16 %v1171
      %v1205 = vunpack.c.l.b16 %v1172
      %v1206 = vunpack.c.l.b16 %v1173
      %v1207 = vunpack.c.l.b16 %v1174
      %v1208 = vunpack.c.l.b16 %v1175
      %v1209 = vunpack.c.l.b16 %v1176
      %v1210 = vunpack.c.l.b16 %v1177
      %v1211 = vunpack.c.l.b16 %v1178
      %v1212 = vunpack.c.l.b16 %v1179
      %v1213 = vunpack.c.l.b16 %v1180
      %v1214 = vunpack.c.l.b16 %v1181
      %v1215 = vunpack.c.l.b16 %v1182
      %v1216 = vunpack.c.l.b16 %v1183
      %v1217 = vunpack.c.l.b16 %v1184
      %v1218 = vunpack.c.l.b16 %v1185
      %v1219 = vpack.c.b16 %v1204, %v1203
      %v1220 = vpack.c.b16 %v1206, %v1205
      %v1221 = vpack.c.b16 %v1208, %v1207
      %v1222 = vpack.c.b16 %v1210, %v1209
      %v1223 = vpack.c.b16 %v1212, %v1211
      %v1224 = vpack.c.b16 %v1214, %v1213
      %v1225 = vpack.c.b16 %v1216, %v1215
      %v1226 = vpack.c.b16 %v1218, %v1217
      %v1228 = vsel %vm609, %v1219, 0
      %v1231 = vsel %vm609, %v1220, 0
      %v1234 = vsel %vm609, %v1221, 0
      %v1237 = vsel %vm609, %v1222, 0
      %v1240 = vsel %vm609, %v1223, 0
      %v1243 = vsel %vm609, %v1224, 0
      %v1246 = vsel %vm609, %v1225, 0
      %v1249 = vsel %vm609, %v1226, 0
      %v1252 = vsel %vm634, %v1186, 0
      %1254 = vmatpush.bf16.msra.mxu0 0
      %1255 = vmatpush.bf16.msra.mxu0 0
      %1256 = vmatpush.bf16.msra.mxu0 0
      %1257 = vmatpush.bf16.msra.mxu0 0
      %1258 = vmatpush.bf16.msra.mxu0 0
      %1259 = vmatpush.bf16.msra.mxu0 0
      %1260 = vmatpush.bf16.msra.mxu0 0
      %1261 = vmatpush.bf16.msra.mxu0 %v1252
      %1262 = vmatmul.bf16.gmra.mxu0 %v1228
      %v1263 = vpop.f32.mrf.mxu0
      %v1264 = vadd.f32 0.0, %v1263
      %v1265 = vpop.f32.mrf.mxu0
      %v1266 = vadd.f32 0.0, %v1265
      %1267 = vmatmul.bf16.gmra.mxu0 %v1231
      %v1268 = vpop.f32.mrf.mxu0
      %v1269 = vadd.f32 0.0, %v1268
      %v1270 = vpop.f32.mrf.mxu0
      %v1271 = vadd.f32 0.0, %v1270
      %1272 = vmatmul.bf16.gmra.mxu0 %v1234
      %v1273 = vpop.f32.mrf.mxu0
      %v1274 = vadd.f32 0.0, %v1273
      %v1275 = vpop.f32.mrf.mxu0
      %v1276 = vadd.f32 0.0, %v1275
      %1277 = vmatmul.bf16.gmra.mxu0 %v1237
      %v1278 = vpop.f32.mrf.mxu0
      %v1279 = vadd.f32 0.0, %v1278
      %v1280 = vpop.f32.mrf.mxu0
      %v1281 = vadd.f32 0.0, %v1280
      %1282 = vmatmul.bf16.gmra.mxu0 %v1240
      %v1283 = vpop.f32.mrf.mxu0
      %v1284 = vadd.f32 0.0, %v1283
      %v1285 = vpop.f32.mrf.mxu0
      %v1286 = vadd.f32 0.0, %v1285
      %1287 = vmatmul.bf16.gmra.mxu0 %v1243
      %v1288 = vpop.f32.mrf.mxu0
      %v1289 = vadd.f32 0.0, %v1288
      %v1290 = vpop.f32.mrf.mxu0
      %v1291 = vadd.f32 0.0, %v1290
      %1292 = vmatmul.bf16.gmra.mxu0 %v1246
      %v1293 = vpop.f32.mrf.mxu0
      %v1294 = vadd.f32 0.0, %v1293
      %v1295 = vpop.f32.mrf.mxu0
      %v1296 = vadd.f32 0.0, %v1295
      %1297 = vmatmul.bf16.gmra.mxu0 %v1249
      %v1298 = vpop.f32.mrf.mxu0
      %v1299 = vadd.f32 0.0, %v1298
      %v1300 = vpop.f32.mrf.mxu0
      %v1301 = vadd.f32 0.0, %v1300
      %1302 = vdwg.mxu0
      %1303 = vst.msk [vmem:[#allocation3 + $0x8] sm:$0xff] %vm609, %v1264
      %1304 = vst.msk [vmem:[#allocation3 + $0x10] sm:$0xff] %vm609, %v1266
      %1305 = vst.msk [vmem:[#allocation3 + $0x18] sm:$0xff] %vm609, %v1269
      %1306 = vst.msk [vmem:[#allocation3 + $0x20] sm:$0xff] %vm609, %v1271
      %1307 = vst.msk [vmem:[#allocation3 + $0x28] sm:$0xff] %vm609, %v1274
      %1308 = vst.msk [vmem:[#allocation3 + $0x30] sm:$0xff] %vm609, %v1276
      %1309 = vst.msk [vmem:[#allocation3 + $0x38] sm:$0xff] %vm609, %v1279
      %1310 = vst.msk [vmem:[#allocation3 + $0x40] sm:$0xff] %vm609, %v1281
      %1311 = vst.msk [vmem:[#allocation3 + $0x48] sm:$0xff] %vm609, %v1284
      %1312 = vst.msk [vmem:[#allocation3 + $0x50] sm:$0xff] %vm609, %v1286
      %1313 = vst.msk [vmem:[#allocation3 + $0x58] sm:$0xff] %vm609, %v1289
      %1314 = vst.msk [vmem:[#allocation3 + $0x60] sm:$0xff] %vm609, %v1291
      %1315 = vst.msk [vmem:[#allocation3 + $0x68] sm:$0xff] %vm609, %v1294
      %1316 = vst.msk [vmem:[#allocation3 + $0x70] sm:$0xff] %vm609, %v1296
      %1317 = vst.msk [vmem:[#allocation3 + $0x78] sm:$0xff] %vm609, %v1299
      %1318 = vst.msk [vmem:[#allocation3 + $0x80] sm:$0xff] %vm609, %v1301
      %1335 = vrot.lane.b32.xlu0 %v1264, 120
      %v1336 = vpop.permute.xlu0 %1335
      %1337 = vrot.lane.b32.xlu0 %v1266, 120
      %v1338 = vpop.permute.xlu0 %1337
      %1339 = vrot.lane.b32.xlu0 %v1269, 120
      %v1340 = vpop.permute.xlu0 %1339
      %1341 = vrot.lane.b32.xlu0 %v1271, 120
      %v1342 = vpop.permute.xlu0 %1341
      %1343 = vrot.lane.b32.xlu0 %v1274, 120
      %v1344 = vpop.permute.xlu0 %1343
      %1345 = vrot.lane.b32.xlu0 %v1276, 120
      %v1346 = vpop.permute.xlu0 %1345
      %1347 = vrot.lane.b32.xlu0 %v1279, 120
      %v1348 = vpop.permute.xlu0 %1347
      %1349 = vrot.lane.b32.xlu0 %v1281, 120
      %v1350 = vpop.permute.xlu0 %1349
      %1351 = vrot.lane.b32.xlu0 %v1284, 120
      %v1352 = vpop.permute.xlu0 %1351
      %1353 = vrot.lane.b32.xlu0 %v1286, 120
      %v1354 = vpop.permute.xlu0 %1353
      %1355 = vrot.lane.b32.xlu0 %v1289, 120
      %v1356 = vpop.permute.xlu0 %1355
      %1357 = vrot.lane.b32.xlu0 %v1291, 120
      %v1358 = vpop.permute.xlu0 %1357
      %1359 = vrot.lane.b32.xlu0 %v1294, 120
      %v1360 = vpop.permute.xlu0 %1359
      %1361 = vrot.lane.b32.xlu0 %v1296, 120
      %v1362 = vpop.permute.xlu0 %1361
      %1363 = vrot.lane.b32.xlu0 %v1299, 120
      %v1364 = vpop.permute.xlu0 %1363
      %1365 = vrot.lane.b32.xlu0 %v1301, 120
      %v1366 = vpop.permute.xlu0 %1365
      %1383 = vst.msk [vmem:[%s1168 + $0x8] sm:$0xff] %vm609, %v1336
      %1384 = vst.msk [vmem:[%s1168 + $0x10] sm:$0xff] %vm609, %v1338
      %1385 = vst.msk [vmem:[%s1168 + $0x18] sm:$0xff] %vm609, %v1340
      %1386 = vst.msk [vmem:[%s1168 + $0x20] sm:$0xff] %vm609, %v1342
      %1387 = vst.msk [vmem:[%s1168 + $0x28] sm:$0xff] %vm609, %v1344
      %1388 = vst.msk [vmem:[%s1168 + $0x30] sm:$0xff] %vm609, %v1346
      %1389 = vst.msk [vmem:[%s1168 + $0x38] sm:$0xff] %vm609, %v1348
      %1390 = vst.msk [vmem:[%s1168 + $0x40] sm:$0xff] %vm609, %v1350
      %1391 = vst.msk [vmem:[%s1168 + $0x48] sm:$0xff] %vm609, %v1352
      %1392 = vst.msk [vmem:[%s1168 + $0x50] sm:$0xff] %vm609, %v1354
      %1393 = vst.msk [vmem:[%s1168 + $0x58] sm:$0xff] %vm609, %v1356
      %1394 = vst.msk [vmem:[%s1168 + $0x60] sm:$0xff] %vm609, %v1358
      %1395 = vst.msk [vmem:[%s1168 + $0x68] sm:$0xff] %vm609, %v1360
      %1396 = vst.msk [vmem:[%s1168 + $0x70] sm:$0xff] %vm609, %v1362
      %1397 = vst.msk [vmem:[%s1168 + $0x78] sm:$0xff] %vm609, %v1364
      %1398 = vst.msk [vmem:[%s1168 + $0x80] sm:$0xff] %vm609, %v1366
      %v1399 = vld [vmem:[#allocation3 + $0x7] sm:$0xff]
      %v1400 = vld [vmem:[#allocation3 + $0xf] sm:$0xff]
      %v1401 = vld [vmem:[#allocation3 + $0x17] sm:$0xff]
      %v1402 = vld [vmem:[#allocation3 + $0x1f] sm:$0xff]
      %v1403 = vld [vmem:[#allocation3 + $0x27] sm:$0xff]
      %v1404 = vld [vmem:[#allocation3 + $0x2f] sm:$0xff]
      %v1405 = vld [vmem:[#allocation3 + $0x37] sm:$0xff]
      %v1406 = vld [vmem:[#allocation3 + $0x3f] sm:$0xff]
      %v1407 = vld [vmem:[#allocation3 + $0x47] sm:$0xff]
      %v1408 = vld [vmem:[#allocation3 + $0x4f] sm:$0xff]
      %v1409 = vld [vmem:[#allocation3 + $0x57] sm:$0xff]
      %v1410 = vld [vmem:[#allocation3 + $0x5f] sm:$0xff]
      %v1411 = vld [vmem:[#allocation3 + $0x67] sm:$0xff]
      %v1412 = vld [vmem:[#allocation3 + $0x6f] sm:$0xff]
      %v1413 = vld [vmem:[#allocation3 + $0x77] sm:$0xff]
      %v1414 = vld [vmem:[#allocation3 + $0x7f] sm:$0xff]
      %v1415 = vld [vmem:[%s1168 + $0x9] sm:$0xff]
      %v1416 = vld [vmem:[%s1168 + $0x11] sm:$0xff]
      %v1417 = vld [vmem:[%s1168 + $0x19] sm:$0xff]
      %v1418 = vld [vmem:[%s1168 + $0x21] sm:$0xff]
      %v1419 = vld [vmem:[%s1168 + $0x29] sm:$0xff]
      %v1420 = vld [vmem:[%s1168 + $0x31] sm:$0xff]
      %v1421 = vld [vmem:[%s1168 + $0x39] sm:$0xff]
      %v1422 = vld [vmem:[%s1168 + $0x41] sm:$0xff]
      %v1423 = vld [vmem:[%s1168 + $0x49] sm:$0xff]
      %v1424 = vld [vmem:[%s1168 + $0x51] sm:$0xff]
      %v1425 = vld [vmem:[%s1168 + $0x59] sm:$0xff]
      %v1426 = vld [vmem:[%s1168 + $0x61] sm:$0xff]
      %v1427 = vld [vmem:[%s1168 + $0x69] sm:$0xff]
      %v1428 = vld [vmem:[%s1168 + $0x71] sm:$0xff]
      %v1429 = vld [vmem:[%s1168 + $0x79] sm:$0xff]
      %v1430 = vld [vmem:[%s1168 + $0x81] sm:$0xff]
      %v1431 = vmul.f32 %v1399, %v1103
      %v1432 = vmul.f32 %v1400, %v1104
      %v1433 = vmul.f32 %v1401, %v1105
      %v1434 = vmul.f32 %v1402, %v1106
      %v1435 = vmul.f32 %v1403, %v1107
      %v1436 = vmul.f32 %v1404, %v1108
      %v1437 = vmul.f32 %v1405, %v1109
      %v1438 = vmul.f32 %v1406, %v1110
      %v1439 = vmul.f32 %v1407, %v1111
      %v1440 = vmul.f32 %v1408, %v1112
      %v1441 = vmul.f32 %v1409, %v1113
      %v1442 = vmul.f32 %v1410, %v1114
      %v1443 = vmul.f32 %v1411, %v1115
      %v1444 = vmul.f32 %v1412, %v1116
      %v1445 = vmul.f32 %v1413, %v1117
      %v1446 = vmul.f32 %v1414, %v1118
      %v1447 = vmul.f32 %v1415, %v1151
      %v1448 = vmul.f32 %v1416, %v1152
      %v1449 = vmul.f32 %v1417, %v1153
      %v1450 = vmul.f32 %v1418, %v1154
      %v1451 = vmul.f32 %v1419, %v1155
      %v1452 = vmul.f32 %v1420, %v1156
      %v1453 = vmul.f32 %v1421, %v1157
      %v1454 = vmul.f32 %v1422, %v1158
      %v1455 = vmul.f32 %v1423, %v1159
      %v1456 = vmul.f32 %v1424, %v1160
      %v1457 = vmul.f32 %v1425, %v1161
      %v1458 = vmul.f32 %v1426, %v1162
      %v1459 = vmul.f32 %v1427, %v1163
      %v1460 = vmul.f32 %v1428, %v1164
      %v1461 = vmul.f32 %v1429, %v1165
      %v1462 = vmul.f32 %v1430, %v1166
      %v1463 = vadd.f32 %v1431, %v1447
      %v1464 = vadd.f32 %v1432, %v1448
      %v1465 = vadd.f32 %v1433, %v1449
      %v1466 = vadd.f32 %v1434, %v1450
      %v1467 = vadd.f32 %v1435, %v1451
      %v1468 = vadd.f32 %v1436, %v1452
      %v1469 = vadd.f32 %v1437, %v1453
      %v1470 = vadd.f32 %v1438, %v1454
      %v1471 = vadd.f32 %v1439, %v1455
      %v1472 = vadd.f32 %v1440, %v1456
      %v1473 = vadd.f32 %v1441, %v1457
      %v1474 = vadd.f32 %v1442, %v1458
      %v1475 = vadd.f32 %v1443, %v1459
      %v1476 = vadd.f32 %v1444, %v1460
      %v1477 = vadd.f32 %v1445, %v1461
      %v1478 = vadd.f32 %v1446, %v1462
      %1495 = vrot.lane.b32.xlu0 %v1463, 4
      %v1496 = vpop.permute.xlu0 %1495
      %1497 = vrot.lane.b32.xlu0 %v1464, 4
      %v1498 = vpop.permute.xlu0 %1497
      %1499 = vrot.lane.b32.xlu0 %v1465, 4
      %v1500 = vpop.permute.xlu0 %1499
      %1501 = vrot.lane.b32.xlu0 %v1466, 4
      %v1502 = vpop.permute.xlu0 %1501
      %1503 = vrot.lane.b32.xlu0 %v1467, 4
      %v1504 = vpop.permute.xlu0 %1503
      %1505 = vrot.lane.b32.xlu0 %v1468, 4
      %v1506 = vpop.permute.xlu0 %1505
      %1507 = vrot.lane.b32.xlu0 %v1469, 4
      %v1508 = vpop.permute.xlu0 %1507
      %1509 = vrot.lane.b32.xlu0 %v1470, 4
      %v1510 = vpop.permute.xlu0 %1509
      %1511 = vrot.lane.b32.xlu0 %v1471, 4
      %v1512 = vpop.permute.xlu0 %1511
      %1513 = vrot.lane.b32.xlu0 %v1472, 4
      %v1514 = vpop.permute.xlu0 %1513
      %1515 = vrot.lane.b32.xlu0 %v1473, 4
      %v1516 = vpop.permute.xlu0 %1515
      %1517 = vrot.lane.b32.xlu0 %v1474, 4
      %v1518 = vpop.permute.xlu0 %1517
      %1519 = vrot.lane.b32.xlu0 %v1475, 4
      %v1520 = vpop.permute.xlu0 %1519
      %1521 = vrot.lane.b32.xlu0 %v1476, 4
      %v1522 = vpop.permute.xlu0 %1521
      %1523 = vrot.lane.b32.xlu0 %v1477, 4
      %v1524 = vpop.permute.xlu0 %1523
      %1525 = vrot.lane.b32.xlu0 %v1478, 4
      %v1526 = vpop.permute.xlu0 %1525
      %v1543 = vadd.f32 %v1264, %v1496
      %v1544 = vadd.f32 %v1266, %v1498
      %v1545 = vadd.f32 %v1269, %v1500
      %v1546 = vadd.f32 %v1271, %v1502
      %v1547 = vadd.f32 %v1274, %v1504
      %v1548 = vadd.f32 %v1276, %v1506
      %v1549 = vadd.f32 %v1279, %v1508
      %v1550 = vadd.f32 %v1281, %v1510
      %v1551 = vadd.f32 %v1284, %v1512
      %v1552 = vadd.f32 %v1286, %v1514
      %v1553 = vadd.f32 %v1289, %v1516
      %v1554 = vadd.f32 %v1291, %v1518
      %v1555 = vadd.f32 %v1294, %v1520
      %v1556 = vadd.f32 %v1296, %v1522
      %v1557 = vadd.f32 %v1299, %v1524
      %v1558 = vadd.f32 %v1301, %v1526
      %v1559 = vadd.f32 %v1543, 0.0
      %v1560 = vadd.f32 %v1544, 0.0
      %v1561 = vadd.f32 %v1545, 0.0
      %v1562 = vadd.f32 %v1546, 0.0
      %v1563 = vadd.f32 %v1547, 0.0
      %v1564 = vadd.f32 %v1548, 0.0
      %v1565 = vadd.f32 %v1549, 0.0
      %v1566 = vadd.f32 %v1550, 0.0
      %v1567 = vadd.f32 %v1551, 0.0
      %v1568 = vadd.f32 %v1552, 0.0
      %v1569 = vadd.f32 %v1553, 0.0
      %v1570 = vadd.f32 %v1554, 0.0
      %v1571 = vadd.f32 %v1555, 0.0
      %v1572 = vadd.f32 %v1556, 0.0
      %v1573 = vadd.f32 %v1557, 0.0
      %v1574 = vadd.f32 %v1558, 0.0
      %v1575 = vld [vmem:[#allocation2 + $0x8] sm:$0xf]
      %v1576 = vld [vmem:[#allocation2 + $0xc] sm:$0xf]
      %v1577 = vld [vmem:[#allocation2 + $0x10] sm:$0xf]
      %v1578 = vld [vmem:[#allocation2 + $0x14] sm:$0xf]
      %v1579 = vld [vmem:[#allocation2 + $0x18] sm:$0xf]
      %v1580 = vld [vmem:[#allocation2 + $0x1c] sm:$0xf]
      %v1581 = vld [vmem:[#allocation2 + $0x20] sm:$0xf]
      %v1582 = vld [vmem:[#allocation2 + $0x24] sm:$0xf]
      %v1583 = vld [vmem:[#allocation2 + $0x28] sm:$0xf]
      %v1584 = vld [vmem:[#allocation2 + $0x2c] sm:$0xf]
      %v1585 = vld [vmem:[#allocation2 + $0x30] sm:$0xf]
      %v1586 = vld [vmem:[#allocation2 + $0x34] sm:$0xf]
      %v1587 = vld [vmem:[#allocation2 + $0x38] sm:$0xf]
      %v1588 = vld [vmem:[#allocation2 + $0x3c] sm:$0xf]
      %v1589 = vld [vmem:[#allocation2 + $0x40] sm:$0xf]
      %v1590 = vld [vmem:[#allocation2 + $0x44] sm:$0xf]
      %s1591 = scalar_lea.vmem %s4, 2
      %v1592 = vld [vmem:[%s1591] sm:$0x3]
      %v1609 = vunpack.c.l.b16 %v1575
      %v1610 = vunpack.c.l.b16 %v1576
      %v1611 = vunpack.c.l.b16 %v1577
      %v1612 = vunpack.c.l.b16 %v1578
      %v1613 = vunpack.c.l.b16 %v1579
      %v1614 = vunpack.c.l.b16 %v1580
      %v1615 = vunpack.c.l.b16 %v1581
      %v1616 = vunpack.c.l.b16 %v1582
      %v1617 = vunpack.c.l.b16 %v1583
      %v1618 = vunpack.c.l.b16 %v1584
      %v1619 = vunpack.c.l.b16 %v1585
      %v1620 = vunpack.c.l.b16 %v1586
      %v1621 = vunpack.c.l.b16 %v1587
      %v1622 = vunpack.c.l.b16 %v1588
      %v1623 = vunpack.c.l.b16 %v1589
      %v1624 = vunpack.c.l.b16 %v1590
      %v1625 = vpack.c.b16 %v1610, %v1609
      %v1626 = vpack.c.b16 %v1612, %v1611
      %v1627 = vpack.c.b16 %v1614, %v1613
      %v1628 = vpack.c.b16 %v1616, %v1615
      %v1629 = vpack.c.b16 %v1618, %v1617
      %v1630 = vpack.c.b16 %v1620, %v1619
      %v1631 = vpack.c.b16 %v1622, %v1621
      %v1632 = vpack.c.b16 %v1624, %v1623
      %v1634 = vsel %vm609, %v1625, 0
      %v1637 = vsel %vm609, %v1626, 0
      %v1640 = vsel %vm609, %v1627, 0
      %v1643 = vsel %vm609, %v1628, 0
      %v1646 = vsel %vm609, %v1629, 0
      %v1649 = vsel %vm609, %v1630, 0
      %v1652 = vsel %vm609, %v1631, 0
      %v1655 = vsel %vm609, %v1632, 0
      %v1658 = vsel %vm634, %v1592, 0
      %1660 = vmatpush.bf16.msra.mxu0 0
      %1661 = vmatpush.bf16.msra.mxu0 0
      %1662 = vmatpush.bf16.msra.mxu0 0
      %1663 = vmatpush.bf16.msra.mxu0 0
      %1664 = vmatpush.bf16.msra.mxu0 0
      %1665 = vmatpush.bf16.msra.mxu0 0
      %1666 = vmatpush.bf16.msra.mxu0 0
      %1667 = vmatpush.bf16.msra.mxu0 %v1658
      %1668 = vmatmul.bf16.gmra.mxu0 %v1634
      %v1669 = vpop.f32.mrf.mxu0
      %v1670 = vadd.f32 0.0, %v1669
      %v1671 = vpop.f32.mrf.mxu0
      %v1672 = vadd.f32 0.0, %v1671
      %1673 = vmatmul.bf16.gmra.mxu0 %v1637
      %v1674 = vpop.f32.mrf.mxu0
      %v1675 = vadd.f32 0.0, %v1674
      %v1676 = vpop.f32.mrf.mxu0
      %v1677 = vadd.f32 0.0, %v1676
      %1678 = vmatmul.bf16.gmra.mxu0 %v1640
      %v1679 = vpop.f32.mrf.mxu0
      %v1680 = vadd.f32 0.0, %v1679
      %v1681 = vpop.f32.mrf.mxu0
      %v1682 = vadd.f32 0.0, %v1681
      %1683 = vmatmul.bf16.gmra.mxu0 %v1643
      %v1684 = vpop.f32.mrf.mxu0
      %v1685 = vadd.f32 0.0, %v1684
      %v1686 = vpop.f32.mrf.mxu0
      %v1687 = vadd.f32 0.0, %v1686
      %1688 = vmatmul.bf16.gmra.mxu0 %v1646
      %v1689 = vpop.f32.mrf.mxu0
      %v1690 = vadd.f32 0.0, %v1689
      %v1691 = vpop.f32.mrf.mxu0
      %v1692 = vadd.f32 0.0, %v1691
      %1693 = vmatmul.bf16.gmra.mxu0 %v1649
      %v1694 = vpop.f32.mrf.mxu0
      %v1695 = vadd.f32 0.0, %v1694
      %v1696 = vpop.f32.mrf.mxu0
      %v1697 = vadd.f32 0.0, %v1696
      %1698 = vmatmul.bf16.gmra.mxu0 %v1652
      %v1699 = vpop.f32.mrf.mxu0
      %v1700 = vadd.f32 0.0, %v1699
      %v1701 = vpop.f32.mrf.mxu0
      %v1702 = vadd.f32 0.0, %v1701
      %1703 = vmatmul.bf16.gmra.mxu0 %v1655
      %v1704 = vpop.f32.mrf.mxu0
      %v1705 = vadd.f32 0.0, %v1704
      %v1706 = vpop.f32.mrf.mxu0
      %v1707 = vadd.f32 0.0, %v1706
      %1708 = vdwg.mxu0
      %1709 = vst.msk [vmem:[#allocation3 + $0x8] sm:$0xff] %vm609, %v1670
      %1710 = vst.msk [vmem:[#allocation3 + $0x10] sm:$0xff] %vm609, %v1672
      %1711 = vst.msk [vmem:[#allocation3 + $0x18] sm:$0xff] %vm609, %v1675
      %1712 = vst.msk [vmem:[#allocation3 + $0x20] sm:$0xff] %vm609, %v1677
      %1713 = vst.msk [vmem:[#allocation3 + $0x28] sm:$0xff] %vm609, %v1680
      %1714 = vst.msk [vmem:[#allocation3 + $0x30] sm:$0xff] %vm609, %v1682
      %1715 = vst.msk [vmem:[#allocation3 + $0x38] sm:$0xff] %vm609, %v1685
      %1716 = vst.msk [vmem:[#allocation3 + $0x40] sm:$0xff] %vm609, %v1687
      %1717 = vst.msk [vmem:[#allocation3 + $0x48] sm:$0xff] %vm609, %v1690
      %1718 = vst.msk [vmem:[#allocation3 + $0x50] sm:$0xff] %vm609, %v1692
      %1719 = vst.msk [vmem:[#allocation3 + $0x58] sm:$0xff] %vm609, %v1695
      %1720 = vst.msk [vmem:[#allocation3 + $0x60] sm:$0xff] %vm609, %v1697
      %1721 = vst.msk [vmem:[#allocation3 + $0x68] sm:$0xff] %vm609, %v1700
      %1722 = vst.msk [vmem:[#allocation3 + $0x70] sm:$0xff] %vm609, %v1702
      %1723 = vst.msk [vmem:[#allocation3 + $0x78] sm:$0xff] %vm609, %v1705
      %1724 = vst.msk [vmem:[#allocation3 + $0x80] sm:$0xff] %vm609, %v1707
      %1741 = vrot.lane.b32.xlu0 %v1670, 120
      %v1742 = vpop.permute.xlu0 %1741
      %1743 = vrot.lane.b32.xlu0 %v1672, 120
      %v1744 = vpop.permute.xlu0 %1743
      %1745 = vrot.lane.b32.xlu0 %v1675, 120
      %v1746 = vpop.permute.xlu0 %1745
      %1747 = vrot.lane.b32.xlu0 %v1677, 120
      %v1748 = vpop.permute.xlu0 %1747
      %1749 = vrot.lane.b32.xlu0 %v1680, 120
      %v1750 = vpop.permute.xlu0 %1749
      %1751 = vrot.lane.b32.xlu0 %v1682, 120
      %v1752 = vpop.permute.xlu0 %1751
      %1753 = vrot.lane.b32.xlu0 %v1685, 120
      %v1754 = vpop.permute.xlu0 %1753
      %1755 = vrot.lane.b32.xlu0 %v1687, 120
      %v1756 = vpop.permute.xlu0 %1755
      %1757 = vrot.lane.b32.xlu0 %v1690, 120
      %v1758 = vpop.permute.xlu0 %1757
      %1759 = vrot.lane.b32.xlu0 %v1692, 120
      %v1760 = vpop.permute.xlu0 %1759
      %1761 = vrot.lane.b32.xlu0 %v1695, 120
      %v1762 = vpop.permute.xlu0 %1761
      %1763 = vrot.lane.b32.xlu0 %v1697, 120
      %v1764 = vpop.permute.xlu0 %1763
      %1765 = vrot.lane.b32.xlu0 %v1700, 120
      %v1766 = vpop.permute.xlu0 %1765
      %1767 = vrot.lane.b32.xlu0 %v1702, 120
      %v1768 = vpop.permute.xlu0 %1767
      %1769 = vrot.lane.b32.xlu0 %v1705, 120
      %v1770 = vpop.permute.xlu0 %1769
      %1771 = vrot.lane.b32.xlu0 %v1707, 120
      %v1772 = vpop.permute.xlu0 %1771
      %1789 = vst.msk [vmem:[%s1168 + $0x8] sm:$0xff] %vm609, %v1742
      %1790 = vst.msk [vmem:[%s1168 + $0x10] sm:$0xff] %vm609, %v1744
      %1791 = vst.msk [vmem:[%s1168 + $0x18] sm:$0xff] %vm609, %v1746
      %1792 = vst.msk [vmem:[%s1168 + $0x20] sm:$0xff] %vm609, %v1748
      %1793 = vst.msk [vmem:[%s1168 + $0x28] sm:$0xff] %vm609, %v1750
      %1794 = vst.msk [vmem:[%s1168 + $0x30] sm:$0xff] %vm609, %v1752
      %1795 = vst.msk [vmem:[%s1168 + $0x38] sm:$0xff] %vm609, %v1754
      %1796 = vst.msk [vmem:[%s1168 + $0x40] sm:$0xff] %vm609, %v1756
      %1797 = vst.msk [vmem:[%s1168 + $0x48] sm:$0xff] %vm609, %v1758
      %1798 = vst.msk [vmem:[%s1168 + $0x50] sm:$0xff] %vm609, %v1760
      %1799 = vst.msk [vmem:[%s1168 + $0x58] sm:$0xff] %vm609, %v1762
      %1800 = vst.msk [vmem:[%s1168 + $0x60] sm:$0xff] %vm609, %v1764
      %1801 = vst.msk [vmem:[%s1168 + $0x68] sm:$0xff] %vm609, %v1766
      %1802 = vst.msk [vmem:[%s1168 + $0x70] sm:$0xff] %vm609, %v1768
      %1803 = vst.msk [vmem:[%s1168 + $0x78] sm:$0xff] %vm609, %v1770
      %1804 = vst.msk [vmem:[%s1168 + $0x80] sm:$0xff] %vm609, %v1772
      %v1805 = vld [vmem:[#allocation3 + $0x7] sm:$0xff]
      %v1806 = vld [vmem:[#allocation3 + $0xf] sm:$0xff]
      %v1807 = vld [vmem:[#allocation3 + $0x17] sm:$0xff]
      %v1808 = vld [vmem:[#allocation3 + $0x1f] sm:$0xff]
      %v1809 = vld [vmem:[#allocation3 + $0x27] sm:$0xff]
      %v1810 = vld [vmem:[#allocation3 + $0x2f] sm:$0xff]
      %v1811 = vld [vmem:[#allocation3 + $0x37] sm:$0xff]
      %v1812 = vld [vmem:[#allocation3 + $0x3f] sm:$0xff]
      %v1813 = vld [vmem:[#allocation3 + $0x47] sm:$0xff]
      %v1814 = vld [vmem:[#allocation3 + $0x4f] sm:$0xff]
      %v1815 = vld [vmem:[#allocation3 + $0x57] sm:$0xff]
      %v1816 = vld [vmem:[#allocation3 + $0x5f] sm:$0xff]
      %v1817 = vld [vmem:[#allocation3 + $0x67] sm:$0xff]
      %v1818 = vld [vmem:[#allocation3 + $0x6f] sm:$0xff]
      %v1819 = vld [vmem:[#allocation3 + $0x77] sm:$0xff]
      %v1820 = vld [vmem:[#allocation3 + $0x7f] sm:$0xff]
      %v1821 = vld [vmem:[%s1168 + $0x9] sm:$0xff]
      %v1822 = vld [vmem:[%s1168 + $0x11] sm:$0xff]
      %v1823 = vld [vmem:[%s1168 + $0x19] sm:$0xff]
      %v1824 = vld [vmem:[%s1168 + $0x21] sm:$0xff]
      %v1825 = vld [vmem:[%s1168 + $0x29] sm:$0xff]
      %v1826 = vld [vmem:[%s1168 + $0x31] sm:$0xff]
      %v1827 = vld [vmem:[%s1168 + $0x39] sm:$0xff]
      %v1828 = vld [vmem:[%s1168 + $0x41] sm:$0xff]
      %v1829 = vld [vmem:[%s1168 + $0x49] sm:$0xff]
      %v1830 = vld [vmem:[%s1168 + $0x51] sm:$0xff]
      %v1831 = vld [vmem:[%s1168 + $0x59] sm:$0xff]
      %v1832 = vld [vmem:[%s1168 + $0x61] sm:$0xff]
      %v1833 = vld [vmem:[%s1168 + $0x69] sm:$0xff]
      %v1834 = vld [vmem:[%s1168 + $0x71] sm:$0xff]
      %v1835 = vld [vmem:[%s1168 + $0x79] sm:$0xff]
      %v1836 = vld [vmem:[%s1168 + $0x81] sm:$0xff]
      %v1837 = vmul.f32 %v1805, %v1103
      %v1838 = vmul.f32 %v1806, %v1104
      %v1839 = vmul.f32 %v1807, %v1105
      %v1840 = vmul.f32 %v1808, %v1106
      %v1841 = vmul.f32 %v1809, %v1107
      %v1842 = vmul.f32 %v1810, %v1108
      %v1843 = vmul.f32 %v1811, %v1109
      %v1844 = vmul.f32 %v1812, %v1110
      %v1845 = vmul.f32 %v1813, %v1111
      %v1846 = vmul.f32 %v1814, %v1112
      %v1847 = vmul.f32 %v1815, %v1113
      %v1848 = vmul.f32 %v1816, %v1114
      %v1849 = vmul.f32 %v1817, %v1115
      %v1850 = vmul.f32 %v1818, %v1116
      %v1851 = vmul.f32 %v1819, %v1117
      %v1852 = vmul.f32 %v1820, %v1118
      %v1853 = vmul.f32 %v1821, %v1151
      %v1854 = vmul.f32 %v1822, %v1152
      %v1855 = vmul.f32 %v1823, %v1153
      %v1856 = vmul.f32 %v1824, %v1154
      %v1857 = vmul.f32 %v1825, %v1155
      %v1858 = vmul.f32 %v1826, %v1156
      %v1859 = vmul.f32 %v1827, %v1157
      %v1860 = vmul.f32 %v1828, %v1158
      %v1861 = vmul.f32 %v1829, %v1159
      %v1862 = vmul.f32 %v1830, %v1160
      %v1863 = vmul.f32 %v1831, %v1161
      %v1864 = vmul.f32 %v1832, %v1162
      %v1865 = vmul.f32 %v1833, %v1163
      %v1866 = vmul.f32 %v1834, %v1164
      %v1867 = vmul.f32 %v1835, %v1165
      %v1868 = vmul.f32 %v1836, %v1166
      %v1869 = vadd.f32 %v1837, %v1853
      %v1870 = vadd.f32 %v1838, %v1854
      %v1871 = vadd.f32 %v1839, %v1855
      %v1872 = vadd.f32 %v1840, %v1856
      %v1873 = vadd.f32 %v1841, %v1857
      %v1874 = vadd.f32 %v1842, %v1858
      %v1875 = vadd.f32 %v1843, %v1859
      %v1876 = vadd.f32 %v1844, %v1860
      %v1877 = vadd.f32 %v1845, %v1861
      %v1878 = vadd.f32 %v1846, %v1862
      %v1879 = vadd.f32 %v1847, %v1863
      %v1880 = vadd.f32 %v1848, %v1864
      %v1881 = vadd.f32 %v1849, %v1865
      %v1882 = vadd.f32 %v1850, %v1866
      %v1883 = vadd.f32 %v1851, %v1867
      %v1884 = vadd.f32 %v1852, %v1868
      %1901 = vrot.lane.b32.xlu0 %v1869, 4
      %v1902 = vpop.permute.xlu0 %1901
      %1903 = vrot.lane.b32.xlu0 %v1870, 4
      %v1904 = vpop.permute.xlu0 %1903
      %1905 = vrot.lane.b32.xlu0 %v1871, 4
      %v1906 = vpop.permute.xlu0 %1905
      %1907 = vrot.lane.b32.xlu0 %v1872, 4
      %v1908 = vpop.permute.xlu0 %1907
      %1909 = vrot.lane.b32.xlu0 %v1873, 4
      %v1910 = vpop.permute.xlu0 %1909
      %1911 = vrot.lane.b32.xlu0 %v1874, 4
      %v1912 = vpop.permute.xlu0 %1911
      %1913 = vrot.lane.b32.xlu0 %v1875, 4
      %v1914 = vpop.permute.xlu0 %1913
      %1915 = vrot.lane.b32.xlu0 %v1876, 4
      %v1916 = vpop.permute.xlu0 %1915
      %1917 = vrot.lane.b32.xlu0 %v1877, 4
      %v1918 = vpop.permute.xlu0 %1917
      %1919 = vrot.lane.b32.xlu0 %v1878, 4
      %v1920 = vpop.permute.xlu0 %1919
      %1921 = vrot.lane.b32.xlu0 %v1879, 4
      %v1922 = vpop.permute.xlu0 %1921
      %1923 = vrot.lane.b32.xlu0 %v1880, 4
      %v1924 = vpop.permute.xlu0 %1923
      %1925 = vrot.lane.b32.xlu0 %v1881, 4
      %v1926 = vpop.permute.xlu0 %1925
      %1927 = vrot.lane.b32.xlu0 %v1882, 4
      %v1928 = vpop.permute.xlu0 %1927
      %1929 = vrot.lane.b32.xlu0 %v1883, 4
      %v1930 = vpop.permute.xlu0 %1929
      %1931 = vrot.lane.b32.xlu0 %v1884, 4
      %v1932 = vpop.permute.xlu0 %1931
      %v1949 = vadd.f32 %v1670, %v1902
      %v1950 = vadd.f32 %v1672, %v1904
      %v1951 = vadd.f32 %v1675, %v1906
      %v1952 = vadd.f32 %v1677, %v1908
      %v1953 = vadd.f32 %v1680, %v1910
      %v1954 = vadd.f32 %v1682, %v1912
      %v1955 = vadd.f32 %v1685, %v1914
      %v1956 = vadd.f32 %v1687, %v1916
      %v1957 = vadd.f32 %v1690, %v1918
      %v1958 = vadd.f32 %v1692, %v1920
      %v1959 = vadd.f32 %v1695, %v1922
      %v1960 = vadd.f32 %v1697, %v1924
      %v1961 = vadd.f32 %v1700, %v1926
      %v1962 = vadd.f32 %v1702, %v1928
      %v1963 = vadd.f32 %v1705, %v1930
      %v1964 = vadd.f32 %v1707, %v1932
      %v1965 = vadd.f32 %v1559, %v1949
      %v1966 = vadd.f32 %v1560, %v1950
      %v1967 = vadd.f32 %v1561, %v1951
      %v1968 = vadd.f32 %v1562, %v1952
      %v1969 = vadd.f32 %v1563, %v1953
      %v1970 = vadd.f32 %v1564, %v1954
      %v1971 = vadd.f32 %v1565, %v1955
      %v1972 = vadd.f32 %v1566, %v1956
      %v1973 = vadd.f32 %v1567, %v1957
      %v1974 = vadd.f32 %v1568, %v1958
      %v1975 = vadd.f32 %v1569, %v1959
      %v1976 = vadd.f32 %v1570, %v1960
      %v1977 = vadd.f32 %v1571, %v1961
      %v1978 = vadd.f32 %v1572, %v1962
      %v1979 = vadd.f32 %v1573, %v1963
      %v1980 = vadd.f32 %v1574, %v1964
      %v1981 = vld [vmem:[#allocation2 + $0x10] sm:$0xf]
      %v1982 = vld [vmem:[#allocation2 + $0x14] sm:$0xf]
      %v1983 = vld [vmem:[#allocation2 + $0x18] sm:$0xf]
      %v1984 = vld [vmem:[#allocation2 + $0x1c] sm:$0xf]
      %v1985 = vld [vmem:[#allocation2 + $0x20] sm:$0xf]
      %v1986 = vld [vmem:[#allocation2 + $0x24] sm:$0xf]
      %v1987 = vld [vmem:[#allocation2 + $0x28] sm:$0xf]
      %v1988 = vld [vmem:[#allocation2 + $0x2c] sm:$0xf]
      %v1989 = vld [vmem:[#allocation2 + $0x30] sm:$0xf]
      %v1990 = vld [vmem:[#allocation2 + $0x34] sm:$0xf]
      %v1991 = vld [vmem:[#allocation2 + $0x38] sm:$0xf]
      %v1992 = vld [vmem:[#allocation2 + $0x3c] sm:$0xf]
      %v1993 = vld [vmem:[#allocation2 + $0x40] sm:$0xf]
      %v1994 = vld [vmem:[#allocation2 + $0x44] sm:$0xf]
      %v1995 = vld [vmem:[#allocation2 + $0x48] sm:$0xf]
      %v1996 = vld [vmem:[#allocation2 + $0x4c] sm:$0xf]
      %s1997 = scalar_lea.vmem %s4, 4
      %v1998 = vld [vmem:[%s1997] sm:$0x3]
      %v2015 = vunpack.c.l.b16 %v1981
      %v2016 = vunpack.c.l.b16 %v1982
      %v2017 = vunpack.c.l.b16 %v1983
      %v2018 = vunpack.c.l.b16 %v1984
      %v2019 = vunpack.c.l.b16 %v1985
      %v2020 = vunpack.c.l.b16 %v1986
      %v2021 = vunpack.c.l.b16 %v1987
      %v2022 = vunpack.c.l.b16 %v1988
      %v2023 = vunpack.c.l.b16 %v1989
      %v2024 = vunpack.c.l.b16 %v1990
      %v2025 = vunpack.c.l.b16 %v1991
      %v2026 = vunpack.c.l.b16 %v1992
      %v2027 = vunpack.c.l.b16 %v1993
      %v2028 = vunpack.c.l.b16 %v1994
      %v2029 = vunpack.c.l.b16 %v1995
      %v2030 = vunpack.c.l.b16 %v1996
      %v2031 = vpack.c.b16 %v2016, %v2015
      %v2032 = vpack.c.b16 %v2018, %v2017
      %v2033 = vpack.c.b16 %v2020, %v2019
      %v2034 = vpack.c.b16 %v2022, %v2021
      %v2035 = vpack.c.b16 %v2024, %v2023
      %v2036 = vpack.c.b16 %v2026, %v2025
      %v2037 = vpack.c.b16 %v2028, %v2027
      %v2038 = vpack.c.b16 %v2030, %v2029
      %v2040 = vsel %vm609, %v2031, 0
      %v2043 = vsel %vm609, %v2032, 0
      %v2046 = vsel %vm609, %v2033, 0
      %v2049 = vsel %vm609, %v2034, 0
      %v2052 = vsel %vm609, %v2035, 0
      %v2055 = vsel %vm609, %v2036, 0
      %v2058 = vsel %vm609, %v2037, 0
      %v2061 = vsel %vm609, %v2038, 0
      %v2064 = vsel %vm634, %v1998, 0
      %2066 = vmatpush.bf16.msra.mxu0 0
      %2067 = vmatpush.bf16.msra.mxu0 0
      %2068 = vmatpush.bf16.msra.mxu0 0
      %2069 = vmatpush.bf16.msra.mxu0 0
      %2070 = vmatpush.bf16.msra.mxu0 0
      %2071 = vmatpush.bf16.msra.mxu0 0
      %2072 = vmatpush.bf16.msra.mxu0 0
      %2073 = vmatpush.bf16.msra.mxu0 %v2064
      %2074 = vmatmul.bf16.gmra.mxu0 %v2040
      %v2075 = vpop.f32.mrf.mxu0
      %v2076 = vadd.f32 0.0, %v2075
      %v2077 = vpop.f32.mrf.mxu0
      %v2078 = vadd.f32 0.0, %v2077
      %2079 = vmatmul.bf16.gmra.mxu0 %v2043
      %v2080 = vpop.f32.mrf.mxu0
      %v2081 = vadd.f32 0.0, %v2080
      %v2082 = vpop.f32.mrf.mxu0
      %v2083 = vadd.f32 0.0, %v2082
      %2084 = vmatmul.bf16.gmra.mxu0 %v2046
      %v2085 = vpop.f32.mrf.mxu0
      %v2086 = vadd.f32 0.0, %v2085
      %v2087 = vpop.f32.mrf.mxu0
      %v2088 = vadd.f32 0.0, %v2087
      %2089 = vmatmul.bf16.gmra.mxu0 %v2049
      %v2090 = vpop.f32.mrf.mxu0
      %v2091 = vadd.f32 0.0, %v2090
      %v2092 = vpop.f32.mrf.mxu0
      %v2093 = vadd.f32 0.0, %v2092
      %2094 = vmatmul.bf16.gmra.mxu0 %v2052
      %v2095 = vpop.f32.mrf.mxu0
      %v2096 = vadd.f32 0.0, %v2095
      %v2097 = vpop.f32.mrf.mxu0
      %v2098 = vadd.f32 0.0, %v2097
      %2099 = vmatmul.bf16.gmra.mxu0 %v2055
      %v2100 = vpop.f32.mrf.mxu0
      %v2101 = vadd.f32 0.0, %v2100
      %v2102 = vpop.f32.mrf.mxu0
      %v2103 = vadd.f32 0.0, %v2102
      %2104 = vmatmul.bf16.gmra.mxu0 %v2058
      %v2105 = vpop.f32.mrf.mxu0
      %v2106 = vadd.f32 0.0, %v2105
      %v2107 = vpop.f32.mrf.mxu0
      %v2108 = vadd.f32 0.0, %v2107
      %2109 = vmatmul.bf16.gmra.mxu0 %v2061
      %v2110 = vpop.f32.mrf.mxu0
      %v2111 = vadd.f32 0.0, %v2110
      %v2112 = vpop.f32.mrf.mxu0
      %v2113 = vadd.f32 0.0, %v2112
      %2114 = vdwg.mxu0
      %2115 = vst.msk [vmem:[#allocation3 + $0x8] sm:$0xff] %vm609, %v2076
      %2116 = vst.msk [vmem:[#allocation3 + $0x10] sm:$0xff] %vm609, %v2078
      %2117 = vst.msk [vmem:[#allocation3 + $0x18] sm:$0xff] %vm609, %v2081
      %2118 = vst.msk [vmem:[#allocation3 + $0x20] sm:$0xff] %vm609, %v2083
      %2119 = vst.msk [vmem:[#allocation3 + $0x28] sm:$0xff] %vm609, %v2086
      %2120 = vst.msk [vmem:[#allocation3 + $0x30] sm:$0xff] %vm609, %v2088
      %2121 = vst.msk [vmem:[#allocation3 + $0x38] sm:$0xff] %vm609, %v2091
      %2122 = vst.msk [vmem:[#allocation3 + $0x40] sm:$0xff] %vm609, %v2093
      %2123 = vst.msk [vmem:[#allocation3 + $0x48] sm:$0xff] %vm609, %v2096
      %2124 = vst.msk [vmem:[#allocation3 + $0x50] sm:$0xff] %vm609, %v2098
      %2125 = vst.msk [vmem:[#allocation3 + $0x58] sm:$0xff] %vm609, %v2101
      %2126 = vst.msk [vmem:[#allocation3 + $0x60] sm:$0xff] %vm609, %v2103
      %2127 = vst.msk [vmem:[#allocation3 + $0x68] sm:$0xff] %vm609, %v2106
      %2128 = vst.msk [vmem:[#allocation3 + $0x70] sm:$0xff] %vm609, %v2108
      %2129 = vst.msk [vmem:[#allocation3 + $0x78] sm:$0xff] %vm609, %v2111
      %2130 = vst.msk [vmem:[#allocation3 + $0x80] sm:$0xff] %vm609, %v2113
      %2147 = vrot.lane.b32.xlu0 %v2076, 120
      %v2148 = vpop.permute.xlu0 %2147
      %2149 = vrot.lane.b32.xlu0 %v2078, 120
      %v2150 = vpop.permute.xlu0 %2149
      %2151 = vrot.lane.b32.xlu0 %v2081, 120
      %v2152 = vpop.permute.xlu0 %2151
      %2153 = vrot.lane.b32.xlu0 %v2083, 120
      %v2154 = vpop.permute.xlu0 %2153
      %2155 = vrot.lane.b32.xlu0 %v2086, 120
      %v2156 = vpop.permute.xlu0 %2155
      %2157 = vrot.lane.b32.xlu0 %v2088, 120
      %v2158 = vpop.permute.xlu0 %2157
      %2159 = vrot.lane.b32.xlu0 %v2091, 120
      %v2160 = vpop.permute.xlu0 %2159
      %2161 = vrot.lane.b32.xlu0 %v2093, 120
      %v2162 = vpop.permute.xlu0 %2161
      %2163 = vrot.lane.b32.xlu0 %v2096, 120
      %v2164 = vpop.permute.xlu0 %2163
      %2165 = vrot.lane.b32.xlu0 %v2098, 120
      %v2166 = vpop.permute.xlu0 %2165
      %2167 = vrot.lane.b32.xlu0 %v2101, 120
      %v2168 = vpop.permute.xlu0 %2167
      %2169 = vrot.lane.b32.xlu0 %v2103, 120
      %v2170 = vpop.permute.xlu0 %2169
      %2171 = vrot.lane.b32.xlu0 %v2106, 120
      %v2172 = vpop.permute.xlu0 %2171
      %2173 = vrot.lane.b32.xlu0 %v2108, 120
      %v2174 = vpop.permute.xlu0 %2173
      %2175 = vrot.lane.b32.xlu0 %v2111, 120
      %v2176 = vpop.permute.xlu0 %2175
      %2177 = vrot.lane.b32.xlu0 %v2113, 120
      %v2178 = vpop.permute.xlu0 %2177
      %2195 = vst.msk [vmem:[%s1168 + $0x8] sm:$0xff] %vm609, %v2148
      %2196 = vst.msk [vmem:[%s1168 + $0x10] sm:$0xff] %vm609, %v2150
      %2197 = vst.msk [vmem:[%s1168 + $0x18] sm:$0xff] %vm609, %v2152
      %2198 = vst.msk [vmem:[%s1168 + $0x20] sm:$0xff] %vm609, %v2154
      %2199 = vst.msk [vmem:[%s1168 + $0x28] sm:$0xff] %vm609, %v2156
      %2200 = vst.msk [vmem:[%s1168 + $0x30] sm:$0xff] %vm609, %v2158
      %2201 = vst.msk [vmem:[%s1168 + $0x38] sm:$0xff] %vm609, %v2160
      %2202 = vst.msk [vmem:[%s1168 + $0x40] sm:$0xff] %vm609, %v2162
      %2203 = vst.msk [vmem:[%s1168 + $0x48] sm:$0xff] %vm609, %v2164
      %2204 = vst.msk [vmem:[%s1168 + $0x50] sm:$0xff] %vm609, %v2166
      %2205 = vst.msk [vmem:[%s1168 + $0x58] sm:$0xff] %vm609, %v2168
      %2206 = vst.msk [vmem:[%s1168 + $0x60] sm:$0xff] %vm609, %v2170
      %2207 = vst.msk [vmem:[%s1168 + $0x68] sm:$0xff] %vm609, %v2172
      %2208 = vst.msk [vmem:[%s1168 + $0x70] sm:$0xff] %vm609, %v2174
      %2209 = vst.msk [vmem:[%s1168 + $0x78] sm:$0xff] %vm609, %v2176
      %2210 = vst.msk [vmem:[%s1168 + $0x80] sm:$0xff] %vm609, %v2178
      %v2211 = vld [vmem:[#allocation3 + $0x7] sm:$0xff]
      %v2212 = vld [vmem:[#allocation3 + $0xf] sm:$0xff]
      %v2213 = vld [vmem:[#allocation3 + $0x17] sm:$0xff]
      %v2214 = vld [vmem:[#allocation3 + $0x1f] sm:$0xff]
      %v2215 = vld [vmem:[#allocation3 + $0x27] sm:$0xff]
      %v2216 = vld [vmem:[#allocation3 + $0x2f] sm:$0xff]
      %v2217 = vld [vmem:[#allocation3 + $0x37] sm:$0xff]
      %v2218 = vld [vmem:[#allocation3 + $0x3f] sm:$0xff]
      %v2219 = vld [vmem:[#allocation3 + $0x47] sm:$0xff]
      %v2220 = vld [vmem:[#allocation3 + $0x4f] sm:$0xff]
      %v2221 = vld [vmem:[#allocation3 + $0x57] sm:$0xff]
      %v2222 = vld [vmem:[#allocation3 + $0x5f] sm:$0xff]
      %v2223 = vld [vmem:[#allocation3 + $0x67] sm:$0xff]
      %v2224 = vld [vmem:[#allocation3 + $0x6f] sm:$0xff]
      %v2225 = vld [vmem:[#allocation3 + $0x77] sm:$0xff]
      %v2226 = vld [vmem:[#allocation3 + $0x7f] sm:$0xff]
      %v2227 = vld [vmem:[%s1168 + $0x9] sm:$0xff]
      %v2228 = vld [vmem:[%s1168 + $0x11] sm:$0xff]
      %v2229 = vld [vmem:[%s1168 + $0x19] sm:$0xff]
      %v2230 = vld [vmem:[%s1168 + $0x21] sm:$0xff]
      %v2231 = vld [vmem:[%s1168 + $0x29] sm:$0xff]
      %v2232 = vld [vmem:[%s1168 + $0x31] sm:$0xff]
      %v2233 = vld [vmem:[%s1168 + $0x39] sm:$0xff]
      %v2234 = vld [vmem:[%s1168 + $0x41] sm:$0xff]
      %v2235 = vld [vmem:[%s1168 + $0x49] sm:$0xff]
      %v2236 = vld [vmem:[%s1168 + $0x51] sm:$0xff]
      %v2237 = vld [vmem:[%s1168 + $0x59] sm:$0xff]
      %v2238 = vld [vmem:[%s1168 + $0x61] sm:$0xff]
      %v2239 = vld [vmem:[%s1168 + $0x69] sm:$0xff]
      %v2240 = vld [vmem:[%s1168 + $0x71] sm:$0xff]
      %v2241 = vld [vmem:[%s1168 + $0x79] sm:$0xff]
      %v2242 = vld [vmem:[%s1168 + $0x81] sm:$0xff]
      %v2243 = vmul.f32 %v2211, %v1103
      %v2244 = vmul.f32 %v2212, %v1104
      %v2245 = vmul.f32 %v2213, %v1105
      %v2246 = vmul.f32 %v2214, %v1106
      %v2247 = vmul.f32 %v2215, %v1107
      %v2248 = vmul.f32 %v2216, %v1108
      %v2249 = vmul.f32 %v2217, %v1109
      %v2250 = vmul.f32 %v2218, %v1110
      %v2251 = vmul.f32 %v2219, %v1111
      %v2252 = vmul.f32 %v2220, %v1112
      %v2253 = vmul.f32 %v2221, %v1113
      %v2254 = vmul.f32 %v2222, %v1114
      %v2255 = vmul.f32 %v2223, %v1115
      %v2256 = vmul.f32 %v2224, %v1116
      %v2257 = vmul.f32 %v2225, %v1117
      %v2258 = vmul.f32 %v2226, %v1118
      %v2259 = vmul.f32 %v2227, %v1151
      %v2260 = vmul.f32 %v2228, %v1152
      %v2261 = vmul.f32 %v2229, %v1153
      %v2262 = vmul.f32 %v2230, %v1154
      %v2263 = vmul.f32 %v2231, %v1155
      %v2264 = vmul.f32 %v2232, %v1156
      %v2265 = vmul.f32 %v2233, %v1157
      %v2266 = vmul.f32 %v2234, %v1158
      %v2267 = vmul.f32 %v2235, %v1159
      %v2268 = vmul.f32 %v2236, %v1160
      %v2269 = vmul.f32 %v2237, %v1161
      %v2270 = vmul.f32 %v2238, %v1162
      %v2271 = vmul.f32 %v2239, %v1163
      %v2272 = vmul.f32 %v2240, %v1164
      %v2273 = vmul.f32 %v2241, %v1165
      %v2274 = vmul.f32 %v2242, %v1166
      %v2275 = vadd.f32 %v2243, %v2259
      %v2276 = vadd.f32 %v2244, %v2260
      %v2277 = vadd.f32 %v2245, %v2261
      %v2278 = vadd.f32 %v2246, %v2262
      %v2279 = vadd.f32 %v2247, %v2263
      %v2280 = vadd.f32 %v2248, %v2264
      %v2281 = vadd.f32 %v2249, %v2265
      %v2282 = vadd.f32 %v2250, %v2266
      %v2283 = vadd.f32 %v2251, %v2267
      %v2284 = vadd.f32 %v2252, %v2268
      %v2285 = vadd.f32 %v2253, %v2269
      %v2286 = vadd.f32 %v2254, %v2270
      %v2287 = vadd.f32 %v2255, %v2271
      %v2288 = vadd.f32 %v2256, %v2272
      %v2289 = vadd.f32 %v2257, %v2273
      %v2290 = vadd.f32 %v2258, %v2274
      %2307 = vrot.lane.b32.xlu0 %v2275, 4
      %v2308 = vpop.permute.xlu0 %2307
      %2309 = vrot.lane.b32.xlu0 %v2276, 4
      %v2310 = vpop.permute.xlu0 %2309
      %2311 = vrot.lane.b32.xlu0 %v2277, 4
      %v2312 = vpop.permute.xlu0 %2311
      %2313 = vrot.lane.b32.xlu0 %v2278, 4
      %v2314 = vpop.permute.xlu0 %2313
      %2315 = vrot.lane.b32.xlu0 %v2279, 4
      %v2316 = vpop.permute.xlu0 %2315
      %2317 = vrot.lane.b32.xlu0 %v2280, 4
      %v2318 = vpop.permute.xlu0 %2317
      %2319 = vrot.lane.b32.xlu0 %v2281, 4
      %v2320 = vpop.permute.xlu0 %2319
      %2321 = vrot.lane.b32.xlu0 %v2282, 4
      %v2322 = vpop.permute.xlu0 %2321
      %2323 = vrot.lane.b32.xlu0 %v2283, 4
      %v2324 = vpop.permute.xlu0 %2323
      %2325 = vrot.lane.b32.xlu0 %v2284, 4
      %v2326 = vpop.permute.xlu0 %2325
      %2327 = vrot.lane.b32.xlu0 %v2285, 4
      %v2328 = vpop.permute.xlu0 %2327
      %2329 = vrot.lane.b32.xlu0 %v2286, 4
      %v2330 = vpop.permute.xlu0 %2329
      %2331 = vrot.lane.b32.xlu0 %v2287, 4
      %v2332 = vpop.permute.xlu0 %2331
      %2333 = vrot.lane.b32.xlu0 %v2288, 4
      %v2334 = vpop.permute.xlu0 %2333
      %2335 = vrot.lane.b32.xlu0 %v2289, 4
      %v2336 = vpop.permute.xlu0 %2335
      %2337 = vrot.lane.b32.xlu0 %v2290, 4
      %v2338 = vpop.permute.xlu0 %2337
      %v2355 = vadd.f32 %v2076, %v2308
      %v2356 = vadd.f32 %v2078, %v2310
      %v2357 = vadd.f32 %v2081, %v2312
      %v2358 = vadd.f32 %v2083, %v2314
      %v2359 = vadd.f32 %v2086, %v2316
      %v2360 = vadd.f32 %v2088, %v2318
      %v2361 = vadd.f32 %v2091, %v2320
      %v2362 = vadd.f32 %v2093, %v2322
      %v2363 = vadd.f32 %v2096, %v2324
      %v2364 = vadd.f32 %v2098, %v2326
      %v2365 = vadd.f32 %v2101, %v2328
      %v2366 = vadd.f32 %v2103, %v2330
      %v2367 = vadd.f32 %v2106, %v2332
      %v2368 = vadd.f32 %v2108, %v2334
      %v2369 = vadd.f32 %v2111, %v2336
      %v2370 = vadd.f32 %v2113, %v2338
      %v2371 = vadd.f32 %v1965, %v2355
      %v2372 = vadd.f32 %v1966, %v2356
      %v2373 = vadd.f32 %v1967, %v2357
      %v2374 = vadd.f32 %v1968, %v2358
      %v2375 = vadd.f32 %v1969, %v2359
      %v2376 = vadd.f32 %v1970, %v2360
      %v2377 = vadd.f32 %v1971, %v2361
      %v2378 = vadd.f32 %v1972, %v2362
      %v2379 = vadd.f32 %v1973, %v2363
      %v2380 = vadd.f32 %v1974, %v2364
      %v2381 = vadd.f32 %v1975, %v2365
      %v2382 = vadd.f32 %v1976, %v2366
      %v2383 = vadd.f32 %v1977, %v2367
      %v2384 = vadd.f32 %v1978, %v2368
      %v2385 = vadd.f32 %v1979, %v2369
      %v2386 = vadd.f32 %v1980, %v2370
      %v2387 = vld [vmem:[%s8] sm:$0x1]
      %v2389 = vperm.slane %v2387, 0
      %2390 = vrot.lane.b32.xlu0 %v2389, 4
      %v2391 = vpop.permute.xlu0 %2390
      %v2393 = vmul.f32 %v2371, %v2391
      %v2394 = vmul.f32 %v2372, %v2391
      %v2395 = vmul.f32 %v2373, %v2391
      %v2396 = vmul.f32 %v2374, %v2391
      %v2397 = vmul.f32 %v2375, %v2391
      %v2398 = vmul.f32 %v2376, %v2391
      %v2399 = vmul.f32 %v2377, %v2391
      %v2400 = vmul.f32 %v2378, %v2391
      %v2401 = vmul.f32 %v2379, %v2391
      %v2402 = vmul.f32 %v2380, %v2391
      %v2403 = vmul.f32 %v2381, %v2391
      %v2404 = vmul.f32 %v2382, %v2391
      %v2405 = vmul.f32 %v2383, %v2391
      %v2406 = vmul.f32 %v2384, %v2391
      %v2407 = vmul.f32 %v2385, %v2391
      %v2408 = vmul.f32 %v2386, %v2391
      %v2409 = vld [vmem:[%s9] sm:$0x1]
      %v2411 = vperm.slane %v2409, 0
      %2412 = vrot.lane.b32.xlu0 %v2411, 4
      %v2413 = vpop.permute.xlu0 %2412
      %v2415 = vadd.f32 %v2393, %v2413
      %v2416 = vadd.f32 %v2394, %v2413
      %v2417 = vadd.f32 %v2395, %v2413
      %v2418 = vadd.f32 %v2396, %v2413
      %v2419 = vadd.f32 %v2397, %v2413
      %v2420 = vadd.f32 %v2398, %v2413
      %v2421 = vadd.f32 %v2399, %v2413
      %v2422 = vadd.f32 %v2400, %v2413
      %v2423 = vadd.f32 %v2401, %v2413
      %v2424 = vadd.f32 %v2402, %v2413
      %v2425 = vadd.f32 %v2403, %v2413
      %v2426 = vadd.f32 %v2404, %v2413
      %v2427 = vadd.f32 %v2405, %v2413
      %v2428 = vadd.f32 %v2406, %v2413
      %v2429 = vadd.f32 %v2407, %v2413
      %v2430 = vadd.f32 %v2408, %v2413
      %v2431 = vmax.f32 %v2415, 0.0
      %v2432 = vmax.f32 %v2416, 0.0
      %v2433 = vmax.f32 %v2417, 0.0
      %v2434 = vmax.f32 %v2418, 0.0
      %v2435 = vmax.f32 %v2419, 0.0
      %v2436 = vmax.f32 %v2420, 0.0
      %v2437 = vmax.f32 %v2421, 0.0
      %v2438 = vmax.f32 %v2422, 0.0
      %v2439 = vmax.f32 %v2423, 0.0
      %v2440 = vmax.f32 %v2424, 0.0
      %v2441 = vmax.f32 %v2425, 0.0
      %v2442 = vmax.f32 %v2426, 0.0
      %v2443 = vmax.f32 %v2427, 0.0
      %v2444 = vmax.f32 %v2428, 0.0
      %v2445 = vmax.f32 %v2429, 0.0
      %v2446 = vmax.f32 %v2430, 0.0
      %v2447 = vpack.c.bf16 %v2432, %v2431
      %v2448 = vpack.c.bf16 %v2434, %v2433
      %v2449 = vpack.c.bf16 %v2436, %v2435
      %v2450 = vpack.c.bf16 %v2438, %v2437
      %v2451 = vpack.c.bf16 %v2440, %v2439
      %v2452 = vpack.c.bf16 %v2442, %v2441
      %v2453 = vpack.c.bf16 %v2444, %v2443
      %v2454 = vpack.c.bf16 %v2446, %v2445
      %v2455 = vld [vmem:[%s5] sm:$0x3]
      %2464 = vrot.lane.b32.xlu0 %v2447, 124
      %v2465 = vpop.permute.xlu0 %2464
      %2466 = vrot.lane.b32.xlu0 %v2448, 124
      %v2467 = vpop.permute.xlu0 %2466
      %2468 = vrot.lane.b32.xlu0 %v2449, 124
      %v2469 = vpop.permute.xlu0 %2468
      %2470 = vrot.lane.b32.xlu0 %v2450, 124
      %v2471 = vpop.permute.xlu0 %2470
      %2472 = vrot.lane.b32.xlu0 %v2451, 124
      %v2473 = vpop.permute.xlu0 %2472
      %2474 = vrot.lane.b32.xlu0 %v2452, 124
      %v2475 = vpop.permute.xlu0 %2474
      %2476 = vrot.lane.b32.xlu0 %v2453, 124
      %v2477 = vpop.permute.xlu0 %2476
      %2478 = vrot.lane.b32.xlu0 %v2454, 124
      %v2479 = vpop.permute.xlu0 %2478
      %v2481 = vsel %vm609, %v2465, 0
      %v2484 = vsel %vm609, %v2467, 0
      %v2487 = vsel %vm609, %v2469, 0
      %v2490 = vsel %vm609, %v2471, 0
      %v2493 = vsel %vm609, %v2473, 0
      %v2496 = vsel %vm609, %v2475, 0
      %v2499 = vsel %vm609, %v2477, 0
      %v2502 = vsel %vm609, %v2479, 0
      %v2505 = vsel %vm634, %v2455, 0
      %2507 = vmatpush.bf16.msra.mxu0 0
      %2508 = vmatpush.bf16.msra.mxu0 0
      %2509 = vmatpush.bf16.msra.mxu0 0
      %2510 = vmatpush.bf16.msra.mxu0 0
      %2511 = vmatpush.bf16.msra.mxu0 0
      %2512 = vmatpush.bf16.msra.mxu0 0
      %2513 = vmatpush.bf16.msra.mxu0 0
      %2514 = vmatpush.bf16.msra.mxu0 %v2505
      %2515 = vmatmul.bf16.gmra.mxu0 %v2481
      %v2516 = vpop.f32.mrf.mxu0
      %v2517 = vadd.f32 0.0, %v2516
      %v2518 = vpop.f32.mrf.mxu0
      %v2519 = vadd.f32 0.0, %v2518
      %2520 = vmatmul.bf16.gmra.mxu0 %v2484
      %v2521 = vpop.f32.mrf.mxu0
      %v2522 = vadd.f32 0.0, %v2521
      %v2523 = vpop.f32.mrf.mxu0
      %v2524 = vadd.f32 0.0, %v2523
      %2525 = vmatmul.bf16.gmra.mxu0 %v2487
      %v2526 = vpop.f32.mrf.mxu0
      %v2527 = vadd.f32 0.0, %v2526
      %v2528 = vpop.f32.mrf.mxu0
      %v2529 = vadd.f32 0.0, %v2528
      %2530 = vmatmul.bf16.gmra.mxu0 %v2490
      %v2531 = vpop.f32.mrf.mxu0
      %v2532 = vadd.f32 0.0, %v2531
      %v2533 = vpop.f32.mrf.mxu0
      %v2534 = vadd.f32 0.0, %v2533
      %2535 = vmatmul.bf16.gmra.mxu0 %v2493
      %v2536 = vpop.f32.mrf.mxu0
      %v2537 = vadd.f32 0.0, %v2536
      %v2538 = vpop.f32.mrf.mxu0
      %v2539 = vadd.f32 0.0, %v2538
      %2540 = vmatmul.bf16.gmra.mxu0 %v2496
      %v2541 = vpop.f32.mrf.mxu0
      %v2542 = vadd.f32 0.0, %v2541
      %v2543 = vpop.f32.mrf.mxu0
      %v2544 = vadd.f32 0.0, %v2543
      %2545 = vmatmul.bf16.gmra.mxu0 %v2499
      %v2546 = vpop.f32.mrf.mxu0
      %v2547 = vadd.f32 0.0, %v2546
      %v2548 = vpop.f32.mrf.mxu0
      %v2549 = vadd.f32 0.0, %v2548
      %2550 = vmatmul.bf16.gmra.mxu0 %v2502
      %v2551 = vpop.f32.mrf.mxu0
      %v2552 = vadd.f32 0.0, %v2551
      %v2553 = vpop.f32.mrf.mxu0
      %v2554 = vadd.f32 0.0, %v2553
      %2555 = vdwg.mxu0
      %v2556 = vld [vmem:[%s10] sm:$0x1]
      %v2558 = vperm.slane %v2556, 0
      %v2560 = vmul.f32 %v2517, %v2558
      %v2561 = vmul.f32 %v2519, %v2558
      %v2562 = vmul.f32 %v2522, %v2558
      %v2563 = vmul.f32 %v2524, %v2558
      %v2564 = vmul.f32 %v2527, %v2558
      %v2565 = vmul.f32 %v2529, %v2558
      %v2566 = vmul.f32 %v2532, %v2558
      %v2567 = vmul.f32 %v2534, %v2558
      %v2568 = vmul.f32 %v2537, %v2558
      %v2569 = vmul.f32 %v2539, %v2558
      %v2570 = vmul.f32 %v2542, %v2558
      %v2571 = vmul.f32 %v2544, %v2558
      %v2572 = vmul.f32 %v2547, %v2558
      %v2573 = vmul.f32 %v2549, %v2558
      %v2574 = vmul.f32 %v2552, %v2558
      %v2575 = vmul.f32 %v2554, %v2558
      %v2576 = vld [vmem:[%s11] sm:$0x1]
      %v2578 = vperm.slane %v2576, 0
      %v2580 = vadd.f32 %v2560, %v2578
      %v2581 = vadd.f32 %v2561, %v2578
      %v2582 = vadd.f32 %v2562, %v2578
      %v2583 = vadd.f32 %v2563, %v2578
      %v2584 = vadd.f32 %v2564, %v2578
      %v2585 = vadd.f32 %v2565, %v2578
      %v2586 = vadd.f32 %v2566, %v2578
      %v2587 = vadd.f32 %v2567, %v2578
      %v2588 = vadd.f32 %v2568, %v2578
      %v2589 = vadd.f32 %v2569, %v2578
      %v2590 = vadd.f32 %v2570, %v2578
      %v2591 = vadd.f32 %v2571, %v2578
      %v2592 = vadd.f32 %v2572, %v2578
      %v2593 = vadd.f32 %v2573, %v2578
      %v2594 = vadd.f32 %v2574, %v2578
      %v2595 = vadd.f32 %v2575, %v2578
      %v2596 = vld [vmem:[%s533] sm:$0xff]
      %v2597 = vld [vmem:[%s533 + $0x8] sm:$0xff]
      %v2598 = vld [vmem:[%s533 + $0x10] sm:$0xff]
      %v2599 = vld [vmem:[%s533 + $0x18] sm:$0xff]
      %v2600 = vld [vmem:[%s533 + $0x20] sm:$0xff]
      %v2601 = vld [vmem:[%s533 + $0x28] sm:$0xff]
      %v2602 = vld [vmem:[%s533 + $0x30] sm:$0xff]
      %v2603 = vld [vmem:[%s533 + $0x38] sm:$0xff]
      %v2604 = vld [vmem:[%s533 + $0x40] sm:$0xff]
      %v2605 = vld [vmem:[%s533 + $0x48] sm:$0xff]
      %v2606 = vld [vmem:[%s533 + $0x50] sm:$0xff]
      %v2607 = vld [vmem:[%s533 + $0x58] sm:$0xff]
      %v2608 = vld [vmem:[%s533 + $0x60] sm:$0xff]
      %v2609 = vld [vmem:[%s533 + $0x68] sm:$0xff]
      %v2610 = vld [vmem:[%s533 + $0x70] sm:$0xff]
      %v2611 = vld [vmem:[%s533 + $0x78] sm:$0xff]
      %v2612 = vadd.f32 %v2580, %v2596
      %v2613 = vadd.f32 %v2581, %v2597
      %v2614 = vadd.f32 %v2582, %v2598
      %v2615 = vadd.f32 %v2583, %v2599
      %v2616 = vadd.f32 %v2584, %v2600
      %v2617 = vadd.f32 %v2585, %v2601
      %v2618 = vadd.f32 %v2586, %v2602
      %v2619 = vadd.f32 %v2587, %v2603
      %v2620 = vadd.f32 %v2588, %v2604
      %v2621 = vadd.f32 %v2589, %v2605
      %v2622 = vadd.f32 %v2590, %v2606
      %v2623 = vadd.f32 %v2591, %v2607
      %v2624 = vadd.f32 %v2592, %v2608
      %v2625 = vadd.f32 %v2593, %v2609
      %v2626 = vadd.f32 %v2594, %v2610
      %v2627 = vadd.f32 %v2595, %v2611
      %v2628 = vmax.f32 %v2612, 0.0
      %v2629 = vmax.f32 %v2613, 0.0
      %v2630 = vmax.f32 %v2614, 0.0
      %v2631 = vmax.f32 %v2615, 0.0
      %v2632 = vmax.f32 %v2616, 0.0
      %v2633 = vmax.f32 %v2617, 0.0
      %v2634 = vmax.f32 %v2618, 0.0
      %v2635 = vmax.f32 %v2619, 0.0
      %v2636 = vmax.f32 %v2620, 0.0
      %v2637 = vmax.f32 %v2621, 0.0
      %v2638 = vmax.f32 %v2622, 0.0
      %v2639 = vmax.f32 %v2623, 0.0
      %v2640 = vmax.f32 %v2624, 0.0
      %v2641 = vmax.f32 %v2625, 0.0
      %v2642 = vmax.f32 %v2626, 0.0
      %v2643 = vmax.f32 %v2627, 0.0
      %2644 = vst.msk [vmem:[%s579] sm:$0xff] %vm609, %v2628
      %2645 = vst.msk [vmem:[%s579 + $0x8] sm:$0xff] %vm609, %v2629
      %2646 = vst.msk [vmem:[%s579 + $0x10] sm:$0xff] %vm609, %v2630
      %2647 = vst.msk [vmem:[%s579 + $0x18] sm:$0xff] %vm609, %v2631
      %2648 = vst.msk [vmem:[%s579 + $0x20] sm:$0xff] %vm609, %v2632
      %2649 = vst.msk [vmem:[%s579 + $0x28] sm:$0xff] %vm609, %v2633
      %2650 = vst.msk [vmem:[%s579 + $0x30] sm:$0xff] %vm609, %v2634
      %2651 = vst.msk [vmem:[%s579 + $0x38] sm:$0xff] %vm609, %v2635
      %2652 = vst.msk [vmem:[%s579 + $0x40] sm:$0xff] %vm609, %v2636
      %2653 = vst.msk [vmem:[%s579 + $0x48] sm:$0xff] %vm609, %v2637
      %2654 = vst.msk [vmem:[%s579 + $0x50] sm:$0xff] %vm609, %v2638
      %2655 = vst.msk [vmem:[%s579 + $0x58] sm:$0xff] %vm609, %v2639
      %2656 = vst.msk [vmem:[%s579 + $0x60] sm:$0xff] %vm609, %v2640
      %2657 = vst.msk [vmem:[%s579 + $0x68] sm:$0xff] %vm609, %v2641
      %2658 = vst.msk [vmem:[%s579 + $0x70] sm:$0xff] %vm609, %v2642
      %2659 = vst.msk [vmem:[%s579 + $0x78] sm:$0xff] %vm609, %v2643
      %s2660 = smul.u32 16, %s28
      %p2661 = scmp.lt.s32.totalorder %s27, 1
      %s2662 = scalar_select %p2661, %s27, 1
      %p2663 = scmp.lt.s32.totalorder %s2660, 31
      %s2664 = scalar_select %p2663, %s2660, 31
      %s2665 = smul.addr %s2662, 32
      %s2666 = sadd.s32 %s2664, %s2665
      %s2667 = smul.addr %s2666, 8
      %s2668 = scalar_lea.vmem %s12, %s2667
      // Predicated region
      $region85: #{_lambda_.1} parent=67 // pred_check
        %p2669 = pneg %p344
      $region86: #{_lambda_.1} parent=67 // pred_check_branch
        %2671 = sbr.rel (%p2669) target = $region88
      $region87: #{_lambda_.1} parent=67 // pred_region
        %s2672 = smul.u32 16, %s28
      $region88: #{_lambda_.1} parent=67 // pred_fallthru
        _
    $region68: #{_lambda_.1} parent=5 // pred_fallthru
      _
    %p2673 = scmp.le.s32.totalorder 2, %s18
    // Predicated region
    $region89: #{_lambda_.1} parent=5 // pred_check
      %p2674 = pneg %p2673
    $region90: #{_lambda_.1} parent=5 // pred_check_branch
      %2676 = sbr.rel (%p2674) target = $region92
    $region91: #{_lambda_.1} parent=5 // pred_region
      %s2677 = ssub.s32 %s18, 2
      // Predicated region
      $region93: #{_lambda_.1} parent=91 // pred_check
        %p2678 = pneg %p350
      $region94: #{_lambda_.1} parent=91 // pred_check_branch
        %2680 = sbr.rel (%p2678) target = $region96
      $region95: #{_lambda_.1} parent=91 // pred_region
        %s2681 = smul.u32 16, %s30
        %p2682 = scmp.lt.s32.totalorder %s29, 1
        %s2683 = scalar_select %p2682, %s29, 1
        %p2684 = scmp.lt.s32.totalorder %s2681, 31
        %s2685 = scalar_select %p2684, %s2681, 31
        %s2686 = smul.addr %s2683, 32
        %s2687 = sadd.s32 %s2685, %s2686
        %s2688 = smul.addr %s2687, 8
        %s2689 = scalar_lea.vmem %s12, %s2688
      $region96: #{_lambda_.1} parent=91 // pred_fallthru
        _
    $region92: #{_lambda_.1} parent=5 // pred_fallthru
      _
  $region6: #{_lambda_.1} parent=0 // loop_footer
    %s22 = sadd.s32 1, %s18
  $region7: #{_lambda_.1} parent=0 // loop_footer_branch
    %17 = sbr.rel target = $region3
  $region8: #{_lambda_.1} parent=0 // loop_exit
    _

</llo_original>
